<compile_context>
chip_gen: v7x
topology: tpu7x:2x2x1
jax: 0.10.0
libtpu: 0.0.40
codegen_flags: <defaults>
</compile_context>

<pallas_src>
import jax
import jax.numpy as jnp
from jax import lax
from jax.experimental import pallas as pl
from jax.experimental.pallas import tpu as pltpu


def _round_up(x, m):
    return ((x + m - 1) // m) * m


def lstm_fc_kernel(x_ref, h0_ref, c0_ref,
                   wih_ref, whh_ref, b_ref, b2_ref, b3_ref,
                   w2_hbm, w3_hbm,
                   out_ref, hT_ref, cT_ref,
                   xtm_sc, gx_sc, hs_sc, st_sc, w2_sc, w3_sc, dma_sem):
    """Single-layer LSTM (PyTorch semantics, gate columns repacked to (g,i,f,o)
    and padded to Hp=128 lanes per gate) + relu(fc2) + fc3.

    x_ref:   (B, T, I)    raw batch-first input (no wrapper-side layout work)
    h0/c0:   (1, B, H)    raw initial states
    wih:     (I, 4Hp)  whh: (Hp, 4Hp)  b: (1, 4Hp)  (b_ih + b_hh pre-summed)
    b2/b3:   (1, Op)
    w2_hbm:  (Hp, Op)  w3_hbm: (Op, Op)   HBM refs, DMA'd during the recurrence
    out:     (B, T, O)    final output (exact, unpadded)
    hT/cT:   (1, B, H)    final states (exact, unpadded)
    scratch: xtm (T*B,I), gx (T*B,4Hp), hs (T*B,Hp), st (2B,Hp), w2/w3 VMEM, sems
    """
    B, T, _I = x_ref.shape
    Hp = whh_ref.shape[0]
    H = hT_ref.shape[2]
    O = out_ref.shape[2]

    # --- start fc-weight DMAs now; they are only needed after the recurrence. --
    cp_w2 = pltpu.make_async_copy(w2_hbm, w2_sc, dma_sem.at[0])
    cp_w3 = pltpu.make_async_copy(w3_hbm, w3_sc, dma_sem.at[1])
    cp_w2.start()
    cp_w3.start()

    # --- (1) Hoisted input projection, staged to VMEM (time-major rows t*B+b). -
    for t in range(T):
        xtm_sc[t * B:(t + 1) * B, :] = x_ref[:, t, :]
    gx_sc[...] = (jnp.dot(xtm_sc[...], wih_ref[...],
                          preferred_element_type=jnp.float32) + b_ref[...])

    # --- initial state: lane-pad H -> Hp through a zero-initialised staging tile.
    st_sc[...] = jnp.zeros((2 * B, Hp), jnp.float32)
    st_sc[:B, :H] = h0_ref[0]
    st_sc[B:, :H] = c0_ref[0]
    h = st_sc[:B, :]
    c = st_sc[B:, :]

    # --- (2) Recurrence: only h @ W_hh stays on the serial dependence chain. ---
    whh = whh_ref[...]                           # single load, kept resident
    for t in range(T):
        r0 = t * B
        gates = gx_sc[r0:r0 + B, :] + jnp.dot(
            h, whh, preferred_element_type=jnp.float32)          # (B, 4Hp)
        # gate columns are (g, i, f, o); lane-aligned slices at k*128.
        g_g = jnp.tanh(gates[:, :Hp])
        sig = jax.nn.sigmoid(gates[:, Hp:])      # i, f, o in one contiguous pass
        i_g = sig[:, :Hp]
        f_g = sig[:, Hp:2 * Hp]
        o_g = sig[:, 2 * Hp:]
        c = f_g * c + i_g * g_g
        h = o_g * jnp.tanh(c)
        hs_sc[r0:r0 + B, :] = h                  # off the critical recurrence path

    hT_ref[0] = h[:, :H]
    cT_ref[0] = c[:, :H]

    # --- (3) Batched fc2 -> relu -> fc3 after the loop. ------------------------
    cp_w2.wait()
    y = jnp.dot(hs_sc[...], w2_sc[...],
                preferred_element_type=jnp.float32) + b2_ref[...]     # (T*B, Op)
    y = jnp.maximum(y, 0.0)
    cp_w3.wait()
    y = jnp.dot(y, w3_sc[...], preferred_element_type=jnp.float32) + b3_ref[...]

    # scatter time-major rows back into the exact (B, T, O) output layout.
    for t in range(T):
        out_ref[:, t, :] = y[t * B:(t + 1) * B, :O]


def prepare_params(params):
    """One-time weight repack: transpose, zero-pad each gate to 128 lanes,
    reorder gate columns to (g, i, f, o), pre-sum biases, pad fc weights."""
    w_ih = jnp.asarray(params["w_ih"], jnp.float32)      # (4H, I)
    w_hh = jnp.asarray(params["w_hh"], jnp.float32)      # (4H, H)
    H = w_hh.shape[1]
    I = w_ih.shape[1]
    O = params["w_fc3"].shape[0]
    Hp = _round_up(H, 128)
    Op = _round_up(O, 128)
    # destination gate slot <- PyTorch block index in (i, f, g, o); dst = (g,i,f,o)
    gate_src = (2, 0, 1, 3)

    def pack(w, rows):
        out = jnp.zeros((rows, 4 * Hp), jnp.float32)
        for dst, src in enumerate(gate_src):
            out = out.at[:w.shape[1], dst * Hp:dst * Hp + H].set(
                w[src * H:(src + 1) * H, :].T)
        return out

    wih_p = pack(w_ih, I)                                # (I, 4Hp)
    whh_p = pack(w_hh, Hp)                               # (Hp, 4Hp), rows >=H zero

    b_sum = (jnp.asarray(params["b_ih"], jnp.float32)
             + jnp.asarray(params["b_hh"], jnp.float32))
    b_p = jnp.zeros((1, 4 * Hp), jnp.float32)
    for dst, src in enumerate(gate_src):
        b_p = b_p.at[0, dst * Hp:dst * Hp + H].set(b_sum[src * H:(src + 1) * H])

    w2_p = jnp.zeros((Hp, Op), jnp.float32).at[:H, :O].set(
        jnp.asarray(params["w_fc2"], jnp.float32).T)
    b2_p = jnp.zeros((1, Op), jnp.float32).at[0, :O].set(
        jnp.asarray(params["b_fc2"], jnp.float32))
    w3_p = jnp.zeros((Op, Op), jnp.float32).at[:O, :O].set(
        jnp.asarray(params["w_fc3"], jnp.float32).T)
    b3_p = jnp.zeros((1, Op), jnp.float32).at[0, :O].set(
        jnp.asarray(params["b_fc3"], jnp.float32))

    return {"wih": wih_p, "whh": whh_p, "b": b_p,
            "w2": w2_p, "b2": b2_p, "w3": w3_p, "b3": b3_p,
            "H": H, "O": O, "Hp": Hp, "Op": Op}


def model_forward(X, states, prep):
    """X: (B, T, I); states: (ht, ct) each (1, B, H).
    Returns (out (B, T, O), (ht, ct)). No per-call layout ops outside the kernel."""
    ht, ct = states
    B, T, I = X.shape
    H, O, Hp, Op = prep["H"], prep["O"], prep["Hp"], prep["Op"]

    vmem = pl.BlockSpec(memory_space=pltpu.MemorySpace.VMEM)
    anym = pl.BlockSpec(memory_space=pl.ANY)

    out, hT, cT = pl.pallas_call(
        lstm_fc_kernel,
        out_shape=(
            jax.ShapeDtypeStruct((B, T, O), jnp.float32),
            jax.ShapeDtypeStruct((1, B, H), jnp.float32),
            jax.ShapeDtypeStruct((1, B, H), jnp.float32),
        ),
        in_specs=[vmem, vmem, vmem, vmem, vmem, vmem, vmem, vmem, anym, anym],
        out_specs=(vmem, vmem, vmem),
        scratch_shapes=[
            pltpu.VMEM((T * B, I), jnp.float32),        # xtm_sc (time-major x)
            pltpu.VMEM((T * B, 4 * Hp), jnp.float32),   # gx_sc  (input projection)
            pltpu.VMEM((T * B, Hp), jnp.float32),       # hs_sc  (hidden states)
            pltpu.VMEM((2 * B, Hp), jnp.float32),       # st_sc  (h0/c0 lane padding)
            pltpu.VMEM((Hp, Op), jnp.float32),          # w2_sc  (DMA destination)
            pltpu.VMEM((Op, Op), jnp.float32),          # w3_sc  (DMA destination)
            pltpu.SemaphoreType.DMA((2,)),
        ],
    )(X.astype(jnp.float32), ht.astype(jnp.float32), ct.astype(jnp.float32),
      prep["wih"], prep["whh"], prep["b"], prep["b2"], prep["b3"],
      prep["w2"], prep["w3"])

    return out, (hT, cT)


def reference_forward(X, states, params):
    """Pure-JAX reference replicating nn.LSTM (batch_first) + relu(fc2) + fc3."""
    ht, ct = states
    h = ht[0]
    c = ct[0]
    wih, whh = params["w_ih"], params["w_hh"]
    b = params["b_ih"] + params["b_hh"]
    H = whh.shape[1]

    def step(carry, x_t):
        h, c = carry
        gates = x_t @ wih.T + h @ whh.T + b
        i = jax.nn.sigmoid(gates[:, 0 * H:1 * H])
        f = jax.nn.sigmoid(gates[:, 1 * H:2 * H])
        g = jnp.tanh(gates[:, 2 * H:3 * H])
        o = jax.nn.sigmoid(gates[:, 3 * H:4 * H])
        c_new = f * c + i * g
        h_new = o * jnp.tanh(c_new)
        return (h_new, c_new), h_new

    (hT, cT), hs = lax.scan(step, (h, c), jnp.transpose(X, (1, 0, 2)))
    hs = jnp.transpose(hs, (1, 0, 2))                    # (B, T, H)
    y = jnp.maximum(hs @ params["w_fc2"].T + params["b_fc2"], 0.0)
    y = y @ params["w_fc3"].T + params["b_fc3"]
    return y, (hT[None], cT[None])


def init_params(key, input_size, hidden_size, output_size):
    ks = jax.random.split(key, 8)
    s = 1.0 / jnp.sqrt(hidden_size)
    u = lambda k, shape, scale: jax.random.uniform(k, shape, jnp.float32, -scale, scale)
    return {
        "w_ih": u(ks[0], (4 * hidden_size, input_size), s),
        "w_hh": u(ks[1], (4 * hidden_size, hidden_size), s),
        "b_ih": u(ks[2], (4 * hidden_size,), s),
        "b_hh": u(ks[3], (4 * hidden_size,), s),
        "w_fc2": u(ks[4], (output_size, hidden_size), s),
        "b_fc2": u(ks[5], (output_size,), s),
        "w_fc3": u(ks[6], (output_size, output_size), 1.0 / jnp.sqrt(output_size)),
        "b_fc3": u(ks[7], (output_size,), 1.0 / jnp.sqrt(output_size)),
    }


if __name__ == "__main__":
    # chars = '.' + ascii_lowercase -> 27; hidden_size = 54; num_layers = 1
    input_size = 27
    hidden_size = 54
    output_size = 27
    num_layers = 1
    batch = 4
    seq_len = 8

    key = jax.random.PRNGKey(0)
    k_params, k_x = jax.random.split(key)
    params = init_params(k_params, input_size, hidden_size, output_size)
    prep = prepare_params(params)            # one-time weight repack (off hot path)

    X = jax.random.normal(k_x, (batch, seq_len, input_size), jnp.float32)
    ht = jnp.zeros((num_layers, batch, hidden_size), jnp.float32)
    ct = jnp.zeros((num_layers, batch, hidden_size), jnp.float32)

    out, (hT, cT) = model_forward(X, (ht, ct), prep)
    jax.block_until_ready((out, hT, cT))

    out_ref, (hT_ref, cT_ref) = reference_forward(X, (ht, ct), params)
    assert out.shape == (batch, seq_len, output_size)
    assert hT.shape == (num_layers, batch, hidden_size)
    assert cT.shape == (num_layers, batch, hidden_size)
    assert jnp.allclose(out, out_ref, atol=1e-4, rtol=1e-4)
    assert jnp.allclose(hT, hT_ref, atol=1e-4, rtol=1e-4)
    assert jnp.allclose(cT, cT_ref, atol=1e-4, rtol=1e-4)

    print("KERNEL_OK")
</pallas_src>

<mosaic_0001>
module attributes {stable_mosaic.version = 11 : i64} {
  func.func @lstm_fc_kernel(%arg0: memref<4x8x27xf32, #tpu.memory_space<vmem>>, %arg1: memref<1x4x54xf32, #tpu.memory_space<vmem>>, %arg2: memref<1x4x54xf32, #tpu.memory_space<vmem>>, %arg3: memref<27x512xf32, #tpu.memory_space<vmem>>, %arg4: memref<128x512xf32, #tpu.memory_space<vmem>>, %arg5: memref<1x512xf32, #tpu.memory_space<vmem>>, %arg6: memref<1x128xf32, #tpu.memory_space<vmem>>, %arg7: memref<1x128xf32, #tpu.memory_space<vmem>>, %arg8: memref<128x128xf32, #tpu.memory_space<any>>, %arg9: memref<128x128xf32, #tpu.memory_space<any>>, %arg10: memref<4x8x27xf32, #tpu.memory_space<vmem>>, %arg11: memref<1x4x54xf32, #tpu.memory_space<vmem>>, %arg12: memref<1x4x54xf32, #tpu.memory_space<vmem>>, %arg13: memref<32x27xf32, #tpu.memory_space<vmem>>, %arg14: memref<32x512xf32, #tpu.memory_space<vmem>>, %arg15: memref<32x128xf32, #tpu.memory_space<vmem>>, %arg16: memref<8x128xf32, #tpu.memory_space<vmem>>, %arg17: memref<128x128xf32, #tpu.memory_space<vmem>>, %arg18: memref<128x128xf32, #tpu.memory_space<vmem>>, %arg19: memref<2x!tpu.dma_semaphore, #tpu.memory_space<semaphore_mem>>) attributes {dimension_semantics = [], scalar_prefetch = 0 : i64, scratch_operands = 7 : i64, tpu.core_type = #tpu.core_type<tc>} {
    %c0_i32 = arith.constant 0 : i32
    %0 = tpu.memref_slice %arg19[%c0_i32] : memref<2x!tpu.dma_semaphore, #tpu.memory_space<semaphore_mem>> -> memref<1x!tpu.dma_semaphore, #tpu.memory_space<semaphore_mem>>
    %1 = tpu.memref_squeeze %0 : memref<1x!tpu.dma_semaphore, #tpu.memory_space<semaphore_mem>> -> memref<!tpu.dma_semaphore, #tpu.memory_space<semaphore_mem>>
    tpu.enqueue_dma source(%arg8 : memref<128x128xf32, #tpu.memory_space<any>>) target(%arg17 : memref<128x128xf32, #tpu.memory_space<vmem>>) target_semaphore(%1 : memref<!tpu.dma_semaphore, #tpu.memory_space<semaphore_mem>>)
    %c1_i32 = arith.constant 1 : i32
    %2 = tpu.memref_slice %arg19[%c1_i32] : memref<2x!tpu.dma_semaphore, #tpu.memory_space<semaphore_mem>> -> memref<1x!tpu.dma_semaphore, #tpu.memory_space<semaphore_mem>>
    %3 = tpu.memref_squeeze %2 : memref<1x!tpu.dma_semaphore, #tpu.memory_space<semaphore_mem>> -> memref<!tpu.dma_semaphore, #tpu.memory_space<semaphore_mem>>
    tpu.enqueue_dma source(%arg9 : memref<128x128xf32, #tpu.memory_space<any>>) target(%arg18 : memref<128x128xf32, #tpu.memory_space<vmem>>) target_semaphore(%3 : memref<!tpu.dma_semaphore, #tpu.memory_space<semaphore_mem>>)
    %c0 = arith.constant 0 : index
    %c0_0 = arith.constant 0 : index
    %c0_1 = arith.constant 0 : index
    %4 = vector.load %arg0[%c0, %c0_0, %c0_1] : memref<4x8x27xf32, #tpu.memory_space<vmem>>, vector<4x1x27xf32>
    %5 = vector.shape_cast %4 : vector<4x1x27xf32> to vector<4x27xf32>
    %c0_2 = arith.constant 0 : index
    %c0_3 = arith.constant 0 : index
    %6 = vector.load %arg13[%c0_2, %c0_3] : memref<32x27xf32, #tpu.memory_space<vmem>>, vector<4x27xf32>
    tpu.vector_store %arg13[%c0_2, %c0_3], %5 {strides = array<i32>} : memref<32x27xf32, #tpu.memory_space<vmem>>, vector<4x27xf32>,
    %c0_4 = arith.constant 0 : index
    %c1 = arith.constant 1 : index
    %c0_5 = arith.constant 0 : index
    %7 = vector.load %arg0[%c0_4, %c1, %c0_5] : memref<4x8x27xf32, #tpu.memory_space<vmem>>, vector<4x1x27xf32>
    %8 = vector.shape_cast %7 : vector<4x1x27xf32> to vector<4x27xf32>
    %c4 = arith.constant 4 : index
    %c0_6 = arith.constant 0 : index
    %9 = vector.load %arg13[%c4, %c0_6] : memref<32x27xf32, #tpu.memory_space<vmem>>, vector<4x27xf32>
    tpu.vector_store %arg13[%c4, %c0_6], %8 {strides = array<i32>} : memref<32x27xf32, #tpu.memory_space<vmem>>, vector<4x27xf32>,
    %c0_7 = arith.constant 0 : index
    %c2 = arith.constant 2 : index
    %c0_8 = arith.constant 0 : index
    %10 = vector.load %arg0[%c0_7, %c2, %c0_8] : memref<4x8x27xf32, #tpu.memory_space<vmem>>, vector<4x1x27xf32>
    %11 = vector.shape_cast %10 : vector<4x1x27xf32> to vector<4x27xf32>
    %c8 = arith.constant 8 : index
    %c0_9 = arith.constant 0 : index
    %12 = vector.load %arg13[%c8, %c0_9] : memref<32x27xf32, #tpu.memory_space<vmem>>, vector<4x27xf32>
    tpu.vector_store %arg13[%c8, %c0_9], %11 {strides = array<i32>} : memref<32x27xf32, #tpu.memory_space<vmem>>, vector<4x27xf32>,
    %c0_10 = arith.constant 0 : index
    %c3 = arith.constant 3 : index
    %c0_11 = arith.constant 0 : index
    %13 = vector.load %arg0[%c0_10, %c3, %c0_11] : memref<4x8x27xf32, #tpu.memory_space<vmem>>, vector<4x1x27xf32>
    %14 = vector.shape_cast %13 : vector<4x1x27xf32> to vector<4x27xf32>
    %c12 = arith.constant 12 : index
    %c0_12 = arith.constant 0 : index
    %15 = vector.load %arg13[%c12, %c0_12] : memref<32x27xf32, #tpu.memory_space<vmem>>, vector<4x27xf32>
    tpu.vector_store %arg13[%c12, %c0_12], %14 {strides = array<i32>} : memref<32x27xf32, #tpu.memory_space<vmem>>, vector<4x27xf32>,
    %c0_13 = arith.constant 0 : index
    %c4_14 = arith.constant 4 : index
    %c0_15 = arith.constant 0 : index
    %16 = vector.load %arg0[%c0_13, %c4_14, %c0_15] : memref<4x8x27xf32, #tpu.memory_space<vmem>>, vector<4x1x27xf32>
    %17 = vector.shape_cast %16 : vector<4x1x27xf32> to vector<4x27xf32>
    %c16 = arith.constant 16 : index
    %c0_16 = arith.constant 0 : index
    %18 = vector.load %arg13[%c16, %c0_16] : memref<32x27xf32, #tpu.memory_space<vmem>>, vector<4x27xf32>
    tpu.vector_store %arg13[%c16, %c0_16], %17 {strides = array<i32>} : memref<32x27xf32, #tpu.memory_space<vmem>>, vector<4x27xf32>,
    %c0_17 = arith.constant 0 : index
    %c5 = arith.constant 5 : index
    %c0_18 = arith.constant 0 : index
    %19 = vector.load %arg0[%c0_17, %c5, %c0_18] : memref<4x8x27xf32, #tpu.memory_space<vmem>>, vector<4x1x27xf32>
    %20 = vector.shape_cast %19 : vector<4x1x27xf32> to vector<4x27xf32>
    %c20 = arith.constant 20 : index
    %c0_19 = arith.constant 0 : index
    %21 = vector.load %arg13[%c20, %c0_19] : memref<32x27xf32, #tpu.memory_space<vmem>>, vector<4x27xf32>
    tpu.vector_store %arg13[%c20, %c0_19], %20 {strides = array<i32>} : memref<32x27xf32, #tpu.memory_space<vmem>>, vector<4x27xf32>,
    %c0_20 = arith.constant 0 : index
    %c6 = arith.constant 6 : index
    %c0_21 = arith.constant 0 : index
    %22 = vector.load %arg0[%c0_20, %c6, %c0_21] : memref<4x8x27xf32, #tpu.memory_space<vmem>>, vector<4x1x27xf32>
    %23 = vector.shape_cast %22 : vector<4x1x27xf32> to vector<4x27xf32>
    %c24 = arith.constant 24 : index
    %c0_22 = arith.constant 0 : index
    %24 = vector.load %arg13[%c24, %c0_22] : memref<32x27xf32, #tpu.memory_space<vmem>>, vector<4x27xf32>
    tpu.vector_store %arg13[%c24, %c0_22], %23 {strides = array<i32>} : memref<32x27xf32, #tpu.memory_space<vmem>>, vector<4x27xf32>,
    %c0_23 = arith.constant 0 : index
    %c7 = arith.constant 7 : index
    %c0_24 = arith.constant 0 : index
    %25 = vector.load %arg0[%c0_23, %c7, %c0_24] : memref<4x8x27xf32, #tpu.memory_space<vmem>>, vector<4x1x27xf32>
    %26 = vector.shape_cast %25 : vector<4x1x27xf32> to vector<4x27xf32>
    %c28 = arith.constant 28 : index
    %c0_25 = arith.constant 0 : index
    %27 = vector.load %arg13[%c28, %c0_25] : memref<32x27xf32, #tpu.memory_space<vmem>>, vector<4x27xf32>
    tpu.vector_store %arg13[%c28, %c0_25], %26 {strides = array<i32>} : memref<32x27xf32, #tpu.memory_space<vmem>>, vector<4x27xf32>,
    %c0_26 = arith.constant 0 : index
    %c0_27 = arith.constant 0 : index
    %28 = vector.load %arg13[%c0_26, %c0_27] : memref<32x27xf32, #tpu.memory_space<vmem>>, vector<32x27xf32>
    %c0_28 = arith.constant 0 : index
    %c0_29 = arith.constant 0 : index
    %29 = vector.load %arg3[%c0_28, %c0_29] : memref<27x512xf32, #tpu.memory_space<vmem>>, vector<27x512xf32>
    %cst = arith.constant dense<0.000000e+00> : vector<32x512xf32>
    %30 = tpu.matmul %28, %29, %cst {dimension_numbers = #tpu.dot_dimension_numbers<[1], [0], [0], [1], [0, 0, 1, 1], [], []>} : vector<32x27xf32>, vector<27x512xf32>, vector<32x512xf32> -> vector<32x512xf32>
    %c0_30 = arith.constant 0 : index
    %c0_31 = arith.constant 0 : index
    %31 = vector.load %arg5[%c0_30, %c0_31] : memref<1x512xf32, #tpu.memory_space<vmem>>, vector<1x512xf32>
    %32 = vector.broadcast %31 : vector<1x512xf32> to vector<32x512xf32>
    %33 = arith.addf %30, %32 : vector<32x512xf32>
    %c0_32 = arith.constant 0 : index
    %c0_33 = arith.constant 0 : index
    %34 = vector.load %arg14[%c0_32, %c0_33] : memref<32x512xf32, #tpu.memory_space<vmem>>, vector<32x512xf32>
    tpu.vector_store %arg14[%c0_32, %c0_33], %33 {strides = array<i32>} : memref<32x512xf32, #tpu.memory_space<vmem>>, vector<32x512xf32>,
    %cst_34 = arith.constant 0.000000e+00 : f32
    %35 = vector.broadcast %cst_34 : f32 to vector<8x128xf32>
    %c0_35 = arith.constant 0 : index
    %c0_36 = arith.constant 0 : index
    %36 = vector.load %arg16[%c0_35, %c0_36] : memref<8x128xf32, #tpu.memory_space<vmem>>, vector<8x128xf32>
    tpu.vector_store %arg16[%c0_35, %c0_36], %35 {strides = array<i32>} : memref<8x128xf32, #tpu.memory_space<vmem>>, vector<8x128xf32>,
    %c0_37 = arith.constant 0 : index
    %c0_38 = arith.constant 0 : index
    %c0_39 = arith.constant 0 : index
    %37 = vector.load %arg1[%c0_37, %c0_38, %c0_39] : memref<1x4x54xf32, #tpu.memory_space<vmem>>, vector<1x4x54xf32>
    %38 = vector.shape_cast %37 : vector<1x4x54xf32> to vector<4x54xf32>
    %c0_40 = arith.constant 0 : index
    %c0_41 = arith.constant 0 : index
    %39 = vector.load %arg16[%c0_40, %c0_41] : memref<8x128xf32, #tpu.memory_space<vmem>>, vector<4x54xf32>
    tpu.vector_store %arg16[%c0_40, %c0_41], %38 {strides = array<i32>} : memref<8x128xf32, #tpu.memory_space<vmem>>, vector<4x54xf32>,
    %c0_42 = arith.constant 0 : index
    %c0_43 = arith.constant 0 : index
    %c0_44 = arith.constant 0 : index
    %40 = vector.load %arg2[%c0_42, %c0_43, %c0_44] : memref<1x4x54xf32, #tpu.memory_space<vmem>>, vector<1x4x54xf32>
    %41 = vector.shape_cast %40 : vector<1x4x54xf32> to vector<4x54xf32>
    %c4_45 = arith.constant 4 : index
    %c0_46 = arith.constant 0 : index
    %42 = vector.load %arg16[%c4_45, %c0_46] : memref<8x128xf32, #tpu.memory_space<vmem>>, vector<4x54xf32>
    tpu.vector_store %arg16[%c4_45, %c0_46], %41 {strides = array<i32>} : memref<8x128xf32, #tpu.memory_space<vmem>>, vector<4x54xf32>,
    %c0_47 = arith.constant 0 : index
    %c0_48 = arith.constant 0 : index
    %43 = vector.load %arg16[%c0_47, %c0_48] : memref<8x128xf32, #tpu.memory_space<vmem>>, vector<4x128xf32>
    %c4_49 = arith.constant 4 : index
    %c0_50 = arith.constant 0 : index
    %44 = vector.load %arg16[%c4_49, %c0_50] : memref<8x128xf32, #tpu.memory_space<vmem>>, vector<4x128xf32>
    %c0_51 = arith.constant 0 : index
    %c0_52 = arith.constant 0 : index
    %45 = vector.load %arg4[%c0_51, %c0_52] : memref<128x512xf32, #tpu.memory_space<vmem>>, vector<128x512xf32>
    %c0_53 = arith.constant 0 : index
    %c0_54 = arith.constant 0 : index
    %46 = vector.load %arg14[%c0_53, %c0_54] : memref<32x512xf32, #tpu.memory_space<vmem>>, vector<4x512xf32>
    %cst_55 = arith.constant dense<0.000000e+00> : vector<4x512xf32>
    %47 = tpu.matmul %43, %45, %cst_55 {dimension_numbers = #tpu.dot_dimension_numbers<[1], [0], [0], [1], [0, 0, 1, 1], [], []>} : vector<4x128xf32>, vector<128x512xf32>, vector<4x512xf32> -> vector<4x512xf32>
    %48 = arith.addf %46, %47 : vector<4x512xf32>
    %49 = vector.extract_strided_slice %48 {offsets = [0, 0], sizes = [4, 128], strides = [1, 1]} : vector<4x512xf32> to vector<4x128xf32>
    %50 = math.tanh %49 : vector<4x128xf32>
    %51 = vector.extract_strided_slice %48 {offsets = [0, 128], sizes = [4, 384], strides = [1, 1]} : vector<4x512xf32> to vector<4x384xf32>
    %52 = arith.negf %51 : vector<4x384xf32>
    %53 = math.exp %52 : vector<4x384xf32>
    %cst_56 = arith.constant 1.000000e+00 : f32
    %54 = vector.broadcast %cst_56 : f32 to vector<4x384xf32>
    %55 = arith.addf %54, %53 : vector<4x384xf32>
    %56 = arith.divf %54, %55 : vector<4x384xf32>
    %57 = vector.extract_strided_slice %56 {offsets = [0, 0], sizes = [4, 128], strides = [1, 1]} : vector<4x384xf32> to vector<4x128xf32>
    %58 = vector.extract_strided_slice %56 {offsets = [0, 128], sizes = [4, 128], strides = [1, 1]} : vector<4x384xf32> to vector<4x128xf32>
    %59 = vector.extract_strided_slice %56 {offsets = [0, 256], sizes = [4, 128], strides = [1, 1]} : vector<4x384xf32> to vector<4x128xf32>
    %60 = arith.mulf %58, %44 : vector<4x128xf32>
    %61 = arith.mulf %57, %50 : vector<4x128xf32>
    %62 = arith.addf %60, %61 : vector<4x128xf32>
    %63 = math.tanh %62 : vector<4x128xf32>
    %64 = arith.mulf %59, %63 : vector<4x128xf32>
    %c0_57 = arith.constant 0 : index
    %c0_58 = arith.constant 0 : index
    %65 = vector.load %arg15[%c0_57, %c0_58] : memref<32x128xf32, #tpu.memory_space<vmem>>, vector<4x128xf32>
    tpu.vector_store %arg15[%c0_57, %c0_58], %64 {strides = array<i32>} : memref<32x128xf32, #tpu.memory_space<vmem>>, vector<4x128xf32>,
    %c4_59 = arith.constant 4 : index
    %c0_60 = arith.constant 0 : index
    %66 = vector.load %arg14[%c4_59, %c0_60] : memref<32x512xf32, #tpu.memory_space<vmem>>, vector<4x512xf32>
    %cst_61 = arith.constant dense<0.000000e+00> : vector<4x512xf32>
    %67 = tpu.matmul %64, %45, %cst_61 {dimension_numbers = #tpu.dot_dimension_numbers<[1], [0], [0], [1], [0, 0, 1, 1], [], []>} : vector<4x128xf32>, vector<128x512xf32>, vector<4x512xf32> -> vector<4x512xf32>
    %68 = arith.addf %66, %67 : vector<4x512xf32>
    %69 = vector.extract_strided_slice %68 {offsets = [0, 0], sizes = [4, 128], strides = [1, 1]} : vector<4x512xf32> to vector<4x128xf32>
    %70 = math.tanh %69 : vector<4x128xf32>
    %71 = vector.extract_strided_slice %68 {offsets = [0, 128], sizes = [4, 384], strides = [1, 1]} : vector<4x512xf32> to vector<4x384xf32>
    %72 = arith.negf %71 : vector<4x384xf32>
    %73 = math.exp %72 : vector<4x384xf32>
    %cst_62 = arith.constant 1.000000e+00 : f32
    %74 = vector.broadcast %cst_62 : f32 to vector<4x384xf32>
    %75 = arith.addf %74, %73 : vector<4x384xf32>
    %76 = arith.divf %74, %75 : vector<4x384xf32>
    %77 = vector.extract_strided_slice %76 {offsets = [0, 0], sizes = [4, 128], strides = [1, 1]} : vector<4x384xf32> to vector<4x128xf32>
    %78 = vector.extract_strided_slice %76 {offsets = [0, 128], sizes = [4, 128], strides = [1, 1]} : vector<4x384xf32> to vector<4x128xf32>
    %79 = vector.extract_strided_slice %76 {offsets = [0, 256], sizes = [4, 128], strides = [1, 1]} : vector<4x384xf32> to vector<4x128xf32>
    %80 = arith.mulf %78, %62 : vector<4x128xf32>
    %81 = arith.mulf %77, %70 : vector<4x128xf32>
    %82 = arith.addf %80, %81 : vector<4x128xf32>
    %83 = math.tanh %82 : vector<4x128xf32>
    %84 = arith.mulf %79, %83 : vector<4x128xf32>
    %c4_63 = arith.constant 4 : index
    %c0_64 = arith.constant 0 : index
    %85 = vector.load %arg15[%c4_63, %c0_64] : memref<32x128xf32, #tpu.memory_space<vmem>>, vector<4x128xf32>
    tpu.vector_store %arg15[%c4_63, %c0_64], %84 {strides = array<i32>} : memref<32x128xf32, #tpu.memory_space<vmem>>, vector<4x128xf32>,
    %c8_65 = arith.constant 8 : index
    %c0_66 = arith.constant 0 : index
    %86 = vector.load %arg14[%c8_65, %c0_66] : memref<32x512xf32, #tpu.memory_space<vmem>>, vector<4x512xf32>
    %cst_67 = arith.constant dense<0.000000e+00> : vector<4x512xf32>
    %87 = tpu.matmul %84, %45, %cst_67 {dimension_numbers = #tpu.dot_dimension_numbers<[1], [0], [0], [1], [0, 0, 1, 1], [], []>} : vector<4x128xf32>, vector<128x512xf32>, vector<4x512xf32> -> vector<4x512xf32>
    %88 = arith.addf %86, %87 : vector<4x512xf32>
    %89 = vector.extract_strided_slice %88 {offsets = [0, 0], sizes = [4, 128], strides = [1, 1]} : vector<4x512xf32> to vector<4x128xf32>
    %90 = math.tanh %89 : vector<4x128xf32>
    %91 = vector.extract_strided_slice %88 {offsets = [0, 128], sizes = [4, 384], strides = [1, 1]} : vector<4x512xf32> to vector<4x384xf32>
    %92 = arith.negf %91 : vector<4x384xf32>
    %93 = math.exp %92 : vector<4x384xf32>
    %cst_68 = arith.constant 1.000000e+00 : f32
    %94 = vector.broadcast %cst_68 : f32 to vector<4x384xf32>
    %95 = arith.addf %94, %93 : vector<4x384xf32>
    %96 = arith.divf %94, %95 : vector<4x384xf32>
    %97 = vector.extract_strided_slice %96 {offsets = [0, 0], sizes = [4, 128], strides = [1, 1]} : vector<4x384xf32> to vector<4x128xf32>
    %98 = vector.extract_strided_slice %96 {offsets = [0, 128], sizes = [4, 128], strides = [1, 1]} : vector<4x384xf32> to vector<4x128xf32>
    %99 = vector.extract_strided_slice %96 {offsets = [0, 256], sizes = [4, 128], strides = [1, 1]} : vector<4x384xf32> to vector<4x128xf32>
    %100 = arith.mulf %98, %82 : vector<4x128xf32>
    %101 = arith.mulf %97, %90 : vector<4x128xf32>
    %102 = arith.addf %100, %101 : vector<4x128xf32>
    %103 = math.tanh %102 : vector<4x128xf32>
    %104 = arith.mulf %99, %103 : vector<4x128xf32>
    %c8_69 = arith.constant 8 : index
    %c0_70 = arith.constant 0 : index
    %105 = vector.load %arg15[%c8_69, %c0_70] : memref<32x128xf32, #tpu.memory_space<vmem>>, vector<4x128xf32>
    tpu.vector_store %arg15[%c8_69, %c0_70], %104 {strides = array<i32>} : memref<32x128xf32, #tpu.memory_space<vmem>>, vector<4x128xf32>,
    %c12_71 = arith.constant 12 : index
    %c0_72 = arith.constant 0 : index
    %106 = vector.load %arg14[%c12_71, %c0_72] : memref<32x512xf32, #tpu.memory_space<vmem>>, vector<4x512xf32>
    %cst_73 = arith.constant dense<0.000000e+00> : vector<4x512xf32>
    %107 = tpu.matmul %104, %45, %cst_73 {dimension_numbers = #tpu.dot_dimension_numbers<[1], [0], [0], [1], [0, 0, 1, 1], [], []>} : vector<4x128xf32>, vector<128x512xf32>, vector<4x512xf32> -> vector<4x512xf32>
    %108 = arith.addf %106, %107 : vector<4x512xf32>
    %109 = vector.extract_strided_slice %108 {offsets = [0, 0], sizes = [4, 128], strides = [1, 1]} : vector<4x512xf32> to vector<4x128xf32>
    %110 = math.tanh %109 : vector<4x128xf32>
    %111 = vector.extract_strided_slice %108 {offsets = [0, 128], sizes = [4, 384], strides = [1, 1]} : vector<4x512xf32> to vector<4x384xf32>
    %112 = arith.negf %111 : vector<4x384xf32>
    %113 = math.exp %112 : vector<4x384xf32>
    %cst_74 = arith.constant 1.000000e+00 : f32
    %114 = vector.broadcast %cst_74 : f32 to vector<4x384xf32>
    %115 = arith.addf %114, %113 : vector<4x384xf32>
    %116 = arith.divf %114, %115 : vector<4x384xf32>
    %117 = vector.extract_strided_slice %116 {offsets = [0, 0], sizes = [4, 128], strides = [1, 1]} : vector<4x384xf32> to vector<4x128xf32>
    %118 = vector.extract_strided_slice %116 {offsets = [0, 128], sizes = [4, 128], strides = [1, 1]} : vector<4x384xf32> to vector<4x128xf32>
    %119 = vector.extract_strided_slice %116 {offsets = [0, 256], sizes = [4, 128], strides = [1, 1]} : vector<4x384xf32> to vector<4x128xf32>
    %120 = arith.mulf %118, %102 : vector<4x128xf32>
    %121 = arith.mulf %117, %110 : vector<4x128xf32>
    %122 = arith.addf %120, %121 : vector<4x128xf32>
    %123 = math.tanh %122 : vector<4x128xf32>
    %124 = arith.mulf %119, %123 : vector<4x128xf32>
    %c12_75 = arith.constant 12 : index
    %c0_76 = arith.constant 0 : index
    %125 = vector.load %arg15[%c12_75, %c0_76] : memref<32x128xf32, #tpu.memory_space<vmem>>, vector<4x128xf32>
    tpu.vector_store %arg15[%c12_75, %c0_76], %124 {strides = array<i32>} : memref<32x128xf32, #tpu.memory_space<vmem>>, vector<4x128xf32>,
    %c16_77 = arith.constant 16 : index
    %c0_78 = arith.constant 0 : index
    %126 = vector.load %arg14[%c16_77, %c0_78] : memref<32x512xf32, #tpu.memory_space<vmem>>, vector<4x512xf32>
    %cst_79 = arith.constant dense<0.000000e+00> : vector<4x512xf32>
    %127 = tpu.matmul %124, %45, %cst_79 {dimension_numbers = #tpu.dot_dimension_numbers<[1], [0], [0], [1], [0, 0, 1, 1], [], []>} : vector<4x128xf32>, vector<128x512xf32>, vector<4x512xf32> -> vector<4x512xf32>
    %128 = arith.addf %126, %127 : vector<4x512xf32>
    %129 = vector.extract_strided_slice %128 {offsets = [0, 0], sizes = [4, 128], strides = [1, 1]} : vector<4x512xf32> to vector<4x128xf32>
    %130 = math.tanh %129 : vector<4x128xf32>
    %131 = vector.extract_strided_slice %128 {offsets = [0, 128], sizes = [4, 384], strides = [1, 1]} : vector<4x512xf32> to vector<4x384xf32>
    %132 = arith.negf %131 : vector<4x384xf32>
    %133 = math.exp %132 : vector<4x384xf32>
    %cst_80 = arith.constant 1.000000e+00 : f32
    %134 = vector.broadcast %cst_80 : f32 to vector<4x384xf32>
    %135 = arith.addf %134, %133 : vector<4x384xf32>
    %136 = arith.divf %134, %135 : vector<4x384xf32>
    %137 = vector.extract_strided_slice %136 {offsets = [0, 0], sizes = [4, 128], strides = [1, 1]} : vector<4x384xf32> to vector<4x128xf32>
    %138 = vector.extract_strided_slice %136 {offsets = [0, 128], sizes = [4, 128], strides = [1, 1]} : vector<4x384xf32> to vector<4x128xf32>
    %139 = vector.extract_strided_slice %136 {offsets = [0, 256], sizes = [4, 128], strides = [1, 1]} : vector<4x384xf32> to vector<4x128xf32>
    %140 = arith.mulf %138, %122 : vector<4x128xf32>
    %141 = arith.mulf %137, %130 : vector<4x128xf32>
    %142 = arith.addf %140, %141 : vector<4x128xf32>
    %143 = math.tanh %142 : vector<4x128xf32>
    %144 = arith.mulf %139, %143 : vector<4x128xf32>
    %c16_81 = arith.constant 16 : index
    %c0_82 = arith.constant 0 : index
    %145 = vector.load %arg15[%c16_81, %c0_82] : memref<32x128xf32, #tpu.memory_space<vmem>>, vector<4x128xf32>
    tpu.vector_store %arg15[%c16_81, %c0_82], %144 {strides = array<i32>} : memref<32x128xf32, #tpu.memory_space<vmem>>, vector<4x128xf32>,
    %c20_83 = arith.constant 20 : index
    %c0_84 = arith.constant 0 : index
    %146 = vector.load %arg14[%c20_83, %c0_84] : memref<32x512xf32, #tpu.memory_space<vmem>>, vector<4x512xf32>
    %cst_85 = arith.constant dense<0.000000e+00> : vector<4x512xf32>
    %147 = tpu.matmul %144, %45, %cst_85 {dimension_numbers = #tpu.dot_dimension_numbers<[1], [0], [0], [1], [0, 0, 1, 1], [], []>} : vector<4x128xf32>, vector<128x512xf32>, vector<4x512xf32> -> vector<4x512xf32>
    %148 = arith.addf %146, %147 : vector<4x512xf32>
    %149 = vector.extract_strided_slice %148 {offsets = [0, 0], sizes = [4, 128], strides = [1, 1]} : vector<4x512xf32> to vector<4x128xf32>
    %150 = math.tanh %149 : vector<4x128xf32>
    %151 = vector.extract_strided_slice %148 {offsets = [0, 128], sizes = [4, 384], strides = [1, 1]} : vector<4x512xf32> to vector<4x384xf32>
    %152 = arith.negf %151 : vector<4x384xf32>
    %153 = math.exp %152 : vector<4x384xf32>
    %cst_86 = arith.constant 1.000000e+00 : f32
    %154 = vector.broadcast %cst_86 : f32 to vector<4x384xf32>
    %155 = arith.addf %154, %153 : vector<4x384xf32>
    %156 = arith.divf %154, %155 : vector<4x384xf32>
    %157 = vector.extract_strided_slice %156 {offsets = [0, 0], sizes = [4, 128], strides = [1, 1]} : vector<4x384xf32> to vector<4x128xf32>
    %158 = vector.extract_strided_slice %156 {offsets = [0, 128], sizes = [4, 128], strides = [1, 1]} : vector<4x384xf32> to vector<4x128xf32>
    %159 = vector.extract_strided_slice %156 {offsets = [0, 256], sizes = [4, 128], strides = [1, 1]} : vector<4x384xf32> to vector<4x128xf32>
    %160 = arith.mulf %158, %142 : vector<4x128xf32>
    %161 = arith.mulf %157, %150 : vector<4x128xf32>
    %162 = arith.addf %160, %161 : vector<4x128xf32>
    %163 = math.tanh %162 : vector<4x128xf32>
    %164 = arith.mulf %159, %163 : vector<4x128xf32>
    %c20_87 = arith.constant 20 : index
    %c0_88 = arith.constant 0 : index
    %165 = vector.load %arg15[%c20_87, %c0_88] : memref<32x128xf32, #tpu.memory_space<vmem>>, vector<4x128xf32>
    tpu.vector_store %arg15[%c20_87, %c0_88], %164 {strides = array<i32>} : memref<32x128xf32, #tpu.memory_space<vmem>>, vector<4x128xf32>,
    %c24_89 = arith.constant 24 : index
    %c0_90 = arith.constant 0 : index
    %166 = vector.load %arg14[%c24_89, %c0_90] : memref<32x512xf32, #tpu.memory_space<vmem>>, vector<4x512xf32>
    %cst_91 = arith.constant dense<0.000000e+00> : vector<4x512xf32>
    %167 = tpu.matmul %164, %45, %cst_91 {dimension_numbers = #tpu.dot_dimension_numbers<[1], [0], [0], [1], [0, 0, 1, 1], [], []>} : vector<4x128xf32>, vector<128x512xf32>, vector<4x512xf32> -> vector<4x512xf32>
    %168 = arith.addf %166, %167 : vector<4x512xf32>
    %169 = vector.extract_strided_slice %168 {offsets = [0, 0], sizes = [4, 128], strides = [1, 1]} : vector<4x512xf32> to vector<4x128xf32>
    %170 = math.tanh %169 : vector<4x128xf32>
    %171 = vector.extract_strided_slice %168 {offsets = [0, 128], sizes = [4, 384], strides = [1, 1]} : vector<4x512xf32> to vector<4x384xf32>
    %172 = arith.negf %171 : vector<4x384xf32>
    %173 = math.exp %172 : vector<4x384xf32>
    %cst_92 = arith.constant 1.000000e+00 : f32
    %174 = vector.broadcast %cst_92 : f32 to vector<4x384xf32>
    %175 = arith.addf %174, %173 : vector<4x384xf32>
    %176 = arith.divf %174, %175 : vector<4x384xf32>
    %177 = vector.extract_strided_slice %176 {offsets = [0, 0], sizes = [4, 128], strides = [1, 1]} : vector<4x384xf32> to vector<4x128xf32>
    %178 = vector.extract_strided_slice %176 {offsets = [0, 128], sizes = [4, 128], strides = [1, 1]} : vector<4x384xf32> to vector<4x128xf32>
    %179 = vector.extract_strided_slice %176 {offsets = [0, 256], sizes = [4, 128], strides = [1, 1]} : vector<4x384xf32> to vector<4x128xf32>
    %180 = arith.mulf %178, %162 : vector<4x128xf32>
    %181 = arith.mulf %177, %170 : vector<4x128xf32>
    %182 = arith.addf %180, %181 : vector<4x128xf32>
    %183 = math.tanh %182 : vector<4x128xf32>
    %184 = arith.mulf %179, %183 : vector<4x128xf32>
    %c24_93 = arith.constant 24 : index
    %c0_94 = arith.constant 0 : index
    %185 = vector.load %arg15[%c24_93, %c0_94] : memref<32x128xf32, #tpu.memory_space<vmem>>, vector<4x128xf32>
    tpu.vector_store %arg15[%c24_93, %c0_94], %184 {strides = array<i32>} : memref<32x128xf32, #tpu.memory_space<vmem>>, vector<4x128xf32>,
    %c28_95 = arith.constant 28 : index
    %c0_96 = arith.constant 0 : index
    %186 = vector.load %arg14[%c28_95, %c0_96] : memref<32x512xf32, #tpu.memory_space<vmem>>, vector<4x512xf32>
    %cst_97 = arith.constant dense<0.000000e+00> : vector<4x512xf32>
    %187 = tpu.matmul %184, %45, %cst_97 {dimension_numbers = #tpu.dot_dimension_numbers<[1], [0], [0], [1], [0, 0, 1, 1], [], []>} : vector<4x128xf32>, vector<128x512xf32>, vector<4x512xf32> -> vector<4x512xf32>
    %188 = arith.addf %186, %187 : vector<4x512xf32>
    %189 = vector.extract_strided_slice %188 {offsets = [0, 0], sizes = [4, 128], strides = [1, 1]} : vector<4x512xf32> to vector<4x128xf32>
    %190 = math.tanh %189 : vector<4x128xf32>
    %191 = vector.extract_strided_slice %188 {offsets = [0, 128], sizes = [4, 384], strides = [1, 1]} : vector<4x512xf32> to vector<4x384xf32>
    %192 = arith.negf %191 : vector<4x384xf32>
    %193 = math.exp %192 : vector<4x384xf32>
    %cst_98 = arith.constant 1.000000e+00 : f32
    %194 = vector.broadcast %cst_98 : f32 to vector<4x384xf32>
    %195 = arith.addf %194, %193 : vector<4x384xf32>
    %196 = arith.divf %194, %195 : vector<4x384xf32>
    %197 = vector.extract_strided_slice %196 {offsets = [0, 0], sizes = [4, 128], strides = [1, 1]} : vector<4x384xf32> to vector<4x128xf32>
    %198 = vector.extract_strided_slice %196 {offsets = [0, 128], sizes = [4, 128], strides = [1, 1]} : vector<4x384xf32> to vector<4x128xf32>
    %199 = vector.extract_strided_slice %196 {offsets = [0, 256], sizes = [4, 128], strides = [1, 1]} : vector<4x384xf32> to vector<4x128xf32>
    %200 = arith.mulf %198, %182 : vector<4x128xf32>
    %201 = arith.mulf %197, %190 : vector<4x128xf32>
    %202 = arith.addf %200, %201 : vector<4x128xf32>
    %203 = math.tanh %202 : vector<4x128xf32>
    %204 = arith.mulf %199, %203 : vector<4x128xf32>
    %c28_99 = arith.constant 28 : index
    %c0_100 = arith.constant 0 : index
    %205 = vector.load %arg15[%c28_99, %c0_100] : memref<32x128xf32, #tpu.memory_space<vmem>>, vector<4x128xf32>
    tpu.vector_store %arg15[%c28_99, %c0_100], %204 {strides = array<i32>} : memref<32x128xf32, #tpu.memory_space<vmem>>, vector<4x128xf32>,
    %206 = vector.extract_strided_slice %204 {offsets = [0, 0], sizes = [4, 54], strides = [1, 1]} : vector<4x128xf32> to vector<4x54xf32>
    %c0_101 = arith.constant 0 : index
    %c0_102 = arith.constant 0 : index
    %c0_103 = arith.constant 0 : index
    %207 = vector.load %arg11[%c0_101, %c0_102, %c0_103] : memref<1x4x54xf32, #tpu.memory_space<vmem>>, vector<1x4x54xf32>
    %208 = vector.shape_cast %207 : vector<1x4x54xf32> to vector<4x54xf32>
    %209 = vector.shape_cast %206 : vector<4x54xf32> to vector<1x4x54xf32>
    tpu.vector_store %arg11[%c0_101, %c0_102, %c0_103], %209 {strides = array<i32>} : memref<1x4x54xf32, #tpu.memory_space<vmem>>, vector<1x4x54xf32>,
    %210 = vector.extract_strided_slice %202 {offsets = [0, 0], sizes = [4, 54], strides = [1, 1]} : vector<4x128xf32> to vector<4x54xf32>
    %c0_104 = arith.constant 0 : index
    %c0_105 = arith.constant 0 : index
    %c0_106 = arith.constant 0 : index
    %211 = vector.load %arg12[%c0_104, %c0_105, %c0_106] : memref<1x4x54xf32, #tpu.memory_space<vmem>>, vector<1x4x54xf32>
    %212 = vector.shape_cast %211 : vector<1x4x54xf32> to vector<4x54xf32>
    %213 = vector.shape_cast %210 : vector<4x54xf32> to vector<1x4x54xf32>
    tpu.vector_store %arg12[%c0_104, %c0_105, %c0_106], %213 {strides = array<i32>} : memref<1x4x54xf32, #tpu.memory_space<vmem>>, vector<1x4x54xf32>,
    %c0_i32_107 = arith.constant 0 : i32
    %214 = tpu.memref_slice %arg19[%c0_i32_107] : memref<2x!tpu.dma_semaphore, #tpu.memory_space<semaphore_mem>> -> memref<1x!tpu.dma_semaphore, #tpu.memory_space<semaphore_mem>>
    %215 = tpu.memref_squeeze %214 : memref<1x!tpu.dma_semaphore, #tpu.memory_space<semaphore_mem>> -> memref<!tpu.dma_semaphore, #tpu.memory_space<semaphore_mem>>
    tpu.wait_dma2 semaphore(%215 : memref<!tpu.dma_semaphore, #tpu.memory_space<semaphore_mem>>) src(%arg8 : memref<128x128xf32, #tpu.memory_space<any>>) dst(%arg17 : memref<128x128xf32, #tpu.memory_space<vmem>>)
    %c0_108 = arith.constant 0 : index
    %c0_109 = arith.constant 0 : index
    %216 = vector.load %arg15[%c0_108, %c0_109] : memref<32x128xf32, #tpu.memory_space<vmem>>, vector<32x128xf32>
    %c0_110 = arith.constant 0 : index
    %c0_111 = arith.constant 0 : index
    %217 = vector.load %arg17[%c0_110, %c0_111] : memref<128x128xf32, #tpu.memory_space<vmem>>, vector<128x128xf32>
    %cst_112 = arith.constant dense<0.000000e+00> : vector<32x128xf32>
    %218 = tpu.matmul %216, %217, %cst_112 {dimension_numbers = #tpu.dot_dimension_numbers<[1], [0], [0], [1], [0, 0, 1, 1], [], []>} : vector<32x128xf32>, vector<128x128xf32>, vector<32x128xf32> -> vector<32x128xf32>
    %c0_113 = arith.constant 0 : index
    %c0_114 = arith.constant 0 : index
    %219 = vector.load %arg6[%c0_113, %c0_114] : memref<1x128xf32, #tpu.memory_space<vmem>>, vector<1x128xf32>
    %220 = vector.broadcast %219 : vector<1x128xf32> to vector<32x128xf32>
    %221 = arith.addf %218, %220 : vector<32x128xf32>
    %cst_115 = arith.constant 0.000000e+00 : f32
    %222 = vector.broadcast %cst_115 : f32 to vector<32x128xf32>
    %223 = arith.maximumf %221, %222 : vector<32x128xf32>
    %c1_i32_116 = arith.constant 1 : i32
    %224 = tpu.memref_slice %arg19[%c1_i32_116] : memref<2x!tpu.dma_semaphore, #tpu.memory_space<semaphore_mem>> -> memref<1x!tpu.dma_semaphore, #tpu.memory_space<semaphore_mem>>
    %225 = tpu.memref_squeeze %224 : memref<1x!tpu.dma_semaphore, #tpu.memory_space<semaphore_mem>> -> memref<!tpu.dma_semaphore, #tpu.memory_space<semaphore_mem>>
    tpu.wait_dma2 semaphore(%225 : memref<!tpu.dma_semaphore, #tpu.memory_space<semaphore_mem>>) src(%arg9 : memref<128x128xf32, #tpu.memory_space<any>>) dst(%arg18 : memref<128x128xf32, #tpu.memory_space<vmem>>)
    %c0_117 = arith.constant 0 : index
    %c0_118 = arith.constant 0 : index
    %226 = vector.load %arg18[%c0_117, %c0_118] : memref<128x128xf32, #tpu.memory_space<vmem>>, vector<128x128xf32>
    %cst_119 = arith.constant dense<0.000000e+00> : vector<32x128xf32>
    %227 = tpu.matmul %223, %226, %cst_119 {dimension_numbers = #tpu.dot_dimension_numbers<[1], [0], [0], [1], [0, 0, 1, 1], [], []>} : vector<32x128xf32>, vector<128x128xf32>, vector<32x128xf32> -> vector<32x128xf32>
    %c0_120 = arith.constant 0 : index
    %c0_121 = arith.constant 0 : index
    %228 = vector.load %arg7[%c0_120, %c0_121] : memref<1x128xf32, #tpu.memory_space<vmem>>, vector<1x128xf32>
    %229 = vector.broadcast %228 : vector<1x128xf32> to vector<32x128xf32>
    %230 = arith.addf %227, %229 : vector<32x128xf32>
    %231 = vector.extract_strided_slice %230 {offsets = [0, 0], sizes = [4, 27], strides = [1, 1]} : vector<32x128xf32> to vector<4x27xf32>
    %c0_122 = arith.constant 0 : index
    %c0_123 = arith.constant 0 : index
    %c0_124 = arith.constant 0 : index
    %232 = vector.load %arg10[%c0_122, %c0_123, %c0_124] : memref<4x8x27xf32, #tpu.memory_space<vmem>>, vector<4x1x27xf32>
    %233 = vector.shape_cast %232 : vector<4x1x27xf32> to vector<4x27xf32>
    %234 = vector.shape_cast %231 : vector<4x27xf32> to vector<4x1x27xf32>
    tpu.vector_store %arg10[%c0_122, %c0_123, %c0_124], %234 {strides = array<i32>} : memref<4x8x27xf32, #tpu.memory_space<vmem>>, vector<4x1x27xf32>,
    %235 = vector.extract_strided_slice %230 {offsets = [4, 0], sizes = [4, 27], strides = [1, 1]} : vector<32x128xf32> to vector<4x27xf32>
    %c0_125 = arith.constant 0 : index
    %c1_126 = arith.constant 1 : index
    %c0_127 = arith.constant 0 : index
    %236 = vector.load %arg10[%c0_125, %c1_126, %c0_127] : memref<4x8x27xf32, #tpu.memory_space<vmem>>, vector<4x1x27xf32>
    %237 = vector.shape_cast %236 : vector<4x1x27xf32> to vector<4x27xf32>
    %238 = vector.shape_cast %235 : vector<4x27xf32> to vector<4x1x27xf32>
    tpu.vector_store %arg10[%c0_125, %c1_126, %c0_127], %238 {strides = array<i32>} : memref<4x8x27xf32, #tpu.memory_space<vmem>>, vector<4x1x27xf32>,
    %239 = vector.extract_strided_slice %230 {offsets = [8, 0], sizes = [4, 27], strides = [1, 1]} : vector<32x128xf32> to vector<4x27xf32>
    %c0_128 = arith.constant 0 : index
    %c2_129 = arith.constant 2 : index
    %c0_130 = arith.constant 0 : index
    %240 = vector.load %arg10[%c0_128, %c2_129, %c0_130] : memref<4x8x27xf32, #tpu.memory_space<vmem>>, vector<4x1x27xf32>
    %241 = vector.shape_cast %240 : vector<4x1x27xf32> to vector<4x27xf32>
    %242 = vector.shape_cast %239 : vector<4x27xf32> to vector<4x1x27xf32>
    tpu.vector_store %arg10[%c0_128, %c2_129, %c0_130], %242 {strides = array<i32>} : memref<4x8x27xf32, #tpu.memory_space<vmem>>, vector<4x1x27xf32>,
    %243 = vector.extract_strided_slice %230 {offsets = [12, 0], sizes = [4, 27], strides = [1, 1]} : vector<32x128xf32> to vector<4x27xf32>
    %c0_131 = arith.constant 0 : index
    %c3_132 = arith.constant 3 : index
    %c0_133 = arith.constant 0 : index
    %244 = vector.load %arg10[%c0_131, %c3_132, %c0_133] : memref<4x8x27xf32, #tpu.memory_space<vmem>>, vector<4x1x27xf32>
    %245 = vector.shape_cast %244 : vector<4x1x27xf32> to vector<4x27xf32>
    %246 = vector.shape_cast %243 : vector<4x27xf32> to vector<4x1x27xf32>
    tpu.vector_store %arg10[%c0_131, %c3_132, %c0_133], %246 {strides = array<i32>} : memref<4x8x27xf32, #tpu.memory_space<vmem>>, vector<4x1x27xf32>,
    %247 = vector.extract_strided_slice %230 {offsets = [16, 0], sizes = [4, 27], strides = [1, 1]} : vector<32x128xf32> to vector<4x27xf32>
    %c0_134 = arith.constant 0 : index
    %c4_135 = arith.constant 4 : index
    %c0_136 = arith.constant 0 : index
    %248 = vector.load %arg10[%c0_134, %c4_135, %c0_136] : memref<4x8x27xf32, #tpu.memory_space<vmem>>, vector<4x1x27xf32>
    %249 = vector.shape_cast %248 : vector<4x1x27xf32> to vector<4x27xf32>
    %250 = vector.shape_cast %247 : vector<4x27xf32> to vector<4x1x27xf32>
    tpu.vector_store %arg10[%c0_134, %c4_135, %c0_136], %250 {strides = array<i32>} : memref<4x8x27xf32, #tpu.memory_space<vmem>>, vector<4x1x27xf32>,
    %251 = vector.extract_strided_slice %230 {offsets = [20, 0], sizes = [4, 27], strides = [1, 1]} : vector<32x128xf32> to vector<4x27xf32>
    %c0_137 = arith.constant 0 : index
    %c5_138 = arith.constant 5 : index
    %c0_139 = arith.constant 0 : index
    %252 = vector.load %arg10[%c0_137, %c5_138, %c0_139] : memref<4x8x27xf32, #tpu.memory_space<vmem>>, vector<4x1x27xf32>
    %253 = vector.shape_cast %252 : vector<4x1x27xf32> to vector<4x27xf32>
    %254 = vector.shape_cast %251 : vector<4x27xf32> to vector<4x1x27xf32>
    tpu.vector_store %arg10[%c0_137, %c5_138, %c0_139], %254 {strides = array<i32>} : memref<4x8x27xf32, #tpu.memory_space<vmem>>, vector<4x1x27xf32>,
    %255 = vector.extract_strided_slice %230 {offsets = [24, 0], sizes = [4, 27], strides = [1, 1]} : vector<32x128xf32> to vector<4x27xf32>
    %c0_140 = arith.constant 0 : index
    %c6_141 = arith.constant 6 : index
    %c0_142 = arith.constant 0 : index
    %256 = vector.load %arg10[%c0_140, %c6_141, %c0_142] : memref<4x8x27xf32, #tpu.memory_space<vmem>>, vector<4x1x27xf32>
    %257 = vector.shape_cast %256 : vector<4x1x27xf32> to vector<4x27xf32>
    %258 = vector.shape_cast %255 : vector<4x27xf32> to vector<4x1x27xf32>
    tpu.vector_store %arg10[%c0_140, %c6_141, %c0_142], %258 {strides = array<i32>} : memref<4x8x27xf32, #tpu.memory_space<vmem>>, vector<4x1x27xf32>,
    %259 = vector.extract_strided_slice %230 {offsets = [28, 0], sizes = [4, 27], strides = [1, 1]} : vector<32x128xf32> to vector<4x27xf32>
    %c0_143 = arith.constant 0 : index
    %c7_144 = arith.constant 7 : index
    %c0_145 = arith.constant 0 : index
    %260 = vector.load %arg10[%c0_143, %c7_144, %c0_145] : memref<4x8x27xf32, #tpu.memory_space<vmem>>, vector<4x1x27xf32>
    %261 = vector.shape_cast %260 : vector<4x1x27xf32> to vector<4x27xf32>
    %262 = vector.shape_cast %259 : vector<4x27xf32> to vector<4x1x27xf32>
    tpu.vector_store %arg10[%c0_143, %c7_144, %c0_145], %262 {strides = array<i32>} : memref<4x8x27xf32, #tpu.memory_space<vmem>>, vector<4x1x27xf32>,
    return
  }
}

</mosaic_0001>

<llo_original>
// kernel: tpu_custom_call.1
$region0: #{tpu_custom_call.1}
  #allocation0 [shape = 'u32[]', space=smem, size = 0x4, offset = 0x4, fixed_abs, tag = 'smem constant byte address 0x4 - core index']
  #allocation1 [shape = 'u32[144,128]{1,0:T(1,128)}', space=vmem, size = 0x12000, scoped, tag = 'internal scratch']
  #allocation2 [shape = 'f32[32,27]{1,0:T(8,128)}', space=vmem, size = 0x4000, scoped, tag = 'scratch operand']
  #allocation3 [shape = 'f32[32,512]{1,0:T(8,128)}', space=vmem, size = 0x10000, scoped, tag = 'scratch operand']
  #allocation4 [shape = 'f32[32,128]{1,0:T(8,128)}', space=vmem, size = 0x4000, scoped, tag = 'scratch operand']
  #allocation5 [shape = 'f32[8,128]{1,0:T(8,128)}', space=vmem, size = 0x1000, scoped, tag = 'scratch operand']
  #allocation6 [shape = 'f32[128,128]{1,0:T(8,128)}', space=vmem, size = 0x10000, scoped, tag = 'scratch operand']
  #allocation7 [shape = 'f32[128,128]{1,0:T(8,128)}', space=vmem, size = 0x10000, scoped, tag = 'scratch operand']
  #allocation8 [shape = 's32[2]{0}', space=sflag, size = 0x8, scoped, tag = 'scratch operand']
  #allocation21 [shape = 's32[]', space=sflag, size = 0x4, offset = 0, fixed_abs, tag = 'sflag constant byte address 0x0 - dummy sync flag']
  #allocation22 [shape = 's32[]', space=sflag, size = 0x4, offset = 0, fixed_abs, tag = 'sflag constant byte address 0x0 - dummy sync flag']
  #allocation23 [shape = 'u32[]', space=smem, size = 0x4, offset = 0x44, fixed_abs, tag = 'smem constant byte address 0x44 - assertion arg 0']
  #allocation24 [shape = 'u32[]', space=smem, size = 0x4, offset = 0x48, fixed_abs, tag = 'smem constant byte address 0x48 - assertion arg 1']
  #allocation25 [shape = 's32[]', space=sflag, size = 0x4, offset = 0, fixed_abs, tag = 'sflag constant byte address 0x0 - dummy sync flag']
  #allocation26 [shape = 's32[]', space=sflag, size = 0x4, offset = 0, fixed_abs, tag = 'sflag constant byte address 0x0 - dummy sync flag']
  %s0 = inlined_call_operand.hbm [shape: f32[4,8,27], index: 0, kind: input, shape index: {}]
  %s1 = inlined_call_operand.hbm [shape: f32[1,4,54], index: 1, kind: input, shape index: {}]
  %s2 = inlined_call_operand.vmem [shape: f32[1,4,54], index: 2, kind: input, shape index: {}]
  %s3 = inlined_call_operand.hbm [shape: f32[27,512], index: 3, kind: input, shape index: {}]
  %s4 = inlined_call_operand.hbm [shape: f32[128,512], index: 4, kind: input, shape index: {}]
  %s5 = inlined_call_operand.vmem [shape: f32[1,512], index: 5, kind: input, shape index: {}]
  %s6 = inlined_call_operand.vmem [shape: f32[1,128], index: 6, kind: input, shape index: {}]
  %s7 = inlined_call_operand.vmem [shape: f32[1,128], index: 7, kind: input, shape index: {}]
  %s8 = inlined_call_operand.hbm [shape: f32[128,128], index: 8, kind: input, shape index: {}]
  %s9 = inlined_call_operand.hbm [shape: f32[128,128], index: 9, kind: input, shape index: {}]
  %s10 = inlined_call_operand.hbm [shape: f32[4,8,27], index: 10, kind: output, shape index: {0}]
  %s11 = inlined_call_operand.hbm [shape: f32[1,4,54], index: 11, kind: output, shape index: {1}]
  %s12 = inlined_call_operand.hbm [shape: f32[1,4,54], index: 12, kind: output, shape index: {2}]
  %13 = xla_tuple %s10, %s11, %s12
  %s14 = sld [smem:[#allocation0]]
  $region82: #{tpu_custom_call.1} parent=0
    _
  %s16 = ssub.s32 1, %s14
  %s17 = scalar_select 0, %s16, %s14
  $region1: #{tpu_custom_call.1} parent=0
    #allocation9 [shape = 'u8[16384]{0}', space=vmem, size = 0x4000, scoped, tag = 'input window, operand 0, single buffered']
    #allocation10 [shape = 's32[1]{0}', space=sflag, size = 0x4, scoped, tag = 'scoped memory for tpu_custom_call.1']
    #allocation11 [shape = 's32[1]{0}', space=sflag, size = 0x4, scoped, tag = 'scoped memory for tpu_custom_call.1']
    #allocation12 [shape = 'u8[2048]{0}', space=vmem, size = 0x800, scoped, tag = 'input window, operand 1, single buffered']
    #allocation13 [shape = 's32[1]{0}', space=sflag, size = 0x4, scoped, tag = 'scoped memory for tpu_custom_call.1']
    #allocation14 [shape = 'u8[65536]{0}', space=vmem, size = 0x10000, scoped, tag = 'input window, operand 3, single buffered']
    #allocation15 [shape = 'u8[262144]{0}', space=vmem, size = 0x40000, scoped, tag = 'input window, operand 4, single buffered']
    #allocation16 [shape = 's32[1]{0}', space=sflag, size = 0x4, scoped, tag = 'scoped memory for tpu_custom_call.1']
    #allocation17 [shape = 'u8[16384]{0}', space=vmem, size = 0x4000, scoped, tag = 'output window, operand 0, single buffered']
    #allocation18 [shape = 'u8[2048]{0}', space=vmem, size = 0x800, scoped, tag = 'output window, operand 1, single buffered']
    #allocation19 [shape = 's32[1]{0}', space=sflag, size = 0x4, scoped, tag = 'scoped memory for tpu_custom_call.1']
    #allocation20 [shape = 'u8[2048]{0}', space=vmem, size = 0x800, scoped, tag = 'output window, operand 2, single buffered']
    %18 = vsyncpa [#allocation10], 0
    %19 = vsyncpa [#allocation13], 0
    %20 = vsyncpa [#allocation16], 0
    %21 = vsyncpa [#allocation11], 0
    %22 = vsyncpa [#allocation19], 0
    // Predicated region
    $region2: #{tpu_custom_call.1} parent=1 // pred_check
      _
    $region3: #{tpu_custom_call.1} parent=1 // pred_check_branch
      %24 = sbr.rel (0) target = $region5
    $region4: #{tpu_custom_call.1} parent=1 // pred_region
      %s26 = ssub.s32 512, 512
      %27 = vsyncadd [#allocation10], %s26
      %s28 = sshll.u32 [#allocation9], 4
      %s29 = int_to_ptr.vmem [resolvable:$true] %s28
      %34 = dma.hbm_to_vmem [thread:$0]  %s0, 512, %s29, [#allocation10], 128, 128, 8
    $region5: #{tpu_custom_call.1} parent=1 // pred_fallthru
      _
    // Predicated region
    $region6: #{tpu_custom_call.1} parent=1 // pred_check
      _
    $region7: #{tpu_custom_call.1} parent=1 // pred_check_branch
      %36 = sbr.rel (0) target = $region9
    $region8: #{tpu_custom_call.1} parent=1 // pred_region
      %s38 = ssub.s32 64, 64
      %39 = vsyncadd [#allocation13], %s38
      %s41 = sshll.u32 [#allocation12], 4
      %s42 = int_to_ptr.vmem [resolvable:$true] %s41
      %44 = dma.hbm_to_vmem [thread:$0]  %s1, 64, %s42, [#allocation13]
    $region9: #{tpu_custom_call.1} parent=1 // pred_fallthru
      _
    // Predicated region
    $region10: #{tpu_custom_call.1} parent=1 // pred_check
      _
    $region11: #{tpu_custom_call.1} parent=1 // pred_check_branch
      %46 = sbr.rel (0) target = $region13
    $region12: #{tpu_custom_call.1} parent=1 // pred_region
      _
    $region13: #{tpu_custom_call.1} parent=1 // pred_fallthru
      _
    // Predicated region
    $region14: #{tpu_custom_call.1} parent=1 // pred_check
      _
    $region15: #{tpu_custom_call.1} parent=1 // pred_check_branch
      %48 = sbr.rel (0) target = $region17
    $region16: #{tpu_custom_call.1} parent=1 // pred_region
      %s50 = ssub.s32 2048, 2048
      %51 = vsyncadd [#allocation13], %s50
      %s52 = sshll.u32 [#allocation14], 4
      %s53 = int_to_ptr.vmem [resolvable:$true] %s52
      %58 = dma.hbm_to_vmem [thread:$0]  %s3, 2048, %s53, [#allocation13], 512, 512, 32
    $region17: #{tpu_custom_call.1} parent=1 // pred_fallthru
      _
    // Predicated region
    $region18: #{tpu_custom_call.1} parent=1 // pred_check
      _
    $region19: #{tpu_custom_call.1} parent=1 // pred_check_branch
      %60 = sbr.rel (0) target = $region21
    $region20: #{tpu_custom_call.1} parent=1 // pred_region
      %s62 = ssub.s32 8192, 8192
      %63 = vsyncadd [#allocation16], %s62
      %s64 = sshll.u32 [#allocation15], 4
      %s65 = int_to_ptr.vmem [resolvable:$true] %s64
      %70 = dma.hbm_to_vmem [thread:$0]  %s4, 8192, %s65, [#allocation16], 512, 512, 32
    $region21: #{tpu_custom_call.1} parent=1 // pred_fallthru
      _
    // Predicated region
    $region22: #{tpu_custom_call.1} parent=1 // pred_check
      _
    $region23: #{tpu_custom_call.1} parent=1 // pred_check_branch
      %72 = sbr.rel (0) target = $region25
    $region24: #{tpu_custom_call.1} parent=1 // pred_region
      _
    $region25: #{tpu_custom_call.1} parent=1 // pred_fallthru
      _
    // Predicated region
    $region26: #{tpu_custom_call.1} parent=1 // pred_check
      _
    $region27: #{tpu_custom_call.1} parent=1 // pred_check_branch
      %74 = sbr.rel (0) target = $region29
    $region28: #{tpu_custom_call.1} parent=1 // pred_region
      _
    $region29: #{tpu_custom_call.1} parent=1 // pred_fallthru
      _
    // Predicated region
    $region30: #{tpu_custom_call.1} parent=1 // pred_check
      _
    $region31: #{tpu_custom_call.1} parent=1 // pred_check_branch
      %76 = sbr.rel (0) target = $region33
    $region32: #{tpu_custom_call.1} parent=1 // pred_region
      _
    $region33: #{tpu_custom_call.1} parent=1 // pred_fallthru
      _
    // Predicated region
    $region34: #{tpu_custom_call.1} parent=1 // pred_check
      _
    $region35: #{tpu_custom_call.1} parent=1 // pred_check_branch
      %78 = sbr.rel (0) target = $region37
    $region36: #{tpu_custom_call.1} parent=1 // pred_region
      %79 = dma.done [#allocation10], 512
    $region37: #{tpu_custom_call.1} parent=1 // pred_fallthru
      _
    // Predicated region
    $region38: #{tpu_custom_call.1} parent=1 // pred_check
      _
    $region39: #{tpu_custom_call.1} parent=1 // pred_check_branch
      %81 = sbr.rel (0) target = $region41
    $region40: #{tpu_custom_call.1} parent=1 // pred_region
      %82 = dma.done [#allocation13], 64
    $region41: #{tpu_custom_call.1} parent=1 // pred_fallthru
      _
    // Predicated region
    $region42: #{tpu_custom_call.1} parent=1 // pred_check
      _
    $region43: #{tpu_custom_call.1} parent=1 // pred_check_branch
      %84 = sbr.rel (0) target = $region45
    $region44: #{tpu_custom_call.1} parent=1 // pred_region
      %85 = dma.done [#allocation13], 2048
    $region45: #{tpu_custom_call.1} parent=1 // pred_fallthru
      _
    // Predicated region
    $region46: #{tpu_custom_call.1} parent=1 // pred_check
      _
    $region47: #{tpu_custom_call.1} parent=1 // pred_check_branch
      %87 = sbr.rel (0) target = $region49
    $region48: #{tpu_custom_call.1} parent=1 // pred_region
      %88 = dma.done [#allocation16], 8192
    $region49: #{tpu_custom_call.1} parent=1 // pred_fallthru
      _
    // Predicated region
    $region50: #{tpu_custom_call.1} parent=1 // pred_check
      _
    $region51: #{tpu_custom_call.1} parent=1 // pred_check_branch
      %90 = sbr.rel target = $region53
    $region52: #{tpu_custom_call.1} parent=1 // pred_region
      %91 = sst [smem:[#allocation23]] [#allocation22]
      %92 = sst [smem:[#allocation24]] [#allocation21]
    $region53: #{tpu_custom_call.1} parent=1 // pred_fallthru
      _
    %94 = shalt.err (0)
    %s96 = sshll.u32 [#allocation6], 4
    %s97 = int_to_ptr.vmem [resolvable:$true] %s96
    %99 = dma.hbm_to_vmem [thread:$0]  %s8, 2048, %s97, [#allocation8]
    %s100 = scalar_lea.sflag [#allocation8], 1
    // Predicated region
    $region54: #{tpu_custom_call.1} parent=1 // pred_check
      _
    $region55: #{tpu_custom_call.1} parent=1 // pred_check_branch
      %102 = sbr.rel target = $region57
    $region56: #{tpu_custom_call.1} parent=1 // pred_region
      %103 = sst [smem:[#allocation23]] [#allocation26]
      %104 = sst [smem:[#allocation24]] [#allocation25]
    $region57: #{tpu_custom_call.1} parent=1 // pred_fallthru
      _
    %106 = shalt.err (0)
    %s108 = sshll.u32 [#allocation7], 4
    %s109 = int_to_ptr.vmem [resolvable:$true] %s108
    %111 = dma.hbm_to_vmem [thread:$0]  %s9, 2048, %s109, %s100
    %v112 = vld [vmem:[#allocation9] sm:$0x1]
    %v113 = vld [vmem:[#allocation9 + $0x8] sm:$0x1]
    %v114 = vld [vmem:[#allocation9 + $0x10] sm:$0x1]
    %v115 = vld [vmem:[#allocation9 + $0x18] sm:$0x1]
    %v120 = vrot.slane %v113, 7
    %vm121 = vcmask 1041409
    %v122 = vsel %vm121, %v120, %v112
    %v123 = vrot.slane %v114, 6
    %vm124 = vcmask 1042434
    %v125 = vsel %vm124, %v123, %v122
    %v126 = vrot.slane %v115, 5
    %vm127 = vcmask 1043459
    %v128 = vsel %vm127, %v126, %v125
    %vm130 = vcmask 216064
    %131 = vst.msk [vmem:[#allocation2] sm:$0xf] %vm130, %v128
    %v132 = vld [vmem:[#allocation9 + $0x1] sm:$0x1]
    %v133 = vld [vmem:[#allocation9 + $0x9] sm:$0x1]
    %v134 = vld [vmem:[#allocation9 + $0x11] sm:$0x1]
    %v135 = vld [vmem:[#allocation9 + $0x19] sm:$0x1]
    %v140 = vrot.slane %v133, 7
    %v141 = vsel %vm121, %v140, %v132
    %v142 = vrot.slane %v134, 6
    %v143 = vsel %vm124, %v142, %v141
    %v144 = vrot.slane %v135, 5
    %v145 = vsel %vm127, %v144, %v143
    %147 = vst.msk [vmem:[#allocation2 + $0x4] sm:$0xf] %vm130, %v145
    %v148 = vld [vmem:[#allocation9 + $0x2] sm:$0x1]
    %v149 = vld [vmem:[#allocation9 + $0xa] sm:$0x1]
    %v150 = vld [vmem:[#allocation9 + $0x12] sm:$0x1]
    %v151 = vld [vmem:[#allocation9 + $0x1a] sm:$0x1]
    %v156 = vrot.slane %v149, 7
    %v157 = vsel %vm121, %v156, %v148
    %v158 = vrot.slane %v150, 6
    %v159 = vsel %vm124, %v158, %v157
    %v160 = vrot.slane %v151, 5
    %v161 = vsel %vm127, %v160, %v159
    %163 = vst.msk [vmem:[#allocation2 + $0x8] sm:$0xf] %vm130, %v161
    %v164 = vld [vmem:[#allocation9 + $0x3] sm:$0x1]
    %v165 = vld [vmem:[#allocation9 + $0xb] sm:$0x1]
    %v166 = vld [vmem:[#allocation9 + $0x13] sm:$0x1]
    %v167 = vld [vmem:[#allocation9 + $0x1b] sm:$0x1]
    %v172 = vrot.slane %v165, 7
    %v173 = vsel %vm121, %v172, %v164
    %v174 = vrot.slane %v166, 6
    %v175 = vsel %vm124, %v174, %v173
    %v176 = vrot.slane %v167, 5
    %v177 = vsel %vm127, %v176, %v175
    %179 = vst.msk [vmem:[#allocation2 + $0xc] sm:$0xf] %vm130, %v177
    %v180 = vld [vmem:[#allocation9 + $0x4] sm:$0x1]
    %v181 = vld [vmem:[#allocation9 + $0xc] sm:$0x1]
    %v182 = vld [vmem:[#allocation9 + $0x14] sm:$0x1]
    %v183 = vld [vmem:[#allocation9 + $0x1c] sm:$0x1]
    %v188 = vrot.slane %v181, 7
    %v189 = vsel %vm121, %v188, %v180
    %v190 = vrot.slane %v182, 6
    %v191 = vsel %vm124, %v190, %v189
    %v192 = vrot.slane %v183, 5
    %v193 = vsel %vm127, %v192, %v191
    %195 = vst.msk [vmem:[#allocation2 + $0x10] sm:$0xf] %vm130, %v193
    %v196 = vld [vmem:[#allocation9 + $0x5] sm:$0x1]
    %v197 = vld [vmem:[#allocation9 + $0xd] sm:$0x1]
    %v198 = vld [vmem:[#allocation9 + $0x15] sm:$0x1]
    %v199 = vld [vmem:[#allocation9 + $0x1d] sm:$0x1]
    %v204 = vrot.slane %v197, 7
    %v205 = vsel %vm121, %v204, %v196
    %v206 = vrot.slane %v198, 6
    %v207 = vsel %vm124, %v206, %v205
    %v208 = vrot.slane %v199, 5
    %v209 = vsel %vm127, %v208, %v207
    %211 = vst.msk [vmem:[#allocation2 + $0x14] sm:$0xf] %vm130, %v209
    %v212 = vld [vmem:[#allocation9 + $0x6] sm:$0x1]
    %v213 = vld [vmem:[#allocation9 + $0xe] sm:$0x1]
    %v214 = vld [vmem:[#allocation9 + $0x16] sm:$0x1]
    %v215 = vld [vmem:[#allocation9 + $0x1e] sm:$0x1]
    %v220 = vrot.slane %v213, 7
    %v221 = vsel %vm121, %v220, %v212
    %v222 = vrot.slane %v214, 6
    %v223 = vsel %vm124, %v222, %v221
    %v224 = vrot.slane %v215, 5
    %v225 = vsel %vm127, %v224, %v223
    %227 = vst.msk [vmem:[#allocation2 + $0x18] sm:$0xf] %vm130, %v225
    %v228 = vld [vmem:[#allocation9 + $0x7] sm:$0x1]
    %v229 = vld [vmem:[#allocation9 + $0xf] sm:$0x1]
    %v230 = vld [vmem:[#allocation9 + $0x17] sm:$0x1]
    %v231 = vld [vmem:[#allocation9 + $0x1f] sm:$0x1]
    %v236 = vrot.slane %v229, 7
    %v237 = vsel %vm121, %v236, %v228
    %v238 = vrot.slane %v230, 6
    %v239 = vsel %vm124, %v238, %v237
    %v240 = vrot.slane %v231, 5
    %v241 = vsel %vm127, %v240, %v239
    %243 = vst.msk [vmem:[#allocation2 + $0x1c] sm:$0xf] %vm130, %v241
    %v244 = vld [vmem:[#allocation2] sm:$0xff]
    %v245 = vld [vmem:[#allocation2 + $0x8] sm:$0xff]
    %v246 = vld [vmem:[#allocation2 + $0x10] sm:$0xff]
    %v247 = vld [vmem:[#allocation2 + $0x18] sm:$0xff]
    %v248 = vld [vmem:[#allocation14] sm:$0xff]
    %v249 = vld [vmem:[#allocation14 + $0x8] sm:$0xff]
    %v250 = vld [vmem:[#allocation14 + $0x10] sm:$0xff]
    %v251 = vld [vmem:[#allocation14 + $0x18] sm:$0xff]
    %v252 = vld [vmem:[#allocation14 + $0x20] sm:$0xff]
    %v253 = vld [vmem:[#allocation14 + $0x28] sm:$0xff]
    %v254 = vld [vmem:[#allocation14 + $0x30] sm:$0xff]
    %v255 = vld [vmem:[#allocation14 + $0x38] sm:$0xff]
    %v256 = vld [vmem:[#allocation14 + $0x40] sm:$0xff]
    %v257 = vld [vmem:[#allocation14 + $0x48] sm:$0xff]
    %v258 = vld [vmem:[#allocation14 + $0x50] sm:$0xff]
    %v259 = vld [vmem:[#allocation14 + $0x58] sm:$0xff]
    %v260 = vld [vmem:[#allocation14 + $0x60] sm:$0x7]
    %v261 = vld [vmem:[#allocation14 + $0x68] sm:$0x7]
    %v262 = vld [vmem:[#allocation14 + $0x70] sm:$0x7]
    %v263 = vld [vmem:[#allocation14 + $0x78] sm:$0x7]
    %v264 = vld [vmem:[%s5] sm:$0xf]
    %v266 = vlaneseq
    %v267 = vshrl.u32 %v266, 7
    %v268 = vsub.s32 0, %v267
    %v269 = vrot.slane %v264, %v268
    %v270 = vlaneseq
    %v271 = vshrl.u32 %v270, 7
    %v272 = vsub.s32 1, %v271
    %v273 = vrot.slane %v264, %v272
    %v274 = vlaneseq
    %v275 = vshrl.u32 %v274, 7
    %v276 = vsub.s32 2, %v275
    %v277 = vrot.slane %v264, %v276
    %v278 = vlaneseq
    %v279 = vshrl.u32 %v278, 7
    %v280 = vsub.s32 3, %v279
    %v281 = vrot.slane %v264, %v280
    %vm286 = vcmask 220160
    %v288 = vsel %vm286, %v244, 0
    %v291 = vsel %vm286, %v245, 0
    %v294 = vsel %vm286, %v246, 0
    %v297 = vsel %vm286, %v247, 0
    %vm299 = vcmask 1042432
    %v301 = vsel %vm299, %v260, 0
    %v304 = vsel %vm299, %v261, 0
    %v307 = vsel %vm299, %v262, 0
    %v310 = vsel %vm299, %v263, 0
    %312 = vmatprep.subr.mxu0 %v249
    %313 = vmatpush1.msra.mxu0 %v248
    %314 = vmatprep.subr.mxu0 %v253
    %315 = vmatpush1.msra.mxu0 %v252
    %316 = vmatprep.subr.mxu0 %v257
    %317 = vmatpush1.msra.mxu0 %v256
    %318 = vmatprep.subr.mxu0 %v304
    %319 = vmatpush1.msra.mxu0 %v301
    %320 = vmatprep.subr.mxu0 0.0
    %321 = vmatpush1.msra.mxu0 0.0
    %322 = vmatprep.subr.mxu0 0.0
    %323 = vmatpush1.msra.mxu0 0.0
    %324 = vmatprep.subr.mxu0 0.0
    %325 = vmatpush1.msra.mxu0 0.0
    %326 = vmatprep.subr.mxu0 0.0
    %327 = vmatpush1.msra.mxu0 0.0
    %328 = vmatprep.subr.mxu0 0.0
    %329 = vmatpush1.msra.mxu0 0.0
    %330 = vmatprep.subr.mxu0 0.0
    %331 = vmatpush1.msra.mxu0 0.0
    %332 = vmatprep.subr.mxu0 0.0
    %333 = vmatpush1.msra.mxu0 0.0
    %334 = vmatprep.subr.mxu0 0.0
    %335 = vmatpush1.msra.mxu0 0.0
    %336 = vmatprep.subr.mxu0 0.0
    %337 = vmatpush1.msra.mxu0 0.0
    %338 = vmatprep.subr.mxu0 0.0
    %339 = vmatpush1.msra.mxu0 0.0
    %340 = vmatprep.subr.mxu0 0.0
    %341 = vmatpush1.msra.mxu0 0.0
    %342 = vmatprep.subr.mxu0 0.0
    %343 = vmatpush1.msra.mxu0 0.0
    %344 = vmatprep.subr.mxu0 0.0
    %345 = vmatpush1.msra.mxu0 0.0
    %346 = vmatprep.subr.mxu0 0.0
    %347 = vmatpush1.msra.mxu0 0.0
    %348 = vmatprep.subr.mxu0 0.0
    %349 = vmatpush1.msra.mxu0 0.0
    %350 = vmatprep.subr.mxu0 0.0
    %351 = vmatpush1.msra.mxu0 0.0
    %352 = vmatprep.subr.mxu0 0.0
    %353 = vmatpush1.msra.mxu0 0.0
    %354 = vmatprep.subr.mxu0 0.0
    %355 = vmatpush1.msra.mxu0 0.0
    %356 = vmatprep.subr.mxu0 0.0
    %357 = vmatpush1.msra.mxu0 0.0
    %358 = vmatprep.subr.mxu0 0.0
    %359 = vmatpush1.msra.mxu0 0.0
    %360 = vmatprep.subr.mxu0 0.0
    %361 = vmatpush1.msra.mxu0 0.0
    %362 = vmatprep.subr.mxu0 0.0
    %363 = vmatpush1.msra.mxu0 0.0
    %364 = vmatprep.subr.mxu0 0.0
    %365 = vmatpush1.msra.mxu0 0.0
    %366 = vmatprep.subr.mxu0 0.0
    %367 = vmatpush1.msra.mxu0 0.0
    %368 = vmatprep.subr.mxu0 0.0
    %369 = vmatpush1.msra.mxu0 0.0
    %370 = vmatprep.subr.mxu0 0.0
    %371 = vmatpush1.msra.mxu0 0.0
    %372 = vmatprep.subr.mxu0 0.0
    %373 = vmatpush1.msra.mxu0 0.0
    %374 = vmatprep.subr.mxu0 0.0
    %375 = vmatpush1.msra.mxu0 0.0
    %376 = vmatprep.mubr.f32.mxu0 0.0
    %377 = vmatmul.mubr.f32.gmra.mrb[0].mxu0 %v288
    %v378 = vpop.f32.mrb[0].mxu0
    %v379 = vadd.f32 %v269, %v378
    %v380 = vpop.f32.mrb[0].mxu0
    %v381 = vadd.f32 %v273, %v380
    %382 = vmatprep.mubr.f32.mxu0 0.0
    %383 = vmatmul.mubr.f32.gmra.mrb[0].mxu0 %v291
    %v384 = vpop.f32.mrb[0].mxu0
    %v385 = vadd.f32 %v269, %v384
    %v386 = vpop.f32.mrb[0].mxu0
    %v387 = vadd.f32 %v273, %v386
    %388 = vmatprep.mubr.f32.mxu0 0.0
    %389 = vmatmul.mubr.f32.gmra.mrb[0].mxu0 %v294
    %v390 = vpop.f32.mrb[0].mxu0
    %v391 = vadd.f32 %v269, %v390
    %v392 = vpop.f32.mrb[0].mxu0
    %v393 = vadd.f32 %v273, %v392
    %394 = vmatprep.mubr.f32.mxu0 0.0
    %395 = vmatmul.mubr.f32.gmra.mrb[0].mxu0 %v297
    %v396 = vpop.f32.mrb[0].mxu0
    %v397 = vadd.f32 %v269, %v396
    %v398 = vpop.f32.mrb[0].mxu0
    %v399 = vadd.f32 %v273, %v398
    %400 = vdwg.mxu0
    %401 = vmatprep.subr.mxu0 %v251
    %402 = vmatpush1.msra.mxu0 %v250
    %403 = vmatprep.subr.mxu0 %v255
    %404 = vmatpush1.msra.mxu0 %v254
    %405 = vmatprep.subr.mxu0 %v259
    %406 = vmatpush1.msra.mxu0 %v258
    %407 = vmatprep.subr.mxu0 %v310
    %408 = vmatpush1.msra.mxu0 %v307
    %409 = vmatprep.subr.mxu0 0.0
    %410 = vmatpush1.msra.mxu0 0.0
    %411 = vmatprep.subr.mxu0 0.0
    %412 = vmatpush1.msra.mxu0 0.0
    %413 = vmatprep.subr.mxu0 0.0
    %414 = vmatpush1.msra.mxu0 0.0
    %415 = vmatprep.subr.mxu0 0.0
    %416 = vmatpush1.msra.mxu0 0.0
    %417 = vmatprep.subr.mxu0 0.0
    %418 = vmatpush1.msra.mxu0 0.0
    %419 = vmatprep.subr.mxu0 0.0
    %420 = vmatpush1.msra.mxu0 0.0
    %421 = vmatprep.subr.mxu0 0.0
    %422 = vmatpush1.msra.mxu0 0.0
    %423 = vmatprep.subr.mxu0 0.0
    %424 = vmatpush1.msra.mxu0 0.0
    %425 = vmatprep.subr.mxu0 0.0
    %426 = vmatpush1.msra.mxu0 0.0
    %427 = vmatprep.subr.mxu0 0.0
    %428 = vmatpush1.msra.mxu0 0.0
    %429 = vmatprep.subr.mxu0 0.0
    %430 = vmatpush1.msra.mxu0 0.0
    %431 = vmatprep.subr.mxu0 0.0
    %432 = vmatpush1.msra.mxu0 0.0
    %433 = vmatprep.subr.mxu0 0.0
    %434 = vmatpush1.msra.mxu0 0.0
    %435 = vmatprep.subr.mxu0 0.0
    %436 = vmatpush1.msra.mxu0 0.0
    %437 = vmatprep.subr.mxu0 0.0
    %438 = vmatpush1.msra.mxu0 0.0
    %439 = vmatprep.subr.mxu0 0.0
    %440 = vmatpush1.msra.mxu0 0.0
    %441 = vmatprep.subr.mxu0 0.0
    %442 = vmatpush1.msra.mxu0 0.0
    %443 = vmatprep.subr.mxu0 0.0
    %444 = vmatpush1.msra.mxu0 0.0
    %445 = vmatprep.subr.mxu0 0.0
    %446 = vmatpush1.msra.mxu0 0.0
    %447 = vmatprep.subr.mxu0 0.0
    %448 = vmatpush1.msra.mxu0 0.0
    %449 = vmatprep.subr.mxu0 0.0
    %450 = vmatpush1.msra.mxu0 0.0
    %451 = vmatprep.subr.mxu0 0.0
    %452 = vmatpush1.msra.mxu0 0.0
    %453 = vmatprep.subr.mxu0 0.0
    %454 = vmatpush1.msra.mxu0 0.0
    %455 = vmatprep.subr.mxu0 0.0
    %456 = vmatpush1.msra.mxu0 0.0
    %457 = vmatprep.subr.mxu0 0.0
    %458 = vmatpush1.msra.mxu0 0.0
    %459 = vmatprep.subr.mxu0 0.0
    %460 = vmatpush1.msra.mxu0 0.0
    %461 = vmatprep.subr.mxu0 0.0
    %462 = vmatpush1.msra.mxu0 0.0
    %463 = vmatprep.subr.mxu0 0.0
    %464 = vmatpush1.msra.mxu0 0.0
    %465 = vmatprep.mubr.f32.mxu0 0.0
    %466 = vmatmul.mubr.f32.gmra.mrb[0].mxu0 %v288
    %v467 = vpop.f32.mrb[0].mxu0
    %v468 = vadd.f32 %v277, %v467
    %v469 = vpop.f32.mrb[0].mxu0
    %v470 = vadd.f32 %v281, %v469
    %471 = vmatprep.mubr.f32.mxu0 0.0
    %472 = vmatmul.mubr.f32.gmra.mrb[0].mxu0 %v291
    %v473 = vpop.f32.mrb[0].mxu0
    %v474 = vadd.f32 %v277, %v473
    %v475 = vpop.f32.mrb[0].mxu0
    %v476 = vadd.f32 %v281, %v475
    %477 = vmatprep.mubr.f32.mxu0 0.0
    %478 = vmatmul.mubr.f32.gmra.mrb[0].mxu0 %v294
    %v479 = vpop.f32.mrb[0].mxu0
    %v480 = vadd.f32 %v277, %v479
    %v481 = vpop.f32.mrb[0].mxu0
    %v482 = vadd.f32 %v281, %v481
    %483 = vmatprep.mubr.f32.mxu0 0.0
    %484 = vmatmul.mubr.f32.gmra.mrb[0].mxu0 %v297
    %v485 = vpop.f32.mrb[0].mxu0
    %v486 = vadd.f32 %v277, %v485
    %v487 = vpop.f32.mrb[0].mxu0
    %v488 = vadd.f32 %v281, %v487
    %489 = vdwg.mxu0
    %490 = vst [vmem:[#allocation3] sm:$0xff] %v379
    %491 = vst [vmem:[#allocation3 + $0x8] sm:$0xff] %v381
    %492 = vst [vmem:[#allocation3 + $0x10] sm:$0xff] %v468
    %493 = vst [vmem:[#allocation3 + $0x18] sm:$0xff] %v470
    %494 = vst [vmem:[#allocation3 + $0x20] sm:$0xff] %v385
    %495 = vst [vmem:[#allocation3 + $0x28] sm:$0xff] %v387
    %496 = vst [vmem:[#allocation3 + $0x30] sm:$0xff] %v474
    %497 = vst [vmem:[#allocation3 + $0x38] sm:$0xff] %v476
    %498 = vst [vmem:[#allocation3 + $0x40] sm:$0xff] %v391
    %499 = vst [vmem:[#allocation3 + $0x48] sm:$0xff] %v393
    %500 = vst [vmem:[#allocation3 + $0x50] sm:$0xff] %v480
    %501 = vst [vmem:[#allocation3 + $0x58] sm:$0xff] %v482
    %502 = vst [vmem:[#allocation3 + $0x60] sm:$0xff] %v397
    %503 = vst [vmem:[#allocation3 + $0x68] sm:$0xff] %v399
    %504 = vst [vmem:[#allocation3 + $0x70] sm:$0xff] %v486
    %505 = vst [vmem:[#allocation3 + $0x78] sm:$0xff] %v488
    %506 = vst [vmem:[#allocation5] sm:$0xff] 0.0
    %v507 = vld [vmem:[#allocation12] sm:$0xf]
    %vm508 = vcmask 437248
    %509 = vst.msk [vmem:[#allocation5] sm:$0xf] %vm508, %v507
    %v510 = vld [vmem:[%s2] sm:$0xf]
    %511 = vst.msk [vmem:[#allocation5 + $0x4] sm:$0xf] %vm508, %v510
    %v512 = vld [vmem:[#allocation5] sm:$0xf]
    %v513 = vld [vmem:[#allocation5 + $0x4] sm:$0xf]
    %v514 = vld [vmem:[#allocation15] sm:$0xff]
    %v515 = vld [vmem:[#allocation15 + $0x8] sm:$0xff]
    %v516 = vld [vmem:[#allocation15 + $0x10] sm:$0xff]
    %v517 = vld [vmem:[#allocation15 + $0x18] sm:$0xff]
    %v518 = vld [vmem:[#allocation15 + $0x20] sm:$0xff]
    %v519 = vld [vmem:[#allocation15 + $0x28] sm:$0xff]
    %v520 = vld [vmem:[#allocation15 + $0x30] sm:$0xff]
    %v521 = vld [vmem:[#allocation15 + $0x38] sm:$0xff]
    %v522 = vld [vmem:[#allocation15 + $0x40] sm:$0xff]
    %v523 = vld [vmem:[#allocation15 + $0x48] sm:$0xff]
    %v524 = vld [vmem:[#allocation15 + $0x50] sm:$0xff]
    %v525 = vld [vmem:[#allocation15 + $0x58] sm:$0xff]
    %v526 = vld [vmem:[#allocation15 + $0x60] sm:$0xff]
    %v527 = vld [vmem:[#allocation15 + $0x68] sm:$0xff]
    %v528 = vld [vmem:[#allocation15 + $0x70] sm:$0xff]
    %v529 = vld [vmem:[#allocation15 + $0x78] sm:$0xff]
    %v530 = vld [vmem:[#allocation15 + $0x80] sm:$0xff]
    %v531 = vld [vmem:[#allocation15 + $0x88] sm:$0xff]
    %v532 = vld [vmem:[#allocation15 + $0x90] sm:$0xff]
    %v533 = vld [vmem:[#allocation15 + $0x98] sm:$0xff]
    %v534 = vld [vmem:[#allocation15 + $0xa0] sm:$0xff]
    %v535 = vld [vmem:[#allocation15 + $0xa8] sm:$0xff]
    %v536 = vld [vmem:[#allocation15 + $0xb0] sm:$0xff]
    %v537 = vld [vmem:[#allocation15 + $0xb8] sm:$0xff]
    %v538 = vld [vmem:[#allocation15 + $0xc0] sm:$0xff]
    %v539 = vld [vmem:[#allocation15 + $0xc8] sm:$0xff]
    %v540 = vld [vmem:[#allocation15 + $0xd0] sm:$0xff]
    %v541 = vld [vmem:[#allocation15 + $0xd8] sm:$0xff]
    %v542 = vld [vmem:[#allocation15 + $0xe0] sm:$0xff]
    %v543 = vld [vmem:[#allocation15 + $0xe8] sm:$0xff]
    %v544 = vld [vmem:[#allocation15 + $0xf0] sm:$0xff]
    %v545 = vld [vmem:[#allocation15 + $0xf8] sm:$0xff]
    %v546 = vld [vmem:[#allocation15 + $0x100] sm:$0xff]
    %v547 = vld [vmem:[#allocation15 + $0x108] sm:$0xff]
    %v548 = vld [vmem:[#allocation15 + $0x110] sm:$0xff]
    %v549 = vld [vmem:[#allocation15 + $0x118] sm:$0xff]
    %v550 = vld [vmem:[#allocation15 + $0x120] sm:$0xff]
    %v551 = vld [vmem:[#allocation15 + $0x128] sm:$0xff]
    %v552 = vld [vmem:[#allocation15 + $0x130] sm:$0xff]
    %v553 = vld [vmem:[#allocation15 + $0x138] sm:$0xff]
    %v554 = vld [vmem:[#allocation15 + $0x140] sm:$0xff]
    %v555 = vld [vmem:[#allocation15 + $0x148] sm:$0xff]
    %v556 = vld [vmem:[#allocation15 + $0x150] sm:$0xff]
    %v557 = vld [vmem:[#allocation15 + $0x158] sm:$0xff]
    %v558 = vld [vmem:[#allocation15 + $0x160] sm:$0xff]
    %v559 = vld [vmem:[#allocation15 + $0x168] sm:$0xff]
    %v560 = vld [vmem:[#allocation15 + $0x170] sm:$0xff]
    %v561 = vld [vmem:[#allocation15 + $0x178] sm:$0xff]
    %v562 = vld [vmem:[#allocation15 + $0x180] sm:$0xff]
    %v563 = vld [vmem:[#allocation15 + $0x188] sm:$0xff]
    %v564 = vld [vmem:[#allocation15 + $0x190] sm:$0xff]
    %v565 = vld [vmem:[#allocation15 + $0x198] sm:$0xff]
    %v566 = vld [vmem:[#allocation15 + $0x1a0] sm:$0xff]
    %v567 = vld [vmem:[#allocation15 + $0x1a8] sm:$0xff]
    %v568 = vld [vmem:[#allocation15 + $0x1b0] sm:$0xff]
    %v569 = vld [vmem:[#allocation15 + $0x1b8] sm:$0xff]
    %v570 = vld [vmem:[#allocation15 + $0x1c0] sm:$0xff]
    %v571 = vld [vmem:[#allocation15 + $0x1c8] sm:$0xff]
    %v572 = vld [vmem:[#allocation15 + $0x1d0] sm:$0xff]
    %v573 = vld [vmem:[#allocation15 + $0x1d8] sm:$0xff]
    %v574 = vld [vmem:[#allocation15 + $0x1e0] sm:$0xff]
    %v575 = vld [vmem:[#allocation15 + $0x1e8] sm:$0xff]
    %v576 = vld [vmem:[#allocation15 + $0x1f0] sm:$0xff]
    %v577 = vld [vmem:[#allocation15 + $0x1f8] sm:$0xff]
    %v578 = vld [vmem:[#allocation3] sm:$0xf]
    %v579 = vld [vmem:[#allocation3 + $0x8] sm:$0xf]
    %v580 = vld [vmem:[#allocation3 + $0x10] sm:$0xf]
    %v581 = vld [vmem:[#allocation3 + $0x18] sm:$0xf]
    %582 = vmatprep.subr.mxu0 %v515
    %583 = vmatpush1.msra.mxu0 %v514
    %584 = vmatprep.subr.mxu0 %v519
    %585 = vmatpush1.msra.mxu0 %v518
    %586 = vmatprep.subr.mxu0 %v523
    %587 = vmatpush1.msra.mxu0 %v522
    %588 = vmatprep.subr.mxu0 %v527
    %589 = vmatpush1.msra.mxu0 %v526
    %590 = vmatprep.subr.mxu0 %v531
    %591 = vmatpush1.msra.mxu0 %v530
    %592 = vmatprep.subr.mxu0 %v535
    %593 = vmatpush1.msra.mxu0 %v534
    %594 = vmatprep.subr.mxu0 %v539
    %595 = vmatpush1.msra.mxu0 %v538
    %596 = vmatprep.subr.mxu0 %v543
    %597 = vmatpush1.msra.mxu0 %v542
    %598 = vmatprep.subr.mxu0 %v547
    %599 = vmatpush1.msra.mxu0 %v546
    %600 = vmatprep.subr.mxu0 %v551
    %601 = vmatpush1.msra.mxu0 %v550
    %602 = vmatprep.subr.mxu0 %v555
    %603 = vmatpush1.msra.mxu0 %v554
    %604 = vmatprep.subr.mxu0 %v559
    %605 = vmatpush1.msra.mxu0 %v558
    %606 = vmatprep.subr.mxu0 %v563
    %607 = vmatpush1.msra.mxu0 %v562
    %608 = vmatprep.subr.mxu0 %v567
    %609 = vmatpush1.msra.mxu0 %v566
    %610 = vmatprep.subr.mxu0 %v571
    %611 = vmatpush1.msra.mxu0 %v570
    %612 = vmatprep.subr.mxu0 %v575
    %613 = vmatpush1.msra.mxu0 %v574
    %614 = vmatprep.subr.mxu0 0.0
    %615 = vmatpush1.msra.mxu0 0.0
    %616 = vmatprep.subr.mxu0 0.0
    %617 = vmatpush1.msra.mxu0 0.0
    %618 = vmatprep.subr.mxu0 0.0
    %619 = vmatpush1.msra.mxu0 0.0
    %620 = vmatprep.subr.mxu0 0.0
    %621 = vmatpush1.msra.mxu0 0.0
    %622 = vmatprep.subr.mxu0 0.0
    %623 = vmatpush1.msra.mxu0 0.0
    %624 = vmatprep.subr.mxu0 0.0
    %625 = vmatpush1.msra.mxu0 0.0
    %626 = vmatprep.subr.mxu0 0.0
    %627 = vmatpush1.msra.mxu0 0.0
    %628 = vmatprep.subr.mxu0 0.0
    %629 = vmatpush1.msra.mxu0 0.0
    %630 = vmatprep.subr.mxu0 0.0
    %631 = vmatpush1.msra.mxu0 0.0
    %632 = vmatprep.subr.mxu0 0.0
    %633 = vmatpush1.msra.mxu0 0.0
    %634 = vmatprep.subr.mxu0 0.0
    %635 = vmatpush1.msra.mxu0 0.0
    %636 = vmatprep.subr.mxu0 0.0
    %637 = vmatpush1.msra.mxu0 0.0
    %638 = vmatprep.subr.mxu0 0.0
    %639 = vmatpush1.msra.mxu0 0.0
    %640 = vmatprep.subr.mxu0 0.0
    %641 = vmatpush1.msra.mxu0 0.0
    %642 = vmatprep.subr.mxu0 0.0
    %643 = vmatpush1.msra.mxu0 0.0
    %644 = vmatprep.subr.mxu0 0.0
    %645 = vmatpush1.msra.mxu0 0.0
    %646 = vmatprep.mubr.f32.mxu0 0.0
    %647 = vmatmul.mubr.f32.gmra.mrb[0].mxu0 %v512
    %v648 = vpop.f32.mrb[0].mxu0
    %v649 = vadd.f32 0.0, %v648
    %v650 = vpop.f32.mrb[0].mxu0
    %v651 = vadd.f32 0.0, %v650
    %652 = vdwg.mxu0
    %653 = vmatprep.subr.mxu0 %v517
    %654 = vmatpush1.msra.mxu0 %v516
    %655 = vmatprep.subr.mxu0 %v521
    %656 = vmatpush1.msra.mxu0 %v520
    %657 = vmatprep.subr.mxu0 %v525
    %658 = vmatpush1.msra.mxu0 %v524
    %659 = vmatprep.subr.mxu0 %v529
    %660 = vmatpush1.msra.mxu0 %v528
    %661 = vmatprep.subr.mxu0 %v533
    %662 = vmatpush1.msra.mxu0 %v532
    %663 = vmatprep.subr.mxu0 %v537
    %664 = vmatpush1.msra.mxu0 %v536
    %665 = vmatprep.subr.mxu0 %v541
    %666 = vmatpush1.msra.mxu0 %v540
    %667 = vmatprep.subr.mxu0 %v545
    %668 = vmatpush1.msra.mxu0 %v544
    %669 = vmatprep.subr.mxu0 %v549
    %670 = vmatpush1.msra.mxu0 %v548
    %671 = vmatprep.subr.mxu0 %v553
    %672 = vmatpush1.msra.mxu0 %v552
    %673 = vmatprep.subr.mxu0 %v557
    %674 = vmatpush1.msra.mxu0 %v556
    %675 = vmatprep.subr.mxu0 %v561
    %676 = vmatpush1.msra.mxu0 %v560
    %677 = vmatprep.subr.mxu0 %v565
    %678 = vmatpush1.msra.mxu0 %v564
    %679 = vmatprep.subr.mxu0 %v569
    %680 = vmatpush1.msra.mxu0 %v568
    %681 = vmatprep.subr.mxu0 %v573
    %682 = vmatpush1.msra.mxu0 %v572
    %683 = vmatprep.subr.mxu0 %v577
    %684 = vmatpush1.msra.mxu0 %v576
    %685 = vmatprep.subr.mxu0 0.0
    %686 = vmatpush1.msra.mxu0 0.0
    %687 = vmatprep.subr.mxu0 0.0
    %688 = vmatpush1.msra.mxu0 0.0
    %689 = vmatprep.subr.mxu0 0.0
    %690 = vmatpush1.msra.mxu0 0.0
    %691 = vmatprep.subr.mxu0 0.0
    %692 = vmatpush1.msra.mxu0 0.0
    %693 = vmatprep.subr.mxu0 0.0
    %694 = vmatpush1.msra.mxu0 0.0
    %695 = vmatprep.subr.mxu0 0.0
    %696 = vmatpush1.msra.mxu0 0.0
    %697 = vmatprep.subr.mxu0 0.0
    %698 = vmatpush1.msra.mxu0 0.0
    %699 = vmatprep.subr.mxu0 0.0
    %700 = vmatpush1.msra.mxu0 0.0
    %701 = vmatprep.subr.mxu0 0.0
    %702 = vmatpush1.msra.mxu0 0.0
    %703 = vmatprep.subr.mxu0 0.0
    %704 = vmatpush1.msra.mxu0 0.0
    %705 = vmatprep.subr.mxu0 0.0
    %706 = vmatpush1.msra.mxu0 0.0
    %707 = vmatprep.subr.mxu0 0.0
    %708 = vmatpush1.msra.mxu0 0.0
    %709 = vmatprep.subr.mxu0 0.0
    %710 = vmatpush1.msra.mxu0 0.0
    %711 = vmatprep.subr.mxu0 0.0
    %712 = vmatpush1.msra.mxu0 0.0
    %713 = vmatprep.subr.mxu0 0.0
    %714 = vmatpush1.msra.mxu0 0.0
    %715 = vmatprep.subr.mxu0 0.0
    %716 = vmatpush1.msra.mxu0 0.0
    %717 = vmatprep.mubr.f32.mxu0 0.0
    %718 = vmatmul.mubr.f32.gmra.mrb[0].mxu0 %v512
    %v719 = vpop.f32.mrb[0].mxu0
    %v720 = vadd.f32 0.0, %v719
    %v721 = vpop.f32.mrb[0].mxu0
    %v722 = vadd.f32 0.0, %v721
    %723 = vdwg.mxu0
    %v724 = vadd.f32 %v578, %v649
    %v725 = vadd.f32 %v579, %v651
    %v726 = vadd.f32 %v580, %v720
    %v727 = vadd.f32 %v581, %v722
    %v728 = vtanh.pop %v724
    %v729 = vxor.u32 %v725, 2147483648
    %v730 = vxor.u32 %v726, 2147483648
    %v731 = vxor.u32 %v727, 2147483648
    %v732 = vmul.f32 %v729, 1.442695
    %v733 = vpow.pop %v732
    %v734 = vmul.f32 %v730, 1.442695
    %v735 = vpow.pop %v734
    %v736 = vmul.f32 %v731, 1.442695
    %v737 = vpow.pop %v736
    %v738 = vadd.f32 %v733, 1.0
    %v739 = vadd.f32 %v735, 1.0
    %v740 = vadd.f32 %v737, 1.0
    %v741 = vrcp.pop %v738
    %v742 = vmul.f32 1.0, %v741
    %v743 = vrcp.pop %v739
    %v744 = vmul.f32 1.0, %v743
    %v745 = vrcp.pop %v740
    %v746 = vmul.f32 1.0, %v745
    %v747 = vmul.f32 %v744, %v513
    %v748 = vmul.f32 %v742, %v728
    %v749 = vadd.f32 %v747, %v748
    %v750 = vtanh.pop %v749
    %v751 = vmul.f32 %v746, %v750
    %752 = vst [vmem:[#allocation4] sm:$0xf] %v751
    %v753 = vld [vmem:[#allocation3] sm:$0xf0]
    %v754 = vld [vmem:[#allocation3 + $0x8] sm:$0xf0]
    %v755 = vld [vmem:[#allocation3 + $0x10] sm:$0xf0]
    %v756 = vld [vmem:[#allocation3 + $0x18] sm:$0xf0]
    %757 = vmatprep.subr.mxu0 %v515
    %758 = vmatpush1.msra.mxu0 %v514
    %759 = vmatprep.subr.mxu0 %v519
    %760 = vmatpush1.msra.mxu0 %v518
    %761 = vmatprep.subr.mxu0 %v523
    %762 = vmatpush1.msra.mxu0 %v522
    %763 = vmatprep.subr.mxu0 %v527
    %764 = vmatpush1.msra.mxu0 %v526
    %765 = vmatprep.subr.mxu0 %v531
    %766 = vmatpush1.msra.mxu0 %v530
    %767 = vmatprep.subr.mxu0 %v535
    %768 = vmatpush1.msra.mxu0 %v534
    %769 = vmatprep.subr.mxu0 %v539
    %770 = vmatpush1.msra.mxu0 %v538
    %771 = vmatprep.subr.mxu0 %v543
    %772 = vmatpush1.msra.mxu0 %v542
    %773 = vmatprep.subr.mxu0 %v547
    %774 = vmatpush1.msra.mxu0 %v546
    %775 = vmatprep.subr.mxu0 %v551
    %776 = vmatpush1.msra.mxu0 %v550
    %777 = vmatprep.subr.mxu0 %v555
    %778 = vmatpush1.msra.mxu0 %v554
    %779 = vmatprep.subr.mxu0 %v559
    %780 = vmatpush1.msra.mxu0 %v558
    %781 = vmatprep.subr.mxu0 %v563
    %782 = vmatpush1.msra.mxu0 %v562
    %783 = vmatprep.subr.mxu0 %v567
    %784 = vmatpush1.msra.mxu0 %v566
    %785 = vmatprep.subr.mxu0 %v571
    %786 = vmatpush1.msra.mxu0 %v570
    %787 = vmatprep.subr.mxu0 %v575
    %788 = vmatpush1.msra.mxu0 %v574
    %789 = vmatprep.subr.mxu0 0.0
    %790 = vmatpush1.msra.mxu0 0.0
    %791 = vmatprep.subr.mxu0 0.0
    %792 = vmatpush1.msra.mxu0 0.0
    %793 = vmatprep.subr.mxu0 0.0
    %794 = vmatpush1.msra.mxu0 0.0
    %795 = vmatprep.subr.mxu0 0.0
    %796 = vmatpush1.msra.mxu0 0.0
    %797 = vmatprep.subr.mxu0 0.0
    %798 = vmatpush1.msra.mxu0 0.0
    %799 = vmatprep.subr.mxu0 0.0
    %800 = vmatpush1.msra.mxu0 0.0
    %801 = vmatprep.subr.mxu0 0.0
    %802 = vmatpush1.msra.mxu0 0.0
    %803 = vmatprep.subr.mxu0 0.0
    %804 = vmatpush1.msra.mxu0 0.0
    %805 = vmatprep.subr.mxu0 0.0
    %806 = vmatpush1.msra.mxu0 0.0
    %807 = vmatprep.subr.mxu0 0.0
    %808 = vmatpush1.msra.mxu0 0.0
    %809 = vmatprep.subr.mxu0 0.0
    %810 = vmatpush1.msra.mxu0 0.0
    %811 = vmatprep.subr.mxu0 0.0
    %812 = vmatpush1.msra.mxu0 0.0
    %813 = vmatprep.subr.mxu0 0.0
    %814 = vmatpush1.msra.mxu0 0.0
    %815 = vmatprep.subr.mxu0 0.0
    %816 = vmatpush1.msra.mxu0 0.0
    %817 = vmatprep.subr.mxu0 0.0
    %818 = vmatpush1.msra.mxu0 0.0
    %819 = vmatprep.subr.mxu0 0.0
    %820 = vmatpush1.msra.mxu0 0.0
    %821 = vmatprep.mubr.f32.mxu0 0.0
    %822 = vmatmul.mubr.f32.gmra.mrb[0].mxu0 %v751
    %v823 = vpop.f32.mrb[0].mxu0
    %v824 = vadd.f32 0.0, %v823
    %v825 = vpop.f32.mrb[0].mxu0
    %v826 = vadd.f32 0.0, %v825
    %827 = vdwg.mxu0
    %828 = vmatprep.subr.mxu0 %v517
    %829 = vmatpush1.msra.mxu0 %v516
    %830 = vmatprep.subr.mxu0 %v521
    %831 = vmatpush1.msra.mxu0 %v520
    %832 = vmatprep.subr.mxu0 %v525
    %833 = vmatpush1.msra.mxu0 %v524
    %834 = vmatprep.subr.mxu0 %v529
    %835 = vmatpush1.msra.mxu0 %v528
    %836 = vmatprep.subr.mxu0 %v533
    %837 = vmatpush1.msra.mxu0 %v532
    %838 = vmatprep.subr.mxu0 %v537
    %839 = vmatpush1.msra.mxu0 %v536
    %840 = vmatprep.subr.mxu0 %v541
    %841 = vmatpush1.msra.mxu0 %v540
    %842 = vmatprep.subr.mxu0 %v545
    %843 = vmatpush1.msra.mxu0 %v544
    %844 = vmatprep.subr.mxu0 %v549
    %845 = vmatpush1.msra.mxu0 %v548
    %846 = vmatprep.subr.mxu0 %v553
    %847 = vmatpush1.msra.mxu0 %v552
    %848 = vmatprep.subr.mxu0 %v557
    %849 = vmatpush1.msra.mxu0 %v556
    %850 = vmatprep.subr.mxu0 %v561
    %851 = vmatpush1.msra.mxu0 %v560
    %852 = vmatprep.subr.mxu0 %v565
    %853 = vmatpush1.msra.mxu0 %v564
    %854 = vmatprep.subr.mxu0 %v569
    %855 = vmatpush1.msra.mxu0 %v568
    %856 = vmatprep.subr.mxu0 %v573
    %857 = vmatpush1.msra.mxu0 %v572
    %858 = vmatprep.subr.mxu0 %v577
    %859 = vmatpush1.msra.mxu0 %v576
    %860 = vmatprep.subr.mxu0 0.0
    %861 = vmatpush1.msra.mxu0 0.0
    %862 = vmatprep.subr.mxu0 0.0
    %863 = vmatpush1.msra.mxu0 0.0
    %864 = vmatprep.subr.mxu0 0.0
    %865 = vmatpush1.msra.mxu0 0.0
    %866 = vmatprep.subr.mxu0 0.0
    %867 = vmatpush1.msra.mxu0 0.0
    %868 = vmatprep.subr.mxu0 0.0
    %869 = vmatpush1.msra.mxu0 0.0
    %870 = vmatprep.subr.mxu0 0.0
    %871 = vmatpush1.msra.mxu0 0.0
    %872 = vmatprep.subr.mxu0 0.0
    %873 = vmatpush1.msra.mxu0 0.0
    %874 = vmatprep.subr.mxu0 0.0
    %875 = vmatpush1.msra.mxu0 0.0
    %876 = vmatprep.subr.mxu0 0.0
    %877 = vmatpush1.msra.mxu0 0.0
    %878 = vmatprep.subr.mxu0 0.0
    %879 = vmatpush1.msra.mxu0 0.0
    %880 = vmatprep.subr.mxu0 0.0
    %881 = vmatpush1.msra.mxu0 0.0
    %882 = vmatprep.subr.mxu0 0.0
    %883 = vmatpush1.msra.mxu0 0.0
    %884 = vmatprep.subr.mxu0 0.0
    %885 = vmatpush1.msra.mxu0 0.0
    %886 = vmatprep.subr.mxu0 0.0
    %887 = vmatpush1.msra.mxu0 0.0
    %888 = vmatprep.subr.mxu0 0.0
    %889 = vmatpush1.msra.mxu0 0.0
    %890 = vmatprep.subr.mxu0 0.0
    %891 = vmatpush1.msra.mxu0 0.0
    %892 = vmatprep.mubr.f32.mxu0 0.0
    %893 = vmatmul.mubr.f32.gmra.mrb[0].mxu0 %v751
    %v894 = vpop.f32.mrb[0].mxu0
    %v895 = vadd.f32 0.0, %v894
    %v896 = vpop.f32.mrb[0].mxu0
    %v897 = vadd.f32 0.0, %v896
    %898 = vdwg.mxu0
    %v903 = vrot.slane %v824, 4
    %v904 = vrot.slane %v826, 4
    %v905 = vrot.slane %v895, 4
    %v906 = vrot.slane %v897, 4
    %v911 = vadd.f32 %v753, %v903
    %v912 = vadd.f32 %v754, %v904
    %v913 = vadd.f32 %v755, %v905
    %v914 = vadd.f32 %v756, %v906
    %v915 = vtanh.pop %v911
    %v916 = vxor.u32 %v912, 2147483648
    %v917 = vxor.u32 %v913, 2147483648
    %v918 = vxor.u32 %v914, 2147483648
    %v919 = vmul.f32 %v916, 1.442695
    %v920 = vpow.pop %v919
    %v921 = vmul.f32 %v917, 1.442695
    %v922 = vpow.pop %v921
    %v923 = vmul.f32 %v918, 1.442695
    %v924 = vpow.pop %v923
    %v925 = vadd.f32 %v920, 1.0
    %v926 = vadd.f32 %v922, 1.0
    %v927 = vadd.f32 %v924, 1.0
    %v928 = vrcp.pop %v925
    %v929 = vmul.f32 1.0, %v928
    %v930 = vrcp.pop %v926
    %v931 = vmul.f32 1.0, %v930
    %v932 = vrcp.pop %v927
    %v933 = vmul.f32 1.0, %v932
    %v935 = vrot.slane %v749, 4
    %v937 = vmul.f32 %v931, %v935
    %v938 = vmul.f32 %v929, %v915
    %v939 = vadd.f32 %v937, %v938
    %v940 = vtanh.pop %v939
    %v941 = vmul.f32 %v933, %v940
    %942 = vst [vmem:[#allocation4] sm:$0xf0] %v941
    %v943 = vld [vmem:[#allocation3 + $0x20] sm:$0xf]
    %v944 = vld [vmem:[#allocation3 + $0x28] sm:$0xf]
    %v945 = vld [vmem:[#allocation3 + $0x30] sm:$0xf]
    %v946 = vld [vmem:[#allocation3 + $0x38] sm:$0xf]
    %v948 = vrot.slane %v941, 4
    %950 = vmatprep.subr.mxu0 %v515
    %951 = vmatpush1.msra.mxu0 %v514
    %952 = vmatprep.subr.mxu0 %v519
    %953 = vmatpush1.msra.mxu0 %v518
    %954 = vmatprep.subr.mxu0 %v523
    %955 = vmatpush1.msra.mxu0 %v522
    %956 = vmatprep.subr.mxu0 %v527
    %957 = vmatpush1.msra.mxu0 %v526
    %958 = vmatprep.subr.mxu0 %v531
    %959 = vmatpush1.msra.mxu0 %v530
    %960 = vmatprep.subr.mxu0 %v535
    %961 = vmatpush1.msra.mxu0 %v534
    %962 = vmatprep.subr.mxu0 %v539
    %963 = vmatpush1.msra.mxu0 %v538
    %964 = vmatprep.subr.mxu0 %v543
    %965 = vmatpush1.msra.mxu0 %v542
    %966 = vmatprep.subr.mxu0 %v547
    %967 = vmatpush1.msra.mxu0 %v546
    %968 = vmatprep.subr.mxu0 %v551
    %969 = vmatpush1.msra.mxu0 %v550
    %970 = vmatprep.subr.mxu0 %v555
    %971 = vmatpush1.msra.mxu0 %v554
    %972 = vmatprep.subr.mxu0 %v559
    %973 = vmatpush1.msra.mxu0 %v558
    %974 = vmatprep.subr.mxu0 %v563
    %975 = vmatpush1.msra.mxu0 %v562
    %976 = vmatprep.subr.mxu0 %v567
    %977 = vmatpush1.msra.mxu0 %v566
    %978 = vmatprep.subr.mxu0 %v571
    %979 = vmatpush1.msra.mxu0 %v570
    %980 = vmatprep.subr.mxu0 %v575
    %981 = vmatpush1.msra.mxu0 %v574
    %982 = vmatprep.subr.mxu0 0.0
    %983 = vmatpush1.msra.mxu0 0.0
    %984 = vmatprep.subr.mxu0 0.0
    %985 = vmatpush1.msra.mxu0 0.0
    %986 = vmatprep.subr.mxu0 0.0
    %987 = vmatpush1.msra.mxu0 0.0
    %988 = vmatprep.subr.mxu0 0.0
    %989 = vmatpush1.msra.mxu0 0.0
    %990 = vmatprep.subr.mxu0 0.0
    %991 = vmatpush1.msra.mxu0 0.0
    %992 = vmatprep.subr.mxu0 0.0
    %993 = vmatpush1.msra.mxu0 0.0
    %994 = vmatprep.subr.mxu0 0.0
    %995 = vmatpush1.msra.mxu0 0.0
    %996 = vmatprep.subr.mxu0 0.0
    %997 = vmatpush1.msra.mxu0 0.0
    %998 = vmatprep.subr.mxu0 0.0
    %999 = vmatpush1.msra.mxu0 0.0
    %1000 = vmatprep.subr.mxu0 0.0
    %1001 = vmatpush1.msra.mxu0 0.0
    %1002 = vmatprep.subr.mxu0 0.0
    %1003 = vmatpush1.msra.mxu0 0.0
    %1004 = vmatprep.subr.mxu0 0.0
    %1005 = vmatpush1.msra.mxu0 0.0
    %1006 = vmatprep.subr.mxu0 0.0
    %1007 = vmatpush1.msra.mxu0 0.0
    %1008 = vmatprep.subr.mxu0 0.0
    %1009 = vmatpush1.msra.mxu0 0.0
    %1010 = vmatprep.subr.mxu0 0.0
    %1011 = vmatpush1.msra.mxu0 0.0
    %1012 = vmatprep.subr.mxu0 0.0
    %1013 = vmatpush1.msra.mxu0 0.0
    %1014 = vmatprep.mubr.f32.mxu0 0.0
    %1015 = vmatmul.mubr.f32.gmra.mrb[0].mxu0 %v948
    %v1016 = vpop.f32.mrb[0].mxu0
    %v1017 = vadd.f32 0.0, %v1016
    %v1018 = vpop.f32.mrb[0].mxu0
    %v1019 = vadd.f32 0.0, %v1018
    %1020 = vdwg.mxu0
    %1021 = vmatprep.subr.mxu0 %v517
    %1022 = vmatpush1.msra.mxu0 %v516
    %1023 = vmatprep.subr.mxu0 %v521
    %1024 = vmatpush1.msra.mxu0 %v520
    %1025 = vmatprep.subr.mxu0 %v525
    %1026 = vmatpush1.msra.mxu0 %v524
    %1027 = vmatprep.subr.mxu0 %v529
    %1028 = vmatpush1.msra.mxu0 %v528
    %1029 = vmatprep.subr.mxu0 %v533
    %1030 = vmatpush1.msra.mxu0 %v532
    %1031 = vmatprep.subr.mxu0 %v537
    %1032 = vmatpush1.msra.mxu0 %v536
    %1033 = vmatprep.subr.mxu0 %v541
    %1034 = vmatpush1.msra.mxu0 %v540
    %1035 = vmatprep.subr.mxu0 %v545
    %1036 = vmatpush1.msra.mxu0 %v544
    %1037 = vmatprep.subr.mxu0 %v549
    %1038 = vmatpush1.msra.mxu0 %v548
    %1039 = vmatprep.subr.mxu0 %v553
    %1040 = vmatpush1.msra.mxu0 %v552
    %1041 = vmatprep.subr.mxu0 %v557
    %1042 = vmatpush1.msra.mxu0 %v556
    %1043 = vmatprep.subr.mxu0 %v561
    %1044 = vmatpush1.msra.mxu0 %v560
    %1045 = vmatprep.subr.mxu0 %v565
    %1046 = vmatpush1.msra.mxu0 %v564
    %1047 = vmatprep.subr.mxu0 %v569
    %1048 = vmatpush1.msra.mxu0 %v568
    %1049 = vmatprep.subr.mxu0 %v573
    %1050 = vmatpush1.msra.mxu0 %v572
    %1051 = vmatprep.subr.mxu0 %v577
    %1052 = vmatpush1.msra.mxu0 %v576
    %1053 = vmatprep.subr.mxu0 0.0
    %1054 = vmatpush1.msra.mxu0 0.0
    %1055 = vmatprep.subr.mxu0 0.0
    %1056 = vmatpush1.msra.mxu0 0.0
    %1057 = vmatprep.subr.mxu0 0.0
    %1058 = vmatpush1.msra.mxu0 0.0
    %1059 = vmatprep.subr.mxu0 0.0
    %1060 = vmatpush1.msra.mxu0 0.0
    %1061 = vmatprep.subr.mxu0 0.0
    %1062 = vmatpush1.msra.mxu0 0.0
    %1063 = vmatprep.subr.mxu0 0.0
    %1064 = vmatpush1.msra.mxu0 0.0
    %1065 = vmatprep.subr.mxu0 0.0
    %1066 = vmatpush1.msra.mxu0 0.0
    %1067 = vmatprep.subr.mxu0 0.0
    %1068 = vmatpush1.msra.mxu0 0.0
    %1069 = vmatprep.subr.mxu0 0.0
    %1070 = vmatpush1.msra.mxu0 0.0
    %1071 = vmatprep.subr.mxu0 0.0
    %1072 = vmatpush1.msra.mxu0 0.0
    %1073 = vmatprep.subr.mxu0 0.0
    %1074 = vmatpush1.msra.mxu0 0.0
    %1075 = vmatprep.subr.mxu0 0.0
    %1076 = vmatpush1.msra.mxu0 0.0
    %1077 = vmatprep.subr.mxu0 0.0
    %1078 = vmatpush1.msra.mxu0 0.0
    %1079 = vmatprep.subr.mxu0 0.0
    %1080 = vmatpush1.msra.mxu0 0.0
    %1081 = vmatprep.subr.mxu0 0.0
    %1082 = vmatpush1.msra.mxu0 0.0
    %1083 = vmatprep.subr.mxu0 0.0
    %1084 = vmatpush1.msra.mxu0 0.0
    %1085 = vmatprep.mubr.f32.mxu0 0.0
    %1086 = vmatmul.mubr.f32.gmra.mrb[0].mxu0 %v948
    %v1087 = vpop.f32.mrb[0].mxu0
    %v1088 = vadd.f32 0.0, %v1087
    %v1089 = vpop.f32.mrb[0].mxu0
    %v1090 = vadd.f32 0.0, %v1089
    %1091 = vdwg.mxu0
    %v1092 = vadd.f32 %v943, %v1017
    %v1093 = vadd.f32 %v944, %v1019
    %v1094 = vadd.f32 %v945, %v1088
    %v1095 = vadd.f32 %v946, %v1090
    %v1096 = vtanh.pop %v1092
    %v1097 = vxor.u32 %v1093, 2147483648
    %v1098 = vxor.u32 %v1094, 2147483648
    %v1099 = vxor.u32 %v1095, 2147483648
    %v1100 = vmul.f32 %v1097, 1.442695
    %v1101 = vpow.pop %v1100
    %v1102 = vmul.f32 %v1098, 1.442695
    %v1103 = vpow.pop %v1102
    %v1104 = vmul.f32 %v1099, 1.442695
    %v1105 = vpow.pop %v1104
    %v1106 = vadd.f32 %v1101, 1.0
    %v1107 = vadd.f32 %v1103, 1.0
    %v1108 = vadd.f32 %v1105, 1.0
    %v1109 = vrcp.pop %v1106
    %v1110 = vmul.f32 1.0, %v1109
    %v1111 = vrcp.pop %v1107
    %v1112 = vmul.f32 1.0, %v1111
    %v1113 = vrcp.pop %v1108
    %v1114 = vmul.f32 1.0, %v1113
    %v1116 = vrot.slane %v939, 4
    %v1118 = vmul.f32 %v1112, %v1116
    %v1119 = vmul.f32 %v1110, %v1096
    %v1120 = vadd.f32 %v1118, %v1119
    %v1121 = vtanh.pop %v1120
    %v1122 = vmul.f32 %v1114, %v1121
    %1123 = vst [vmem:[#allocation4 + $0x8] sm:$0xf] %v1122
    %v1124 = vld [vmem:[#allocation3 + $0x20] sm:$0xf0]
    %v1125 = vld [vmem:[#allocation3 + $0x28] sm:$0xf0]
    %v1126 = vld [vmem:[#allocation3 + $0x30] sm:$0xf0]
    %v1127 = vld [vmem:[#allocation3 + $0x38] sm:$0xf0]
    %1128 = vmatprep.subr.mxu0 %v515
    %1129 = vmatpush1.msra.mxu0 %v514
    %1130 = vmatprep.subr.mxu0 %v519
    %1131 = vmatpush1.msra.mxu0 %v518
    %1132 = vmatprep.subr.mxu0 %v523
    %1133 = vmatpush1.msra.mxu0 %v522
    %1134 = vmatprep.subr.mxu0 %v527
    %1135 = vmatpush1.msra.mxu0 %v526
    %1136 = vmatprep.subr.mxu0 %v531
    %1137 = vmatpush1.msra.mxu0 %v530
    %1138 = vmatprep.subr.mxu0 %v535
    %1139 = vmatpush1.msra.mxu0 %v534
    %1140 = vmatprep.subr.mxu0 %v539
    %1141 = vmatpush1.msra.mxu0 %v538
    %1142 = vmatprep.subr.mxu0 %v543
    %1143 = vmatpush1.msra.mxu0 %v542
    %1144 = vmatprep.subr.mxu0 %v547
    %1145 = vmatpush1.msra.mxu0 %v546
    %1146 = vmatprep.subr.mxu0 %v551
    %1147 = vmatpush1.msra.mxu0 %v550
    %1148 = vmatprep.subr.mxu0 %v555
    %1149 = vmatpush1.msra.mxu0 %v554
    %1150 = vmatprep.subr.mxu0 %v559
    %1151 = vmatpush1.msra.mxu0 %v558
    %1152 = vmatprep.subr.mxu0 %v563
    %1153 = vmatpush1.msra.mxu0 %v562
    %1154 = vmatprep.subr.mxu0 %v567
    %1155 = vmatpush1.msra.mxu0 %v566
    %1156 = vmatprep.subr.mxu0 %v571
    %1157 = vmatpush1.msra.mxu0 %v570
    %1158 = vmatprep.subr.mxu0 %v575
    %1159 = vmatpush1.msra.mxu0 %v574
    %1160 = vmatprep.subr.mxu0 0.0
    %1161 = vmatpush1.msra.mxu0 0.0
    %1162 = vmatprep.subr.mxu0 0.0
    %1163 = vmatpush1.msra.mxu0 0.0
    %1164 = vmatprep.subr.mxu0 0.0
    %1165 = vmatpush1.msra.mxu0 0.0
    %1166 = vmatprep.subr.mxu0 0.0
    %1167 = vmatpush1.msra.mxu0 0.0
    %1168 = vmatprep.subr.mxu0 0.0
    %1169 = vmatpush1.msra.mxu0 0.0
    %1170 = vmatprep.subr.mxu0 0.0
    %1171 = vmatpush1.msra.mxu0 0.0
    %1172 = vmatprep.subr.mxu0 0.0
    %1173 = vmatpush1.msra.mxu0 0.0
    %1174 = vmatprep.subr.mxu0 0.0
    %1175 = vmatpush1.msra.mxu0 0.0
    %1176 = vmatprep.subr.mxu0 0.0
    %1177 = vmatpush1.msra.mxu0 0.0
    %1178 = vmatprep.subr.mxu0 0.0
    %1179 = vmatpush1.msra.mxu0 0.0
    %1180 = vmatprep.subr.mxu0 0.0
    %1181 = vmatpush1.msra.mxu0 0.0
    %1182 = vmatprep.subr.mxu0 0.0
    %1183 = vmatpush1.msra.mxu0 0.0
    %1184 = vmatprep.subr.mxu0 0.0
    %1185 = vmatpush1.msra.mxu0 0.0
    %1186 = vmatprep.subr.mxu0 0.0
    %1187 = vmatpush1.msra.mxu0 0.0
    %1188 = vmatprep.subr.mxu0 0.0
    %1189 = vmatpush1.msra.mxu0 0.0
    %1190 = vmatprep.subr.mxu0 0.0
    %1191 = vmatpush1.msra.mxu0 0.0
    %1192 = vmatprep.mubr.f32.mxu0 0.0
    %1193 = vmatmul.mubr.f32.gmra.mrb[0].mxu0 %v1122
    %v1194 = vpop.f32.mrb[0].mxu0
    %v1195 = vadd.f32 0.0, %v1194
    %v1196 = vpop.f32.mrb[0].mxu0
    %v1197 = vadd.f32 0.0, %v1196
    %1198 = vdwg.mxu0
    %1199 = vmatprep.subr.mxu0 %v517
    %1200 = vmatpush1.msra.mxu0 %v516
    %1201 = vmatprep.subr.mxu0 %v521
    %1202 = vmatpush1.msra.mxu0 %v520
    %1203 = vmatprep.subr.mxu0 %v525
    %1204 = vmatpush1.msra.mxu0 %v524
    %1205 = vmatprep.subr.mxu0 %v529
    %1206 = vmatpush1.msra.mxu0 %v528
    %1207 = vmatprep.subr.mxu0 %v533
    %1208 = vmatpush1.msra.mxu0 %v532
    %1209 = vmatprep.subr.mxu0 %v537
    %1210 = vmatpush1.msra.mxu0 %v536
    %1211 = vmatprep.subr.mxu0 %v541
    %1212 = vmatpush1.msra.mxu0 %v540
    %1213 = vmatprep.subr.mxu0 %v545
    %1214 = vmatpush1.msra.mxu0 %v544
    %1215 = vmatprep.subr.mxu0 %v549
    %1216 = vmatpush1.msra.mxu0 %v548
    %1217 = vmatprep.subr.mxu0 %v553
    %1218 = vmatpush1.msra.mxu0 %v552
    %1219 = vmatprep.subr.mxu0 %v557
    %1220 = vmatpush1.msra.mxu0 %v556
    %1221 = vmatprep.subr.mxu0 %v561
    %1222 = vmatpush1.msra.mxu0 %v560
    %1223 = vmatprep.subr.mxu0 %v565
    %1224 = vmatpush1.msra.mxu0 %v564
    %1225 = vmatprep.subr.mxu0 %v569
    %1226 = vmatpush1.msra.mxu0 %v568
    %1227 = vmatprep.subr.mxu0 %v573
    %1228 = vmatpush1.msra.mxu0 %v572
    %1229 = vmatprep.subr.mxu0 %v577
    %1230 = vmatpush1.msra.mxu0 %v576
    %1231 = vmatprep.subr.mxu0 0.0
    %1232 = vmatpush1.msra.mxu0 0.0
    %1233 = vmatprep.subr.mxu0 0.0
    %1234 = vmatpush1.msra.mxu0 0.0
    %1235 = vmatprep.subr.mxu0 0.0
    %1236 = vmatpush1.msra.mxu0 0.0
    %1237 = vmatprep.subr.mxu0 0.0
    %1238 = vmatpush1.msra.mxu0 0.0
    %1239 = vmatprep.subr.mxu0 0.0
    %1240 = vmatpush1.msra.mxu0 0.0
    %1241 = vmatprep.subr.mxu0 0.0
    %1242 = vmatpush1.msra.mxu0 0.0
    %1243 = vmatprep.subr.mxu0 0.0
    %1244 = vmatpush1.msra.mxu0 0.0
    %1245 = vmatprep.subr.mxu0 0.0
    %1246 = vmatpush1.msra.mxu0 0.0
    %1247 = vmatprep.subr.mxu0 0.0
    %1248 = vmatpush1.msra.mxu0 0.0
    %1249 = vmatprep.subr.mxu0 0.0
    %1250 = vmatpush1.msra.mxu0 0.0
    %1251 = vmatprep.subr.mxu0 0.0
    %1252 = vmatpush1.msra.mxu0 0.0
    %1253 = vmatprep.subr.mxu0 0.0
    %1254 = vmatpush1.msra.mxu0 0.0
    %1255 = vmatprep.subr.mxu0 0.0
    %1256 = vmatpush1.msra.mxu0 0.0
    %1257 = vmatprep.subr.mxu0 0.0
    %1258 = vmatpush1.msra.mxu0 0.0
    %1259 = vmatprep.subr.mxu0 0.0
    %1260 = vmatpush1.msra.mxu0 0.0
    %1261 = vmatprep.subr.mxu0 0.0
    %1262 = vmatpush1.msra.mxu0 0.0
    %1263 = vmatprep.mubr.f32.mxu0 0.0
    %1264 = vmatmul.mubr.f32.gmra.mrb[0].mxu0 %v1122
    %v1265 = vpop.f32.mrb[0].mxu0
    %v1266 = vadd.f32 0.0, %v1265
    %v1267 = vpop.f32.mrb[0].mxu0
    %v1268 = vadd.f32 0.0, %v1267
    %1269 = vdwg.mxu0
    %v1274 = vrot.slane %v1195, 4
    %v1275 = vrot.slane %v1197, 4
    %v1276 = vrot.slane %v1266, 4
    %v1277 = vrot.slane %v1268, 4
    %v1282 = vadd.f32 %v1124, %v1274
    %v1283 = vadd.f32 %v1125, %v1275
    %v1284 = vadd.f32 %v1126, %v1276
    %v1285 = vadd.f32 %v1127, %v1277
    %v1286 = vtanh.pop %v1282
    %v1287 = vxor.u32 %v1283, 2147483648
    %v1288 = vxor.u32 %v1284, 2147483648
    %v1289 = vxor.u32 %v1285, 2147483648
    %v1290 = vmul.f32 %v1287, 1.442695
    %v1291 = vpow.pop %v1290
    %v1292 = vmul.f32 %v1288, 1.442695
    %v1293 = vpow.pop %v1292
    %v1294 = vmul.f32 %v1289, 1.442695
    %v1295 = vpow.pop %v1294
    %v1296 = vadd.f32 %v1291, 1.0
    %v1297 = vadd.f32 %v1293, 1.0
    %v1298 = vadd.f32 %v1295, 1.0
    %v1299 = vrcp.pop %v1296
    %v1300 = vmul.f32 1.0, %v1299
    %v1301 = vrcp.pop %v1297
    %v1302 = vmul.f32 1.0, %v1301
    %v1303 = vrcp.pop %v1298
    %v1304 = vmul.f32 1.0, %v1303
    %v1306 = vrot.slane %v1120, 4
    %v1308 = vmul.f32 %v1302, %v1306
    %v1309 = vmul.f32 %v1300, %v1286
    %v1310 = vadd.f32 %v1308, %v1309
    %v1311 = vtanh.pop %v1310
    %v1312 = vmul.f32 %v1304, %v1311
    %1313 = vst [vmem:[#allocation4 + $0x8] sm:$0xf0] %v1312
    %v1314 = vld [vmem:[#allocation3 + $0x40] sm:$0xf]
    %v1315 = vld [vmem:[#allocation3 + $0x48] sm:$0xf]
    %v1316 = vld [vmem:[#allocation3 + $0x50] sm:$0xf]
    %v1317 = vld [vmem:[#allocation3 + $0x58] sm:$0xf]
    %v1319 = vrot.slane %v1312, 4
    %1321 = vmatprep.subr.mxu0 %v515
    %1322 = vmatpush1.msra.mxu0 %v514
    %1323 = vmatprep.subr.mxu0 %v519
    %1324 = vmatpush1.msra.mxu0 %v518
    %1325 = vmatprep.subr.mxu0 %v523
    %1326 = vmatpush1.msra.mxu0 %v522
    %1327 = vmatprep.subr.mxu0 %v527
    %1328 = vmatpush1.msra.mxu0 %v526
    %1329 = vmatprep.subr.mxu0 %v531
    %1330 = vmatpush1.msra.mxu0 %v530
    %1331 = vmatprep.subr.mxu0 %v535
    %1332 = vmatpush1.msra.mxu0 %v534
    %1333 = vmatprep.subr.mxu0 %v539
    %1334 = vmatpush1.msra.mxu0 %v538
    %1335 = vmatprep.subr.mxu0 %v543
    %1336 = vmatpush1.msra.mxu0 %v542
    %1337 = vmatprep.subr.mxu0 %v547
    %1338 = vmatpush1.msra.mxu0 %v546
    %1339 = vmatprep.subr.mxu0 %v551
    %1340 = vmatpush1.msra.mxu0 %v550
    %1341 = vmatprep.subr.mxu0 %v555
    %1342 = vmatpush1.msra.mxu0 %v554
    %1343 = vmatprep.subr.mxu0 %v559
    %1344 = vmatpush1.msra.mxu0 %v558
    %1345 = vmatprep.subr.mxu0 %v563
    %1346 = vmatpush1.msra.mxu0 %v562
    %1347 = vmatprep.subr.mxu0 %v567
    %1348 = vmatpush1.msra.mxu0 %v566
    %1349 = vmatprep.subr.mxu0 %v571
    %1350 = vmatpush1.msra.mxu0 %v570
    %1351 = vmatprep.subr.mxu0 %v575
    %1352 = vmatpush1.msra.mxu0 %v574
    %1353 = vmatprep.subr.mxu0 0.0
    %1354 = vmatpush1.msra.mxu0 0.0
    %1355 = vmatprep.subr.mxu0 0.0
    %1356 = vmatpush1.msra.mxu0 0.0
    %1357 = vmatprep.subr.mxu0 0.0
    %1358 = vmatpush1.msra.mxu0 0.0
    %1359 = vmatprep.subr.mxu0 0.0
    %1360 = vmatpush1.msra.mxu0 0.0
    %1361 = vmatprep.subr.mxu0 0.0
    %1362 = vmatpush1.msra.mxu0 0.0
    %1363 = vmatprep.subr.mxu0 0.0
    %1364 = vmatpush1.msra.mxu0 0.0
    %1365 = vmatprep.subr.mxu0 0.0
    %1366 = vmatpush1.msra.mxu0 0.0
    %1367 = vmatprep.subr.mxu0 0.0
    %1368 = vmatpush1.msra.mxu0 0.0
    %1369 = vmatprep.subr.mxu0 0.0
    %1370 = vmatpush1.msra.mxu0 0.0
    %1371 = vmatprep.subr.mxu0 0.0
    %1372 = vmatpush1.msra.mxu0 0.0
    %1373 = vmatprep.subr.mxu0 0.0
    %1374 = vmatpush1.msra.mxu0 0.0
    %1375 = vmatprep.subr.mxu0 0.0
    %1376 = vmatpush1.msra.mxu0 0.0
    %1377 = vmatprep.subr.mxu0 0.0
    %1378 = vmatpush1.msra.mxu0 0.0
    %1379 = vmatprep.subr.mxu0 0.0
    %1380 = vmatpush1.msra.mxu0 0.0
    %1381 = vmatprep.subr.mxu0 0.0
    %1382 = vmatpush1.msra.mxu0 0.0
    %1383 = vmatprep.subr.mxu0 0.0
    %1384 = vmatpush1.msra.mxu0 0.0
    %1385 = vmatprep.mubr.f32.mxu0 0.0
    %1386 = vmatmul.mubr.f32.gmra.mrb[0].mxu0 %v1319
    %v1387 = vpop.f32.mrb[0].mxu0
    %v1388 = vadd.f32 0.0, %v1387
    %v1389 = vpop.f32.mrb[0].mxu0
    %v1390 = vadd.f32 0.0, %v1389
    %1391 = vdwg.mxu0
    %1392 = vmatprep.subr.mxu0 %v517
    %1393 = vmatpush1.msra.mxu0 %v516
    %1394 = vmatprep.subr.mxu0 %v521
    %1395 = vmatpush1.msra.mxu0 %v520
    %1396 = vmatprep.subr.mxu0 %v525
    %1397 = vmatpush1.msra.mxu0 %v524
    %1398 = vmatprep.subr.mxu0 %v529
    %1399 = vmatpush1.msra.mxu0 %v528
    %1400 = vmatprep.subr.mxu0 %v533
    %1401 = vmatpush1.msra.mxu0 %v532
    %1402 = vmatprep.subr.mxu0 %v537
    %1403 = vmatpush1.msra.mxu0 %v536
    %1404 = vmatprep.subr.mxu0 %v541
    %1405 = vmatpush1.msra.mxu0 %v540
    %1406 = vmatprep.subr.mxu0 %v545
    %1407 = vmatpush1.msra.mxu0 %v544
    %1408 = vmatprep.subr.mxu0 %v549
    %1409 = vmatpush1.msra.mxu0 %v548
    %1410 = vmatprep.subr.mxu0 %v553
    %1411 = vmatpush1.msra.mxu0 %v552
    %1412 = vmatprep.subr.mxu0 %v557
    %1413 = vmatpush1.msra.mxu0 %v556
    %1414 = vmatprep.subr.mxu0 %v561
    %1415 = vmatpush1.msra.mxu0 %v560
    %1416 = vmatprep.subr.mxu0 %v565
    %1417 = vmatpush1.msra.mxu0 %v564
    %1418 = vmatprep.subr.mxu0 %v569
    %1419 = vmatpush1.msra.mxu0 %v568
    %1420 = vmatprep.subr.mxu0 %v573
    %1421 = vmatpush1.msra.mxu0 %v572
    %1422 = vmatprep.subr.mxu0 %v577
    %1423 = vmatpush1.msra.mxu0 %v576
    %1424 = vmatprep.subr.mxu0 0.0
    %1425 = vmatpush1.msra.mxu0 0.0
    %1426 = vmatprep.subr.mxu0 0.0
    %1427 = vmatpush1.msra.mxu0 0.0
    %1428 = vmatprep.subr.mxu0 0.0
    %1429 = vmatpush1.msra.mxu0 0.0
    %1430 = vmatprep.subr.mxu0 0.0
    %1431 = vmatpush1.msra.mxu0 0.0
    %1432 = vmatprep.subr.mxu0 0.0
    %1433 = vmatpush1.msra.mxu0 0.0
    %1434 = vmatprep.subr.mxu0 0.0
    %1435 = vmatpush1.msra.mxu0 0.0
    %1436 = vmatprep.subr.mxu0 0.0
    %1437 = vmatpush1.msra.mxu0 0.0
    %1438 = vmatprep.subr.mxu0 0.0
    %1439 = vmatpush1.msra.mxu0 0.0
    %1440 = vmatprep.subr.mxu0 0.0
    %1441 = vmatpush1.msra.mxu0 0.0
    %1442 = vmatprep.subr.mxu0 0.0
    %1443 = vmatpush1.msra.mxu0 0.0
    %1444 = vmatprep.subr.mxu0 0.0
    %1445 = vmatpush1.msra.mxu0 0.0
    %1446 = vmatprep.subr.mxu0 0.0
    %1447 = vmatpush1.msra.mxu0 0.0
    %1448 = vmatprep.subr.mxu0 0.0
    %1449 = vmatpush1.msra.mxu0 0.0
    %1450 = vmatprep.subr.mxu0 0.0
    %1451 = vmatpush1.msra.mxu0 0.0
    %1452 = vmatprep.subr.mxu0 0.0
    %1453 = vmatpush1.msra.mxu0 0.0
    %1454 = vmatprep.subr.mxu0 0.0
    %1455 = vmatpush1.msra.mxu0 0.0
    %1456 = vmatprep.mubr.f32.mxu0 0.0
    %1457 = vmatmul.mubr.f32.gmra.mrb[0].mxu0 %v1319
    %v1458 = vpop.f32.mrb[0].mxu0
    %v1459 = vadd.f32 0.0, %v1458
    %v1460 = vpop.f32.mrb[0].mxu0
    %v1461 = vadd.f32 0.0, %v1460
    %1462 = vdwg.mxu0
    %v1463 = vadd.f32 %v1314, %v1388
    %v1464 = vadd.f32 %v1315, %v1390
    %v1465 = vadd.f32 %v1316, %v1459
    %v1466 = vadd.f32 %v1317, %v1461
    %v1467 = vtanh.pop %v1463
    %v1468 = vxor.u32 %v1464, 2147483648
    %v1469 = vxor.u32 %v1465, 2147483648
    %v1470 = vxor.u32 %v1466, 2147483648
    %v1471 = vmul.f32 %v1468, 1.442695
    %v1472 = vpow.pop %v1471
    %v1473 = vmul.f32 %v1469, 1.442695
    %v1474 = vpow.pop %v1473
    %v1475 = vmul.f32 %v1470, 1.442695
    %v1476 = vpow.pop %v1475
    %v1477 = vadd.f32 %v1472, 1.0
    %v1478 = vadd.f32 %v1474, 1.0
    %v1479 = vadd.f32 %v1476, 1.0
    %v1480 = vrcp.pop %v1477
    %v1481 = vmul.f32 1.0, %v1480
    %v1482 = vrcp.pop %v1478
    %v1483 = vmul.f32 1.0, %v1482
    %v1484 = vrcp.pop %v1479
    %v1485 = vmul.f32 1.0, %v1484
    %v1487 = vrot.slane %v1310, 4
    %v1489 = vmul.f32 %v1483, %v1487
    %v1490 = vmul.f32 %v1481, %v1467
    %v1491 = vadd.f32 %v1489, %v1490
    %v1492 = vtanh.pop %v1491
    %v1493 = vmul.f32 %v1485, %v1492
    %1494 = vst [vmem:[#allocation4 + $0x10] sm:$0xf] %v1493
    %v1495 = vld [vmem:[#allocation3 + $0x40] sm:$0xf0]
    %v1496 = vld [vmem:[#allocation3 + $0x48] sm:$0xf0]
    %v1497 = vld [vmem:[#allocation3 + $0x50] sm:$0xf0]
    %v1498 = vld [vmem:[#allocation3 + $0x58] sm:$0xf0]
    %1499 = vmatprep.subr.mxu0 %v515
    %1500 = vmatpush1.msra.mxu0 %v514
    %1501 = vmatprep.subr.mxu0 %v519
    %1502 = vmatpush1.msra.mxu0 %v518
    %1503 = vmatprep.subr.mxu0 %v523
    %1504 = vmatpush1.msra.mxu0 %v522
    %1505 = vmatprep.subr.mxu0 %v527
    %1506 = vmatpush1.msra.mxu0 %v526
    %1507 = vmatprep.subr.mxu0 %v531
    %1508 = vmatpush1.msra.mxu0 %v530
    %1509 = vmatprep.subr.mxu0 %v535
    %1510 = vmatpush1.msra.mxu0 %v534
    %1511 = vmatprep.subr.mxu0 %v539
    %1512 = vmatpush1.msra.mxu0 %v538
    %1513 = vmatprep.subr.mxu0 %v543
    %1514 = vmatpush1.msra.mxu0 %v542
    %1515 = vmatprep.subr.mxu0 %v547
    %1516 = vmatpush1.msra.mxu0 %v546
    %1517 = vmatprep.subr.mxu0 %v551
    %1518 = vmatpush1.msra.mxu0 %v550
    %1519 = vmatprep.subr.mxu0 %v555
    %1520 = vmatpush1.msra.mxu0 %v554
    %1521 = vmatprep.subr.mxu0 %v559
    %1522 = vmatpush1.msra.mxu0 %v558
    %1523 = vmatprep.subr.mxu0 %v563
    %1524 = vmatpush1.msra.mxu0 %v562
    %1525 = vmatprep.subr.mxu0 %v567
    %1526 = vmatpush1.msra.mxu0 %v566
    %1527 = vmatprep.subr.mxu0 %v571
    %1528 = vmatpush1.msra.mxu0 %v570
    %1529 = vmatprep.subr.mxu0 %v575
    %1530 = vmatpush1.msra.mxu0 %v574
    %1531 = vmatprep.subr.mxu0 0.0
    %1532 = vmatpush1.msra.mxu0 0.0
    %1533 = vmatprep.subr.mxu0 0.0
    %1534 = vmatpush1.msra.mxu0 0.0
    %1535 = vmatprep.subr.mxu0 0.0
    %1536 = vmatpush1.msra.mxu0 0.0
    %1537 = vmatprep.subr.mxu0 0.0
    %1538 = vmatpush1.msra.mxu0 0.0
    %1539 = vmatprep.subr.mxu0 0.0
    %1540 = vmatpush1.msra.mxu0 0.0
    %1541 = vmatprep.subr.mxu0 0.0
    %1542 = vmatpush1.msra.mxu0 0.0
    %1543 = vmatprep.subr.mxu0 0.0
    %1544 = vmatpush1.msra.mxu0 0.0
    %1545 = vmatprep.subr.mxu0 0.0
    %1546 = vmatpush1.msra.mxu0 0.0
    %1547 = vmatprep.subr.mxu0 0.0
    %1548 = vmatpush1.msra.mxu0 0.0
    %1549 = vmatprep.subr.mxu0 0.0
    %1550 = vmatpush1.msra.mxu0 0.0
    %1551 = vmatprep.subr.mxu0 0.0
    %1552 = vmatpush1.msra.mxu0 0.0
    %1553 = vmatprep.subr.mxu0 0.0
    %1554 = vmatpush1.msra.mxu0 0.0
    %1555 = vmatprep.subr.mxu0 0.0
    %1556 = vmatpush1.msra.mxu0 0.0
    %1557 = vmatprep.subr.mxu0 0.0
    %1558 = vmatpush1.msra.mxu0 0.0
    %1559 = vmatprep.subr.mxu0 0.0
    %1560 = vmatpush1.msra.mxu0 0.0
    %1561 = vmatprep.subr.mxu0 0.0
    %1562 = vmatpush1.msra.mxu0 0.0
    %1563 = vmatprep.mubr.f32.mxu0 0.0
    %1564 = vmatmul.mubr.f32.gmra.mrb[0].mxu0 %v1493
    %v1565 = vpop.f32.mrb[0].mxu0
    %v1566 = vadd.f32 0.0, %v1565
    %v1567 = vpop.f32.mrb[0].mxu0
    %v1568 = vadd.f32 0.0, %v1567
    %1569 = vdwg.mxu0
    %1570 = vmatprep.subr.mxu0 %v517
    %1571 = vmatpush1.msra.mxu0 %v516
    %1572 = vmatprep.subr.mxu0 %v521
    %1573 = vmatpush1.msra.mxu0 %v520
    %1574 = vmatprep.subr.mxu0 %v525
    %1575 = vmatpush1.msra.mxu0 %v524
    %1576 = vmatprep.subr.mxu0 %v529
    %1577 = vmatpush1.msra.mxu0 %v528
    %1578 = vmatprep.subr.mxu0 %v533
    %1579 = vmatpush1.msra.mxu0 %v532
    %1580 = vmatprep.subr.mxu0 %v537
    %1581 = vmatpush1.msra.mxu0 %v536
    %1582 = vmatprep.subr.mxu0 %v541
    %1583 = vmatpush1.msra.mxu0 %v540
    %1584 = vmatprep.subr.mxu0 %v545
    %1585 = vmatpush1.msra.mxu0 %v544
    %1586 = vmatprep.subr.mxu0 %v549
    %1587 = vmatpush1.msra.mxu0 %v548
    %1588 = vmatprep.subr.mxu0 %v553
    %1589 = vmatpush1.msra.mxu0 %v552
    %1590 = vmatprep.subr.mxu0 %v557
    %1591 = vmatpush1.msra.mxu0 %v556
    %1592 = vmatprep.subr.mxu0 %v561
    %1593 = vmatpush1.msra.mxu0 %v560
    %1594 = vmatprep.subr.mxu0 %v565
    %1595 = vmatpush1.msra.mxu0 %v564
    %1596 = vmatprep.subr.mxu0 %v569
    %1597 = vmatpush1.msra.mxu0 %v568
    %1598 = vmatprep.subr.mxu0 %v573
    %1599 = vmatpush1.msra.mxu0 %v572
    %1600 = vmatprep.subr.mxu0 %v577
    %1601 = vmatpush1.msra.mxu0 %v576
    %1602 = vmatprep.subr.mxu0 0.0
    %1603 = vmatpush1.msra.mxu0 0.0
    %1604 = vmatprep.subr.mxu0 0.0
    %1605 = vmatpush1.msra.mxu0 0.0
    %1606 = vmatprep.subr.mxu0 0.0
    %1607 = vmatpush1.msra.mxu0 0.0
    %1608 = vmatprep.subr.mxu0 0.0
    %1609 = vmatpush1.msra.mxu0 0.0
    %1610 = vmatprep.subr.mxu0 0.0
    %1611 = vmatpush1.msra.mxu0 0.0
    %1612 = vmatprep.subr.mxu0 0.0
    %1613 = vmatpush1.msra.mxu0 0.0
    %1614 = vmatprep.subr.mxu0 0.0
    %1615 = vmatpush1.msra.mxu0 0.0
    %1616 = vmatprep.subr.mxu0 0.0
    %1617 = vmatpush1.msra.mxu0 0.0
    %1618 = vmatprep.subr.mxu0 0.0
    %1619 = vmatpush1.msra.mxu0 0.0
    %1620 = vmatprep.subr.mxu0 0.0
    %1621 = vmatpush1.msra.mxu0 0.0
    %1622 = vmatprep.subr.mxu0 0.0
    %1623 = vmatpush1.msra.mxu0 0.0
    %1624 = vmatprep.subr.mxu0 0.0
    %1625 = vmatpush1.msra.mxu0 0.0
    %1626 = vmatprep.subr.mxu0 0.0
    %1627 = vmatpush1.msra.mxu0 0.0
    %1628 = vmatprep.subr.mxu0 0.0
    %1629 = vmatpush1.msra.mxu0 0.0
    %1630 = vmatprep.subr.mxu0 0.0
    %1631 = vmatpush1.msra.mxu0 0.0
    %1632 = vmatprep.subr.mxu0 0.0
    %1633 = vmatpush1.msra.mxu0 0.0
    %1634 = vmatprep.mubr.f32.mxu0 0.0
    %1635 = vmatmul.mubr.f32.gmra.mrb[0].mxu0 %v1493
    %v1636 = vpop.f32.mrb[0].mxu0
    %v1637 = vadd.f32 0.0, %v1636
    %v1638 = vpop.f32.mrb[0].mxu0
    %v1639 = vadd.f32 0.0, %v1638
    %1640 = vdwg.mxu0
    %v1645 = vrot.slane %v1566, 4
    %v1646 = vrot.slane %v1568, 4
    %v1647 = vrot.slane %v1637, 4
    %v1648 = vrot.slane %v1639, 4
    %v1653 = vadd.f32 %v1495, %v1645
    %v1654 = vadd.f32 %v1496, %v1646
    %v1655 = vadd.f32 %v1497, %v1647
    %v1656 = vadd.f32 %v1498, %v1648
    %v1657 = vtanh.pop %v1653
    %v1658 = vxor.u32 %v1654, 2147483648
    %v1659 = vxor.u32 %v1655, 2147483648
    %v1660 = vxor.u32 %v1656, 2147483648
    %v1661 = vmul.f32 %v1658, 1.442695
    %v1662 = vpow.pop %v1661
    %v1663 = vmul.f32 %v1659, 1.442695
    %v1664 = vpow.pop %v1663
    %v1665 = vmul.f32 %v1660, 1.442695
    %v1666 = vpow.pop %v1665
    %v1667 = vadd.f32 %v1662, 1.0
    %v1668 = vadd.f32 %v1664, 1.0
    %v1669 = vadd.f32 %v1666, 1.0
    %v1670 = vrcp.pop %v1667
    %v1671 = vmul.f32 1.0, %v1670
    %v1672 = vrcp.pop %v1668
    %v1673 = vmul.f32 1.0, %v1672
    %v1674 = vrcp.pop %v1669
    %v1675 = vmul.f32 1.0, %v1674
    %v1677 = vrot.slane %v1491, 4
    %v1679 = vmul.f32 %v1673, %v1677
    %v1680 = vmul.f32 %v1671, %v1657
    %v1681 = vadd.f32 %v1679, %v1680
    %v1682 = vtanh.pop %v1681
    %v1683 = vmul.f32 %v1675, %v1682
    %1684 = vst [vmem:[#allocation4 + $0x10] sm:$0xf0] %v1683
    %v1685 = vld [vmem:[#allocation3 + $0x60] sm:$0xf]
    %v1686 = vld [vmem:[#allocation3 + $0x68] sm:$0xf]
    %v1687 = vld [vmem:[#allocation3 + $0x70] sm:$0xf]
    %v1688 = vld [vmem:[#allocation3 + $0x78] sm:$0xf]
    %v1690 = vrot.slane %v1683, 4
    %1692 = vmatprep.subr.mxu0 %v515
    %1693 = vmatpush1.msra.mxu0 %v514
    %1694 = vmatprep.subr.mxu0 %v519
    %1695 = vmatpush1.msra.mxu0 %v518
    %1696 = vmatprep.subr.mxu0 %v523
    %1697 = vmatpush1.msra.mxu0 %v522
    %1698 = vmatprep.subr.mxu0 %v527
    %1699 = vmatpush1.msra.mxu0 %v526
    %1700 = vmatprep.subr.mxu0 %v531
    %1701 = vmatpush1.msra.mxu0 %v530
    %1702 = vmatprep.subr.mxu0 %v535
    %1703 = vmatpush1.msra.mxu0 %v534
    %1704 = vmatprep.subr.mxu0 %v539
    %1705 = vmatpush1.msra.mxu0 %v538
    %1706 = vmatprep.subr.mxu0 %v543
    %1707 = vmatpush1.msra.mxu0 %v542
    %1708 = vmatprep.subr.mxu0 %v547
    %1709 = vmatpush1.msra.mxu0 %v546
    %1710 = vmatprep.subr.mxu0 %v551
    %1711 = vmatpush1.msra.mxu0 %v550
    %1712 = vmatprep.subr.mxu0 %v555
    %1713 = vmatpush1.msra.mxu0 %v554
    %1714 = vmatprep.subr.mxu0 %v559
    %1715 = vmatpush1.msra.mxu0 %v558
    %1716 = vmatprep.subr.mxu0 %v563
    %1717 = vmatpush1.msra.mxu0 %v562
    %1718 = vmatprep.subr.mxu0 %v567
    %1719 = vmatpush1.msra.mxu0 %v566
    %1720 = vmatprep.subr.mxu0 %v571
    %1721 = vmatpush1.msra.mxu0 %v570
    %1722 = vmatprep.subr.mxu0 %v575
    %1723 = vmatpush1.msra.mxu0 %v574
    %1724 = vmatprep.subr.mxu0 0.0
    %1725 = vmatpush1.msra.mxu0 0.0
    %1726 = vmatprep.subr.mxu0 0.0
    %1727 = vmatpush1.msra.mxu0 0.0
    %1728 = vmatprep.subr.mxu0 0.0
    %1729 = vmatpush1.msra.mxu0 0.0
    %1730 = vmatprep.subr.mxu0 0.0
    %1731 = vmatpush1.msra.mxu0 0.0
    %1732 = vmatprep.subr.mxu0 0.0
    %1733 = vmatpush1.msra.mxu0 0.0
    %1734 = vmatprep.subr.mxu0 0.0
    %1735 = vmatpush1.msra.mxu0 0.0
    %1736 = vmatprep.subr.mxu0 0.0
    %1737 = vmatpush1.msra.mxu0 0.0
    %1738 = vmatprep.subr.mxu0 0.0
    %1739 = vmatpush1.msra.mxu0 0.0
    %1740 = vmatprep.subr.mxu0 0.0
    %1741 = vmatpush1.msra.mxu0 0.0
    %1742 = vmatprep.subr.mxu0 0.0
    %1743 = vmatpush1.msra.mxu0 0.0
    %1744 = vmatprep.subr.mxu0 0.0
    %1745 = vmatpush1.msra.mxu0 0.0
    %1746 = vmatprep.subr.mxu0 0.0
    %1747 = vmatpush1.msra.mxu0 0.0
    %1748 = vmatprep.subr.mxu0 0.0
    %1749 = vmatpush1.msra.mxu0 0.0
    %1750 = vmatprep.subr.mxu0 0.0
    %1751 = vmatpush1.msra.mxu0 0.0
    %1752 = vmatprep.subr.mxu0 0.0
    %1753 = vmatpush1.msra.mxu0 0.0
    %1754 = vmatprep.subr.mxu0 0.0
    %1755 = vmatpush1.msra.mxu0 0.0
    %1756 = vmatprep.mubr.f32.mxu0 0.0
    %1757 = vmatmul.mubr.f32.gmra.mrb[0].mxu0 %v1690
    %v1758 = vpop.f32.mrb[0].mxu0
    %v1759 = vadd.f32 0.0, %v1758
    %v1760 = vpop.f32.mrb[0].mxu0
    %v1761 = vadd.f32 0.0, %v1760
    %1762 = vdwg.mxu0
    %1763 = vmatprep.subr.mxu0 %v517
    %1764 = vmatpush1.msra.mxu0 %v516
    %1765 = vmatprep.subr.mxu0 %v521
    %1766 = vmatpush1.msra.mxu0 %v520
    %1767 = vmatprep.subr.mxu0 %v525
    %1768 = vmatpush1.msra.mxu0 %v524
    %1769 = vmatprep.subr.mxu0 %v529
    %1770 = vmatpush1.msra.mxu0 %v528
    %1771 = vmatprep.subr.mxu0 %v533
    %1772 = vmatpush1.msra.mxu0 %v532
    %1773 = vmatprep.subr.mxu0 %v537
    %1774 = vmatpush1.msra.mxu0 %v536
    %1775 = vmatprep.subr.mxu0 %v541
    %1776 = vmatpush1.msra.mxu0 %v540
    %1777 = vmatprep.subr.mxu0 %v545
    %1778 = vmatpush1.msra.mxu0 %v544
    %1779 = vmatprep.subr.mxu0 %v549
    %1780 = vmatpush1.msra.mxu0 %v548
    %1781 = vmatprep.subr.mxu0 %v553
    %1782 = vmatpush1.msra.mxu0 %v552
    %1783 = vmatprep.subr.mxu0 %v557
    %1784 = vmatpush1.msra.mxu0 %v556
    %1785 = vmatprep.subr.mxu0 %v561
    %1786 = vmatpush1.msra.mxu0 %v560
    %1787 = vmatprep.subr.mxu0 %v565
    %1788 = vmatpush1.msra.mxu0 %v564
    %1789 = vmatprep.subr.mxu0 %v569
    %1790 = vmatpush1.msra.mxu0 %v568
    %1791 = vmatprep.subr.mxu0 %v573
    %1792 = vmatpush1.msra.mxu0 %v572
    %1793 = vmatprep.subr.mxu0 %v577
    %1794 = vmatpush1.msra.mxu0 %v576
    %1795 = vmatprep.subr.mxu0 0.0
    %1796 = vmatpush1.msra.mxu0 0.0
    %1797 = vmatprep.subr.mxu0 0.0
    %1798 = vmatpush1.msra.mxu0 0.0
    %1799 = vmatprep.subr.mxu0 0.0
    %1800 = vmatpush1.msra.mxu0 0.0
    %1801 = vmatprep.subr.mxu0 0.0
    %1802 = vmatpush1.msra.mxu0 0.0
    %1803 = vmatprep.subr.mxu0 0.0
    %1804 = vmatpush1.msra.mxu0 0.0
    %1805 = vmatprep.subr.mxu0 0.0
    %1806 = vmatpush1.msra.mxu0 0.0
    %1807 = vmatprep.subr.mxu0 0.0
    %1808 = vmatpush1.msra.mxu0 0.0
    %1809 = vmatprep.subr.mxu0 0.0
    %1810 = vmatpush1.msra.mxu0 0.0
    %1811 = vmatprep.subr.mxu0 0.0
    %1812 = vmatpush1.msra.mxu0 0.0
    %1813 = vmatprep.subr.mxu0 0.0
    %1814 = vmatpush1.msra.mxu0 0.0
    %1815 = vmatprep.subr.mxu0 0.0
    %1816 = vmatpush1.msra.mxu0 0.0
    %1817 = vmatprep.subr.mxu0 0.0
    %1818 = vmatpush1.msra.mxu0 0.0
    %1819 = vmatprep.subr.mxu0 0.0
    %1820 = vmatpush1.msra.mxu0 0.0
    %1821 = vmatprep.subr.mxu0 0.0
    %1822 = vmatpush1.msra.mxu0 0.0
    %1823 = vmatprep.subr.mxu0 0.0
    %1824 = vmatpush1.msra.mxu0 0.0
    %1825 = vmatprep.subr.mxu0 0.0
    %1826 = vmatpush1.msra.mxu0 0.0
    %1827 = vmatprep.mubr.f32.mxu0 0.0
    %1828 = vmatmul.mubr.f32.gmra.mrb[0].mxu0 %v1690
    %v1829 = vpop.f32.mrb[0].mxu0
    %v1830 = vadd.f32 0.0, %v1829
    %v1831 = vpop.f32.mrb[0].mxu0
    %v1832 = vadd.f32 0.0, %v1831
    %1833 = vdwg.mxu0
    %v1834 = vadd.f32 %v1685, %v1759
    %v1835 = vadd.f32 %v1686, %v1761
    %v1836 = vadd.f32 %v1687, %v1830
    %v1837 = vadd.f32 %v1688, %v1832
    %v1838 = vtanh.pop %v1834
    %v1839 = vxor.u32 %v1835, 2147483648
    %v1840 = vxor.u32 %v1836, 2147483648
    %v1841 = vxor.u32 %v1837, 2147483648
    %v1842 = vmul.f32 %v1839, 1.442695
    %v1843 = vpow.pop %v1842
    %v1844 = vmul.f32 %v1840, 1.442695
    %v1845 = vpow.pop %v1844
    %v1846 = vmul.f32 %v1841, 1.442695
    %v1847 = vpow.pop %v1846
    %v1848 = vadd.f32 %v1843, 1.0
    %v1849 = vadd.f32 %v1845, 1.0
    %v1850 = vadd.f32 %v1847, 1.0
    %v1851 = vrcp.pop %v1848
    %v1852 = vmul.f32 1.0, %v1851
    %v1853 = vrcp.pop %v1849
    %v1854 = vmul.f32 1.0, %v1853
    %v1855 = vrcp.pop %v1850
    %v1856 = vmul.f32 1.0, %v1855
    %v1858 = vrot.slane %v1681, 4
    %v1860 = vmul.f32 %v1854, %v1858
    %v1861 = vmul.f32 %v1852, %v1838
    %v1862 = vadd.f32 %v1860, %v1861
    %v1863 = vtanh.pop %v1862
    %v1864 = vmul.f32 %v1856, %v1863
    %1865 = vst [vmem:[#allocation4 + $0x18] sm:$0xf] %v1864
    %v1866 = vld [vmem:[#allocation3 + $0x60] sm:$0xf0]
    %v1867 = vld [vmem:[#allocation3 + $0x68] sm:$0xf0]
    %v1868 = vld [vmem:[#allocation3 + $0x70] sm:$0xf0]
    %v1869 = vld [vmem:[#allocation3 + $0x78] sm:$0xf0]
    %1870 = vmatprep.subr.mxu0 %v515
    %1871 = vmatpush1.msra.mxu0 %v514
    %1872 = vmatprep.subr.mxu0 %v519
    %1873 = vmatpush1.msra.mxu0 %v518
    %1874 = vmatprep.subr.mxu0 %v523
    %1875 = vmatpush1.msra.mxu0 %v522
    %1876 = vmatprep.subr.mxu0 %v527
    %1877 = vmatpush1.msra.mxu0 %v526
    %1878 = vmatprep.subr.mxu0 %v531
    %1879 = vmatpush1.msra.mxu0 %v530
    %1880 = vmatprep.subr.mxu0 %v535
    %1881 = vmatpush1.msra.mxu0 %v534
    %1882 = vmatprep.subr.mxu0 %v539
    %1883 = vmatpush1.msra.mxu0 %v538
    %1884 = vmatprep.subr.mxu0 %v543
    %1885 = vmatpush1.msra.mxu0 %v542
    %1886 = vmatprep.subr.mxu0 %v547
    %1887 = vmatpush1.msra.mxu0 %v546
    %1888 = vmatprep.subr.mxu0 %v551
    %1889 = vmatpush1.msra.mxu0 %v550
    %1890 = vmatprep.subr.mxu0 %v555
    %1891 = vmatpush1.msra.mxu0 %v554
    %1892 = vmatprep.subr.mxu0 %v559
    %1893 = vmatpush1.msra.mxu0 %v558
    %1894 = vmatprep.subr.mxu0 %v563
    %1895 = vmatpush1.msra.mxu0 %v562
    %1896 = vmatprep.subr.mxu0 %v567
    %1897 = vmatpush1.msra.mxu0 %v566
    %1898 = vmatprep.subr.mxu0 %v571
    %1899 = vmatpush1.msra.mxu0 %v570
    %1900 = vmatprep.subr.mxu0 %v575
    %1901 = vmatpush1.msra.mxu0 %v574
    %1902 = vmatprep.subr.mxu0 0.0
    %1903 = vmatpush1.msra.mxu0 0.0
    %1904 = vmatprep.subr.mxu0 0.0
    %1905 = vmatpush1.msra.mxu0 0.0
    %1906 = vmatprep.subr.mxu0 0.0
    %1907 = vmatpush1.msra.mxu0 0.0
    %1908 = vmatprep.subr.mxu0 0.0
    %1909 = vmatpush1.msra.mxu0 0.0
    %1910 = vmatprep.subr.mxu0 0.0
    %1911 = vmatpush1.msra.mxu0 0.0
    %1912 = vmatprep.subr.mxu0 0.0
    %1913 = vmatpush1.msra.mxu0 0.0
    %1914 = vmatprep.subr.mxu0 0.0
    %1915 = vmatpush1.msra.mxu0 0.0
    %1916 = vmatprep.subr.mxu0 0.0
    %1917 = vmatpush1.msra.mxu0 0.0
    %1918 = vmatprep.subr.mxu0 0.0
    %1919 = vmatpush1.msra.mxu0 0.0
    %1920 = vmatprep.subr.mxu0 0.0
    %1921 = vmatpush1.msra.mxu0 0.0
    %1922 = vmatprep.subr.mxu0 0.0
    %1923 = vmatpush1.msra.mxu0 0.0
    %1924 = vmatprep.subr.mxu0 0.0
    %1925 = vmatpush1.msra.mxu0 0.0
    %1926 = vmatprep.subr.mxu0 0.0
    %1927 = vmatpush1.msra.mxu0 0.0
    %1928 = vmatprep.subr.mxu0 0.0
    %1929 = vmatpush1.msra.mxu0 0.0
    %1930 = vmatprep.subr.mxu0 0.0
    %1931 = vmatpush1.msra.mxu0 0.0
    %1932 = vmatprep.subr.mxu0 0.0
    %1933 = vmatpush1.msra.mxu0 0.0
    %1934 = vmatprep.mubr.f32.mxu0 0.0
    %1935 = vmatmul.mubr.f32.gmra.mrb[0].mxu0 %v1864
    %v1936 = vpop.f32.mrb[0].mxu0
    %v1937 = vadd.f32 0.0, %v1936
    %v1938 = vpop.f32.mrb[0].mxu0
    %v1939 = vadd.f32 0.0, %v1938
    %1940 = vdwg.mxu0
    %1941 = vmatprep.subr.mxu0 %v517
    %1942 = vmatpush1.msra.mxu0 %v516
    %1943 = vmatprep.subr.mxu0 %v521
    %1944 = vmatpush1.msra.mxu0 %v520
    %1945 = vmatprep.subr.mxu0 %v525
    %1946 = vmatpush1.msra.mxu0 %v524
    %1947 = vmatprep.subr.mxu0 %v529
    %1948 = vmatpush1.msra.mxu0 %v528
    %1949 = vmatprep.subr.mxu0 %v533
    %1950 = vmatpush1.msra.mxu0 %v532
    %1951 = vmatprep.subr.mxu0 %v537
    %1952 = vmatpush1.msra.mxu0 %v536
    %1953 = vmatprep.subr.mxu0 %v541
    %1954 = vmatpush1.msra.mxu0 %v540
    %1955 = vmatprep.subr.mxu0 %v545
    %1956 = vmatpush1.msra.mxu0 %v544
    %1957 = vmatprep.subr.mxu0 %v549
    %1958 = vmatpush1.msra.mxu0 %v548
    %1959 = vmatprep.subr.mxu0 %v553
    %1960 = vmatpush1.msra.mxu0 %v552
    %1961 = vmatprep.subr.mxu0 %v557
    %1962 = vmatpush1.msra.mxu0 %v556
    %1963 = vmatprep.subr.mxu0 %v561
    %1964 = vmatpush1.msra.mxu0 %v560
    %1965 = vmatprep.subr.mxu0 %v565
    %1966 = vmatpush1.msra.mxu0 %v564
    %1967 = vmatprep.subr.mxu0 %v569
    %1968 = vmatpush1.msra.mxu0 %v568
    %1969 = vmatprep.subr.mxu0 %v573
    %1970 = vmatpush1.msra.mxu0 %v572
    %1971 = vmatprep.subr.mxu0 %v577
    %1972 = vmatpush1.msra.mxu0 %v576
    %1973 = vmatprep.subr.mxu0 0.0
    %1974 = vmatpush1.msra.mxu0 0.0
    %1975 = vmatprep.subr.mxu0 0.0
    %1976 = vmatpush1.msra.mxu0 0.0
    %1977 = vmatprep.subr.mxu0 0.0
    %1978 = vmatpush1.msra.mxu0 0.0
    %1979 = vmatprep.subr.mxu0 0.0
    %1980 = vmatpush1.msra.mxu0 0.0
    %1981 = vmatprep.subr.mxu0 0.0
    %1982 = vmatpush1.msra.mxu0 0.0
    %1983 = vmatprep.subr.mxu0 0.0
    %1984 = vmatpush1.msra.mxu0 0.0
    %1985 = vmatprep.subr.mxu0 0.0
    %1986 = vmatpush1.msra.mxu0 0.0
    %1987 = vmatprep.subr.mxu0 0.0
    %1988 = vmatpush1.msra.mxu0 0.0
    %1989 = vmatprep.subr.mxu0 0.0
    %1990 = vmatpush1.msra.mxu0 0.0
    %1991 = vmatprep.subr.mxu0 0.0
    %1992 = vmatpush1.msra.mxu0 0.0
    %1993 = vmatprep.subr.mxu0 0.0
    %1994 = vmatpush1.msra.mxu0 0.0
    %1995 = vmatprep.subr.mxu0 0.0
    %1996 = vmatpush1.msra.mxu0 0.0
    %1997 = vmatprep.subr.mxu0 0.0
    %1998 = vmatpush1.msra.mxu0 0.0
    %1999 = vmatprep.subr.mxu0 0.0
    %2000 = vmatpush1.msra.mxu0 0.0
    %2001 = vmatprep.subr.mxu0 0.0
    %2002 = vmatpush1.msra.mxu0 0.0
    %2003 = vmatprep.subr.mxu0 0.0
    %2004 = vmatpush1.msra.mxu0 0.0
    %2005 = vmatprep.mubr.f32.mxu0 0.0
    %2006 = vmatmul.mubr.f32.gmra.mrb[0].mxu0 %v1864
    %v2007 = vpop.f32.mrb[0].mxu0
    %v2008 = vadd.f32 0.0, %v2007
    %v2009 = vpop.f32.mrb[0].mxu0
    %v2010 = vadd.f32 0.0, %v2009
    %2011 = vdwg.mxu0
    %v2016 = vrot.slane %v1937, 4
    %v2017 = vrot.slane %v1939, 4
    %v2018 = vrot.slane %v2008, 4
    %v2019 = vrot.slane %v2010, 4
    %v2024 = vadd.f32 %v1866, %v2016
    %v2025 = vadd.f32 %v1867, %v2017
    %v2026 = vadd.f32 %v1868, %v2018
    %v2027 = vadd.f32 %v1869, %v2019
    %v2028 = vtanh.pop %v2024
    %v2029 = vxor.u32 %v2025, 2147483648
    %v2030 = vxor.u32 %v2026, 2147483648
    %v2031 = vxor.u32 %v2027, 2147483648
    %v2032 = vmul.f32 %v2029, 1.442695
    %v2033 = vpow.pop %v2032
    %v2034 = vmul.f32 %v2030, 1.442695
    %v2035 = vpow.pop %v2034
    %v2036 = vmul.f32 %v2031, 1.442695
    %v2037 = vpow.pop %v2036
    %v2038 = vadd.f32 %v2033, 1.0
    %v2039 = vadd.f32 %v2035, 1.0
    %v2040 = vadd.f32 %v2037, 1.0
    %v2041 = vrcp.pop %v2038
    %v2042 = vmul.f32 1.0, %v2041
    %v2043 = vrcp.pop %v2039
    %v2044 = vmul.f32 1.0, %v2043
    %v2045 = vrcp.pop %v2040
    %v2046 = vmul.f32 1.0, %v2045
    %v2048 = vrot.slane %v1862, 4
    %v2050 = vmul.f32 %v2044, %v2048
    %v2051 = vmul.f32 %v2042, %v2028
    %v2052 = vadd.f32 %v2050, %v2051
    %v2053 = vtanh.pop %v2052
    %v2054 = vmul.f32 %v2046, %v2053
    %2055 = vst [vmem:[#allocation4 + $0x18] sm:$0xf0] %v2054
    %vm2056 = vcmask 441348
    %2057 = vst.msk [vmem:[#allocation18 - $0x4] sm:$0xf0] %vm2056, %v2054
    %2058 = vst.msk [vmem:[#allocation20 - $0x4] sm:$0xf0] %vm2056, %v2052
    %s2059 = smul.u32 128, 1
    %s2060 = sshll.u32 %s2059, 4
    %2061 = dma.done [#allocation8], %s2060
    %v2062 = vld [vmem:[#allocation4] sm:$0xff]
    %v2063 = vld [vmem:[#allocation4 + $0x8] sm:$0xff]
    %v2064 = vld [vmem:[#allocation4 + $0x10] sm:$0xff]
    %v2065 = vld [vmem:[#allocation4 + $0x18] sm:$0xff]
    %v2066 = vld [vmem:[#allocation6] sm:$0xff]
    %v2067 = vld [vmem:[#allocation6 + $0x8] sm:$0xff]
    %v2068 = vld [vmem:[#allocation6 + $0x10] sm:$0xff]
    %v2069 = vld [vmem:[#allocation6 + $0x18] sm:$0xff]
    %v2070 = vld [vmem:[#allocation6 + $0x20] sm:$0xff]
    %v2071 = vld [vmem:[#allocation6 + $0x28] sm:$0xff]
    %v2072 = vld [vmem:[#allocation6 + $0x30] sm:$0xff]
    %v2073 = vld [vmem:[#allocation6 + $0x38] sm:$0xff]
    %v2074 = vld [vmem:[#allocation6 + $0x40] sm:$0xff]
    %v2075 = vld [vmem:[#allocation6 + $0x48] sm:$0xff]
    %v2076 = vld [vmem:[#allocation6 + $0x50] sm:$0xff]
    %v2077 = vld [vmem:[#allocation6 + $0x58] sm:$0xff]
    %v2078 = vld [vmem:[#allocation6 + $0x60] sm:$0xff]
    %v2079 = vld [vmem:[#allocation6 + $0x68] sm:$0xff]
    %v2080 = vld [vmem:[#allocation6 + $0x70] sm:$0xff]
    %v2081 = vld [vmem:[#allocation6 + $0x78] sm:$0xff]
    %v2082 = vld [vmem:[%s6] sm:$0x1]
    %v2084 = vlaneseq
    %v2085 = vshrl.u32 %v2084, 7
    %v2086 = vsub.s32 0, %v2085
    %v2087 = vrot.slane %v2082, %v2086
    %2089 = vmatprep.subr.mxu0 0.0
    %2090 = vmatpush1.msra.mxu0 %v2066
    %2091 = vmatprep.subr.mxu0 0.0
    %2092 = vmatpush1.msra.mxu0 %v2067
    %2093 = vmatprep.subr.mxu0 0.0
    %2094 = vmatpush1.msra.mxu0 %v2068
    %2095 = vmatprep.subr.mxu0 0.0
    %2096 = vmatpush1.msra.mxu0 %v2069
    %2097 = vmatprep.subr.mxu0 0.0
    %2098 = vmatpush1.msra.mxu0 %v2070
    %2099 = vmatprep.subr.mxu0 0.0
    %2100 = vmatpush1.msra.mxu0 %v2071
    %2101 = vmatprep.subr.mxu0 0.0
    %2102 = vmatpush1.msra.mxu0 %v2072
    %2103 = vmatprep.subr.mxu0 0.0
    %2104 = vmatpush1.msra.mxu0 %v2073
    %2105 = vmatprep.subr.mxu0 0.0
    %2106 = vmatpush1.msra.mxu0 %v2074
    %2107 = vmatprep.subr.mxu0 0.0
    %2108 = vmatpush1.msra.mxu0 %v2075
    %2109 = vmatprep.subr.mxu0 0.0
    %2110 = vmatpush1.msra.mxu0 %v2076
    %2111 = vmatprep.subr.mxu0 0.0
    %2112 = vmatpush1.msra.mxu0 %v2077
    %2113 = vmatprep.subr.mxu0 0.0
    %2114 = vmatpush1.msra.mxu0 %v2078
    %2115 = vmatprep.subr.mxu0 0.0
    %2116 = vmatpush1.msra.mxu0 %v2079
    %2117 = vmatprep.subr.mxu0 0.0
    %2118 = vmatpush1.msra.mxu0 %v2080
    %2119 = vmatprep.subr.mxu0 0.0
    %2120 = vmatpush1.msra.mxu0 %v2081
    %2121 = vmatprep.subr.mxu0 0.0
    %2122 = vmatpush1.msra.mxu0 0.0
    %2123 = vmatprep.subr.mxu0 0.0
    %2124 = vmatpush1.msra.mxu0 0.0
    %2125 = vmatprep.subr.mxu0 0.0
    %2126 = vmatpush1.msra.mxu0 0.0
    %2127 = vmatprep.subr.mxu0 0.0
    %2128 = vmatpush1.msra.mxu0 0.0
    %2129 = vmatprep.subr.mxu0 0.0
    %2130 = vmatpush1.msra.mxu0 0.0
    %2131 = vmatprep.subr.mxu0 0.0
    %2132 = vmatpush1.msra.mxu0 0.0
    %2133 = vmatprep.subr.mxu0 0.0
    %2134 = vmatpush1.msra.mxu0 0.0
    %2135 = vmatprep.subr.mxu0 0.0
    %2136 = vmatpush1.msra.mxu0 0.0
    %2137 = vmatprep.subr.mxu0 0.0
    %2138 = vmatpush1.msra.mxu0 0.0
    %2139 = vmatprep.subr.mxu0 0.0
    %2140 = vmatpush1.msra.mxu0 0.0
    %2141 = vmatprep.subr.mxu0 0.0
    %2142 = vmatpush1.msra.mxu0 0.0
    %2143 = vmatprep.subr.mxu0 0.0
    %2144 = vmatpush1.msra.mxu0 0.0
    %2145 = vmatprep.subr.mxu0 0.0
    %2146 = vmatpush1.msra.mxu0 0.0
    %2147 = vmatprep.subr.mxu0 0.0
    %2148 = vmatpush1.msra.mxu0 0.0
    %2149 = vmatprep.subr.mxu0 0.0
    %2150 = vmatpush1.msra.mxu0 0.0
    %2151 = vmatprep.subr.mxu0 0.0
    %2152 = vmatpush1.msra.mxu0 0.0
    %2153 = vmatprep.mubr.f32.mxu0 0.0
    %2154 = vmatmul.mubr.f32.gmra.mrb[0].mxu0 %v2062
    %v2155 = vpop.f32.mrb[0].mxu0
    %v2156 = vadd.f32 %v2087, %v2155
    %v2157 = vpop.f32.mrb[0].mxu0
    %2158 = vmatprep.mubr.f32.mxu0 0.0
    %2159 = vmatmul.mubr.f32.gmra.mrb[0].mxu0 %v2063
    %v2160 = vpop.f32.mrb[0].mxu0
    %v2161 = vadd.f32 %v2087, %v2160
    %v2162 = vpop.f32.mrb[0].mxu0
    %2163 = vmatprep.mubr.f32.mxu0 0.0
    %2164 = vmatmul.mubr.f32.gmra.mrb[0].mxu0 %v2064
    %v2165 = vpop.f32.mrb[0].mxu0
    %v2166 = vadd.f32 %v2087, %v2165
    %v2167 = vpop.f32.mrb[0].mxu0
    %2168 = vmatprep.mubr.f32.mxu0 0.0
    %2169 = vmatmul.mubr.f32.gmra.mrb[0].mxu0 %v2065
    %v2170 = vpop.f32.mrb[0].mxu0
    %v2171 = vadd.f32 %v2087, %v2170
    %v2172 = vpop.f32.mrb[0].mxu0
    %2173 = vdwg.mxu0
    %v2174 = vmax.f32 %v2156, 0.0
    %v2175 = vmax.f32 %v2161, 0.0
    %v2176 = vmax.f32 %v2166, 0.0
    %v2177 = vmax.f32 %v2171, 0.0
    %s2178 = sshll.u32 %s2059, 4
    %2179 = dma.done %s100, %s2178
    %v2180 = vld [vmem:[#allocation7] sm:$0xff]
    %v2181 = vld [vmem:[#allocation7 + $0x8] sm:$0xff]
    %v2182 = vld [vmem:[#allocation7 + $0x10] sm:$0xff]
    %v2183 = vld [vmem:[#allocation7 + $0x18] sm:$0xff]
    %v2184 = vld [vmem:[#allocation7 + $0x20] sm:$0xff]
    %v2185 = vld [vmem:[#allocation7 + $0x28] sm:$0xff]
    %v2186 = vld [vmem:[#allocation7 + $0x30] sm:$0xff]
    %v2187 = vld [vmem:[#allocation7 + $0x38] sm:$0xff]
    %v2188 = vld [vmem:[#allocation7 + $0x40] sm:$0xff]
    %v2189 = vld [vmem:[#allocation7 + $0x48] sm:$0xff]
    %v2190 = vld [vmem:[#allocation7 + $0x50] sm:$0xff]
    %v2191 = vld [vmem:[#allocation7 + $0x58] sm:$0xff]
    %v2192 = vld [vmem:[#allocation7 + $0x60] sm:$0xff]
    %v2193 = vld [vmem:[#allocation7 + $0x68] sm:$0xff]
    %v2194 = vld [vmem:[#allocation7 + $0x70] sm:$0xff]
    %v2195 = vld [vmem:[#allocation7 + $0x78] sm:$0xff]
    %v2196 = vld [vmem:[%s7] sm:$0x1]
    %v2198 = vlaneseq
    %v2199 = vshrl.u32 %v2198, 7
    %v2200 = vsub.s32 0, %v2199
    %v2201 = vrot.slane %v2196, %v2200
    %2203 = vmatprep.subr.mxu0 0.0
    %2204 = vmatpush1.msra.mxu0 %v2180
    %2205 = vmatprep.subr.mxu0 0.0
    %2206 = vmatpush1.msra.mxu0 %v2181
    %2207 = vmatprep.subr.mxu0 0.0
    %2208 = vmatpush1.msra.mxu0 %v2182
    %2209 = vmatprep.subr.mxu0 0.0
    %2210 = vmatpush1.msra.mxu0 %v2183
    %2211 = vmatprep.subr.mxu0 0.0
    %2212 = vmatpush1.msra.mxu0 %v2184
    %2213 = vmatprep.subr.mxu0 0.0
    %2214 = vmatpush1.msra.mxu0 %v2185
    %2215 = vmatprep.subr.mxu0 0.0
    %2216 = vmatpush1.msra.mxu0 %v2186
    %2217 = vmatprep.subr.mxu0 0.0
    %2218 = vmatpush1.msra.mxu0 %v2187
    %2219 = vmatprep.subr.mxu0 0.0
    %2220 = vmatpush1.msra.mxu0 %v2188
    %2221 = vmatprep.subr.mxu0 0.0
    %2222 = vmatpush1.msra.mxu0 %v2189
    %2223 = vmatprep.subr.mxu0 0.0
    %2224 = vmatpush1.msra.mxu0 %v2190
    %2225 = vmatprep.subr.mxu0 0.0
    %2226 = vmatpush1.msra.mxu0 %v2191
    %2227 = vmatprep.subr.mxu0 0.0
    %2228 = vmatpush1.msra.mxu0 %v2192
    %2229 = vmatprep.subr.mxu0 0.0
    %2230 = vmatpush1.msra.mxu0 %v2193
    %2231 = vmatprep.subr.mxu0 0.0
    %2232 = vmatpush1.msra.mxu0 %v2194
    %2233 = vmatprep.subr.mxu0 0.0
    %2234 = vmatpush1.msra.mxu0 %v2195
    %2235 = vmatprep.subr.mxu0 0.0
    %2236 = vmatpush1.msra.mxu0 0.0
    %2237 = vmatprep.subr.mxu0 0.0
    %2238 = vmatpush1.msra.mxu0 0.0
    %2239 = vmatprep.subr.mxu0 0.0
    %2240 = vmatpush1.msra.mxu0 0.0
    %2241 = vmatprep.subr.mxu0 0.0
    %2242 = vmatpush1.msra.mxu0 0.0
    %2243 = vmatprep.subr.mxu0 0.0
    %2244 = vmatpush1.msra.mxu0 0.0
    %2245 = vmatprep.subr.mxu0 0.0
    %2246 = vmatpush1.msra.mxu0 0.0
    %2247 = vmatprep.subr.mxu0 0.0
    %2248 = vmatpush1.msra.mxu0 0.0
    %2249 = vmatprep.subr.mxu0 0.0
    %2250 = vmatpush1.msra.mxu0 0.0
    %2251 = vmatprep.subr.mxu0 0.0
    %2252 = vmatpush1.msra.mxu0 0.0
    %2253 = vmatprep.subr.mxu0 0.0
    %2254 = vmatpush1.msra.mxu0 0.0
    %2255 = vmatprep.subr.mxu0 0.0
    %2256 = vmatpush1.msra.mxu0 0.0
    %2257 = vmatprep.subr.mxu0 0.0
    %2258 = vmatpush1.msra.mxu0 0.0
    %2259 = vmatprep.subr.mxu0 0.0
    %2260 = vmatpush1.msra.mxu0 0.0
    %2261 = vmatprep.subr.mxu0 0.0
    %2262 = vmatpush1.msra.mxu0 0.0
    %2263 = vmatprep.subr.mxu0 0.0
    %2264 = vmatpush1.msra.mxu0 0.0
    %2265 = vmatprep.subr.mxu0 0.0
    %2266 = vmatpush1.msra.mxu0 0.0
    %2267 = vmatprep.mubr.f32.mxu0 0.0
    %2268 = vmatmul.mubr.f32.gmra.mrb[0].mxu0 %v2174
    %v2269 = vpop.f32.mrb[0].mxu0
    %v2270 = vadd.f32 %v2201, %v2269
    %v2271 = vpop.f32.mrb[0].mxu0
    %2272 = vmatprep.mubr.f32.mxu0 0.0
    %2273 = vmatmul.mubr.f32.gmra.mrb[0].mxu0 %v2175
    %v2274 = vpop.f32.mrb[0].mxu0
    %v2275 = vadd.f32 %v2201, %v2274
    %v2276 = vpop.f32.mrb[0].mxu0
    %2277 = vmatprep.mubr.f32.mxu0 0.0
    %2278 = vmatmul.mubr.f32.gmra.mrb[0].mxu0 %v2176
    %v2279 = vpop.f32.mrb[0].mxu0
    %v2280 = vadd.f32 %v2201, %v2279
    %v2281 = vpop.f32.mrb[0].mxu0
    %2282 = vmatprep.mubr.f32.mxu0 0.0
    %2283 = vmatmul.mubr.f32.gmra.mrb[0].mxu0 %v2177
    %v2284 = vpop.f32.mrb[0].mxu0
    %v2285 = vadd.f32 %v2201, %v2284
    %v2286 = vpop.f32.mrb[0].mxu0
    %2287 = vdwg.mxu0
    %v2290 = vunpack.c.l.s4 1966171168
    %v2291 = vunpack.c.0.s8 %v2290
    %v2292 = vlaneseq
    %v2293 = vshrl.u32 %v2292, 7
    %v2294 = vsub.s32 %v2291, %v2293
    %v2295 = vrot.slane %v2270, %v2294
    %v2296 = vcombine.high %v2295, %v2295
    %v2298 = vunpack.c.l.s4 1966171168
    %v2299 = vunpack.c.0.s8 %v2298
    %v2300 = vlaneseq
    %v2301 = vshrl.u32 %v2300, 7
    %v2302 = vsub.s32 %v2299, %v2301
    %v2303 = vrot.slane %v2295, %v2302
    %v2305 = vunpack.c.l.s4 1966171168
    %v2306 = vunpack.c.0.s8 %v2305
    %v2307 = vlaneseq
    %v2308 = vshrl.u32 %v2307, 7
    %v2309 = vsub.s32 %v2306, %v2308
    %v2310 = vrot.slane %v2296, %v2309
    %v2311 = vcombine.high %v2303, %v2303
    %v2312 = vcombine.high %v2310, %v2310
    %vm2317 = vcmask 212992
    %2318 = vst.msk [vmem:[#allocation17] sm:$0x1] %vm2317, %v2303
    %2319 = vst.msk [vmem:[#allocation17 + $0x8] sm:$0x1] %vm2317, %v2310
    %2320 = vst.msk [vmem:[#allocation17 + $0x10] sm:$0x1] %vm2317, %v2311
    %2321 = vst.msk [vmem:[#allocation17 + $0x18] sm:$0x1] %vm2317, %v2312
    %v2322 = vcombine.high %v2270, %v2270
    %v2324 = vunpack.c.l.s4 1966171168
    %v2325 = vunpack.c.0.s8 %v2324
    %v2326 = vlaneseq
    %v2327 = vshrl.u32 %v2326, 7
    %v2328 = vsub.s32 %v2325, %v2327
    %v2329 = vrot.slane %v2322, %v2328
    %v2330 = vcombine.high %v2329, %v2329
    %v2332 = vunpack.c.l.s4 1966171168
    %v2333 = vunpack.c.0.s8 %v2332
    %v2334 = vlaneseq
    %v2335 = vshrl.u32 %v2334, 7
    %v2336 = vsub.s32 %v2333, %v2335
    %v2337 = vrot.slane %v2329, %v2336
    %v2339 = vunpack.c.l.s4 1966171168
    %v2340 = vunpack.c.0.s8 %v2339
    %v2341 = vlaneseq
    %v2342 = vshrl.u32 %v2341, 7
    %v2343 = vsub.s32 %v2340, %v2342
    %v2344 = vrot.slane %v2330, %v2343
    %v2345 = vcombine.high %v2337, %v2337
    %v2346 = vcombine.high %v2344, %v2344
    %2351 = vst.msk [vmem:[#allocation17 + $0x1] sm:$0x1] %vm2317, %v2337
    %2352 = vst.msk [vmem:[#allocation17 + $0x9] sm:$0x1] %vm2317, %v2344
    %2353 = vst.msk [vmem:[#allocation17 + $0x11] sm:$0x1] %vm2317, %v2345
    %2354 = vst.msk [vmem:[#allocation17 + $0x19] sm:$0x1] %vm2317, %v2346
    %v2357 = vunpack.c.l.s4 1966171168
    %v2358 = vunpack.c.0.s8 %v2357
    %v2359 = vlaneseq
    %v2360 = vshrl.u32 %v2359, 7
    %v2361 = vsub.s32 %v2358, %v2360
    %v2362 = vrot.slane %v2275, %v2361
    %v2363 = vcombine.high %v2362, %v2362
    %v2365 = vunpack.c.l.s4 1966171168
    %v2366 = vunpack.c.0.s8 %v2365
    %v2367 = vlaneseq
    %v2368 = vshrl.u32 %v2367, 7
    %v2369 = vsub.s32 %v2366, %v2368
    %v2370 = vrot.slane %v2362, %v2369
    %v2372 = vunpack.c.l.s4 1966171168
    %v2373 = vunpack.c.0.s8 %v2372
    %v2374 = vlaneseq
    %v2375 = vshrl.u32 %v2374, 7
    %v2376 = vsub.s32 %v2373, %v2375
    %v2377 = vrot.slane %v2363, %v2376
    %v2378 = vcombine.high %v2370, %v2370
    %v2379 = vcombine.high %v2377, %v2377
    %2384 = vst.msk [vmem:[#allocation17 + $0x2] sm:$0x1] %vm2317, %v2370
    %2385 = vst.msk [vmem:[#allocation17 + $0xa] sm:$0x1] %vm2317, %v2377
    %2386 = vst.msk [vmem:[#allocation17 + $0x12] sm:$0x1] %vm2317, %v2378
    %2387 = vst.msk [vmem:[#allocation17 + $0x1a] sm:$0x1] %vm2317, %v2379
    %v2388 = vcombine.high %v2275, %v2275
    %v2390 = vunpack.c.l.s4 1966171168
    %v2391 = vunpack.c.0.s8 %v2390
    %v2392 = vlaneseq
    %v2393 = vshrl.u32 %v2392, 7
    %v2394 = vsub.s32 %v2391, %v2393
    %v2395 = vrot.slane %v2388, %v2394
    %v2396 = vcombine.high %v2395, %v2395
    %v2398 = vunpack.c.l.s4 1966171168
    %v2399 = vunpack.c.0.s8 %v2398
    %v2400 = vlaneseq
    %v2401 = vshrl.u32 %v2400, 7
    %v2402 = vsub.s32 %v2399, %v2401
    %v2403 = vrot.slane %v2395, %v2402
    %v2405 = vunpack.c.l.s4 1966171168
    %v2406 = vunpack.c.0.s8 %v2405
    %v2407 = vlaneseq
    %v2408 = vshrl.u32 %v2407, 7
    %v2409 = vsub.s32 %v2406, %v2408
    %v2410 = vrot.slane %v2396, %v2409
    %v2411 = vcombine.high %v2403, %v2403
    %v2412 = vcombine.high %v2410, %v2410
    %2417 = vst.msk [vmem:[#allocation17 + $0x3] sm:$0x1] %vm2317, %v2403
    %2418 = vst.msk [vmem:[#allocation17 + $0xb] sm:$0x1] %vm2317, %v2410
    %2419 = vst.msk [vmem:[#allocation17 + $0x13] sm:$0x1] %vm2317, %v2411
    %2420 = vst.msk [vmem:[#allocation17 + $0x1b] sm:$0x1] %vm2317, %v2412
    %v2423 = vunpack.c.l.s4 1966171168
    %v2424 = vunpack.c.0.s8 %v2423
    %v2425 = vlaneseq
    %v2426 = vshrl.u32 %v2425, 7
    %v2427 = vsub.s32 %v2424, %v2426
    %v2428 = vrot.slane %v2280, %v2427
    %v2429 = vcombine.high %v2428, %v2428
    %v2431 = vunpack.c.l.s4 1966171168
    %v2432 = vunpack.c.0.s8 %v2431
    %v2433 = vlaneseq
    %v2434 = vshrl.u32 %v2433, 7
    %v2435 = vsub.s32 %v2432, %v2434
    %v2436 = vrot.slane %v2428, %v2435
    %v2438 = vunpack.c.l.s4 1966171168
    %v2439 = vunpack.c.0.s8 %v2438
    %v2440 = vlaneseq
    %v2441 = vshrl.u32 %v2440, 7
    %v2442 = vsub.s32 %v2439, %v2441
    %v2443 = vrot.slane %v2429, %v2442
    %v2444 = vcombine.high %v2436, %v2436
    %v2445 = vcombine.high %v2443, %v2443
    %2450 = vst.msk [vmem:[#allocation17 + $0x4] sm:$0x1] %vm2317, %v2436
    %2451 = vst.msk [vmem:[#allocation17 + $0xc] sm:$0x1] %vm2317, %v2443
    %2452 = vst.msk [vmem:[#allocation17 + $0x14] sm:$0x1] %vm2317, %v2444
    %2453 = vst.msk [vmem:[#allocation17 + $0x1c] sm:$0x1] %vm2317, %v2445
    %v2454 = vcombine.high %v2280, %v2280
    %v2456 = vunpack.c.l.s4 1966171168
    %v2457 = vunpack.c.0.s8 %v2456
    %v2458 = vlaneseq
    %v2459 = vshrl.u32 %v2458, 7
    %v2460 = vsub.s32 %v2457, %v2459
    %v2461 = vrot.slane %v2454, %v2460
    %v2462 = vcombine.high %v2461, %v2461
    %v2464 = vunpack.c.l.s4 1966171168
    %v2465 = vunpack.c.0.s8 %v2464
    %v2466 = vlaneseq
    %v2467 = vshrl.u32 %v2466, 7
    %v2468 = vsub.s32 %v2465, %v2467
    %v2469 = vrot.slane %v2461, %v2468
    %v2471 = vunpack.c.l.s4 1966171168
    %v2472 = vunpack.c.0.s8 %v2471
    %v2473 = vlaneseq
    %v2474 = vshrl.u32 %v2473, 7
    %v2475 = vsub.s32 %v2472, %v2474
    %v2476 = vrot.slane %v2462, %v2475
    %v2477 = vcombine.high %v2469, %v2469
    %v2478 = vcombine.high %v2476, %v2476
    %2483 = vst.msk [vmem:[#allocation17 + $0x5] sm:$0x1] %vm2317, %v2469
    %2484 = vst.msk [vmem:[#allocation17 + $0xd] sm:$0x1] %vm2317, %v2476
    %2485 = vst.msk [vmem:[#allocation17 + $0x15] sm:$0x1] %vm2317, %v2477
    %2486 = vst.msk [vmem:[#allocation17 + $0x1d] sm:$0x1] %vm2317, %v2478
    %v2489 = vunpack.c.l.s4 1966171168
    %v2490 = vunpack.c.0.s8 %v2489
    %v2491 = vlaneseq
    %v2492 = vshrl.u32 %v2491, 7
    %v2493 = vsub.s32 %v2490, %v2492
    %v2494 = vrot.slane %v2285, %v2493
    %v2495 = vcombine.high %v2494, %v2494
    %v2497 = vunpack.c.l.s4 1966171168
    %v2498 = vunpack.c.0.s8 %v2497
    %v2499 = vlaneseq
    %v2500 = vshrl.u32 %v2499, 7
    %v2501 = vsub.s32 %v2498, %v2500
    %v2502 = vrot.slane %v2494, %v2501
    %v2504 = vunpack.c.l.s4 1966171168
    %v2505 = vunpack.c.0.s8 %v2504
    %v2506 = vlaneseq
    %v2507 = vshrl.u32 %v2506, 7
    %v2508 = vsub.s32 %v2505, %v2507
    %v2509 = vrot.slane %v2495, %v2508
    %v2510 = vcombine.high %v2502, %v2502
    %v2511 = vcombine.high %v2509, %v2509
    %2516 = vst.msk [vmem:[#allocation17 + $0x6] sm:$0x1] %vm2317, %v2502
    %2517 = vst.msk [vmem:[#allocation17 + $0xe] sm:$0x1] %vm2317, %v2509
    %2518 = vst.msk [vmem:[#allocation17 + $0x16] sm:$0x1] %vm2317, %v2510
    %2519 = vst.msk [vmem:[#allocation17 + $0x1e] sm:$0x1] %vm2317, %v2511
    %v2520 = vcombine.high %v2285, %v2285
    %v2522 = vunpack.c.l.s4 1966171168
    %v2523 = vunpack.c.0.s8 %v2522
    %v2524 = vlaneseq
    %v2525 = vshrl.u32 %v2524, 7
    %v2526 = vsub.s32 %v2523, %v2525
    %v2527 = vrot.slane %v2520, %v2526
    %v2528 = vcombine.high %v2527, %v2527
    %v2530 = vunpack.c.l.s4 1966171168
    %v2531 = vunpack.c.0.s8 %v2530
    %v2532 = vlaneseq
    %v2533 = vshrl.u32 %v2532, 7
    %v2534 = vsub.s32 %v2531, %v2533
    %v2535 = vrot.slane %v2527, %v2534
    %v2537 = vunpack.c.l.s4 1966171168
    %v2538 = vunpack.c.0.s8 %v2537
    %v2539 = vlaneseq
    %v2540 = vshrl.u32 %v2539, 7
    %v2541 = vsub.s32 %v2538, %v2540
    %v2542 = vrot.slane %v2528, %v2541
    %v2543 = vcombine.high %v2535, %v2535
    %v2544 = vcombine.high %v2542, %v2542
    %2549 = vst.msk [vmem:[#allocation17 + $0x7] sm:$0x1] %vm2317, %v2535
    %2550 = vst.msk [vmem:[#allocation17 + $0xf] sm:$0x1] %vm2317, %v2542
    %2551 = vst.msk [vmem:[#allocation17 + $0x17] sm:$0x1] %vm2317, %v2543
    %2552 = vst.msk [vmem:[#allocation17 + $0x1f] sm:$0x1] %vm2317, %v2544
    // Predicated region
    $region58: #{tpu_custom_call.1} parent=1 // pred_check
      _
    $region59: #{tpu_custom_call.1} parent=1 // pred_check_branch
      %2554 = sbr.rel (0) target = $region61
    $region60: #{tpu_custom_call.1} parent=1 // pred_region
      %s2556 = ssub.s32 512, 512
      %2557 = vsyncadd [#allocation11], %s2556
      %s2558 = sshll.u32 [#allocation17], 4
      %s2559 = int_to_ptr.vmem [resolvable:$true] %s2558
      %2564 = dma.vmem_to_hbm [thread:$0]  %s2559, 512, %s10, [#allocation11], 128, 128, 8
    $region61: #{tpu_custom_call.1} parent=1 // pred_fallthru
      _
    // Predicated region
    $region62: #{tpu_custom_call.1} parent=1 // pred_check
      _
    $region63: #{tpu_custom_call.1} parent=1 // pred_check_branch
      %2566 = sbr.rel (0) target = $region65
    $region64: #{tpu_custom_call.1} parent=1 // pred_region
      %s2568 = ssub.s32 64, 64
      %2569 = vsyncadd [#allocation19], %s2568
      %s2571 = sshll.u32 [#allocation18], 4
      %s2572 = int_to_ptr.vmem [resolvable:$true] %s2571
      %2574 = dma.vmem_to_hbm [thread:$0]  %s2572, 64, %s11, [#allocation19]
    $region65: #{tpu_custom_call.1} parent=1 // pred_fallthru
      _
    // Predicated region
    $region66: #{tpu_custom_call.1} parent=1 // pred_check
      _
    $region67: #{tpu_custom_call.1} parent=1 // pred_check_branch
      %2576 = sbr.rel (0) target = $region69
    $region68: #{tpu_custom_call.1} parent=1 // pred_region
      %s2578 = ssub.s32 64, 64
      %2579 = vsyncadd [#allocation19], %s2578
      %s2581 = sshll.u32 [#allocation20], 4
      %s2582 = int_to_ptr.vmem [resolvable:$true] %s2581
      %2584 = dma.vmem_to_hbm [thread:$0]  %s2582, 64, %s12, [#allocation19]
    $region69: #{tpu_custom_call.1} parent=1 // pred_fallthru
      _
    // Predicated region
    $region70: #{tpu_custom_call.1} parent=1 // pred_check
      _
    $region71: #{tpu_custom_call.1} parent=1 // pred_check_branch
      %2586 = sbr.rel (0) target = $region73
    $region72: #{tpu_custom_call.1} parent=1 // pred_region
      %2587 = dma.done [#allocation11], 512
    $region73: #{tpu_custom_call.1} parent=1 // pred_fallthru
      _
    // Predicated region
    $region74: #{tpu_custom_call.1} parent=1 // pred_check
      _
    $region75: #{tpu_custom_call.1} parent=1 // pred_check_branch
      %2589 = sbr.rel (0) target = $region77
    $region76: #{tpu_custom_call.1} parent=1 // pred_region
      %2590 = dma.done [#allocation19], 64
    $region77: #{tpu_custom_call.1} parent=1 // pred_fallthru
      _
    // Predicated region
    $region78: #{tpu_custom_call.1} parent=1 // pred_check
      _
    $region79: #{tpu_custom_call.1} parent=1 // pred_check_branch
      %2592 = sbr.rel (0) target = $region81
    $region80: #{tpu_custom_call.1} parent=1 // pred_region
      %2593 = dma.done [#allocation19], 64
    $region81: #{tpu_custom_call.1} parent=1 // pred_fallthru
      _
    %2594 = vsyncpa [#allocation10], 1
    %2595 = vsyncpa [#allocation13], 1
    %2596 = vsyncpa [#allocation16], 1
    %2597 = vsyncpa [#allocation11], 1
    %2598 = vsyncpa [#allocation19], 1
  %2599 = vsyncmov [#allocation8]
  %s2600 = vpop.sfrf %2599
  %p2601 = scmp.eq.s32.totalorder %s2600, 0
  %p2602 = pneg %p2601
  %2604 = shalt.err (%p2602)
  %s2605 = scalar_lea.sflag [#allocation8], 1
  %2606 = vsyncmov %s2605
  %s2607 = vpop.sfrf %2606
  %p2608 = scmp.eq.s32.totalorder %s2607, 0
  %p2609 = pneg %p2608
  %2611 = shalt.err (%p2609)

</llo_original>
